<compile_context>
chip_gen: v7x
topology: tpu7x:2x2x1
jax: 0.10.0
libtpu: 0.0.40
codegen_flags: <defaults>
</compile_context>

<pallas_src>
import jax
import jax.numpy as jnp
import numpy as np
from jax.experimental import pallas as pl
from jax.experimental.pallas import tpu as pltpu

_BN_EPS = 1e-5
_LEAKY_SLOPE = 0.01  # F.leaky_relu default


def _round_up(x, m):
    return ((x + m - 1) // m) * m


# ----------------------------------------------------------------------------
# Kernel
# ----------------------------------------------------------------------------
def make_resblock_kernel(*, Himg, Wimg, Wp, N, G, Cin, Cout,
                         use_conv_shortcut, leaky, mm_dtype):
    """Fused residual block; one batch element per grid step.

    Geometry (all static Python ints):
      Wp = Wimg + 2   : padded row stride
      N  = roundup((Himg+2)*Wp, 8) : flattened padded pixel count
      G  = roundup(Wp+1, 8)        : halo guard rows on each side of the
                                     (N + 2G, Cin) conv-input scratch
    """
    shifts = [dy * Wp + dx for dy in (-1, 0, 1) for dx in (-1, 0, 1)]

    def act(z):
        if leaky:
            return jnp.where(z >= 0, z, _LEAKY_SLOPE * z)
        return jnp.maximum(z, 0.0)

    def conv3x3(ext_ref, w_ref):
        """3x3 / stride-1 / pad-1 conv of the image stored at ext_ref[G:G+N].

        w_ref: (9, Cin, Co), tap t = (dy+1)*3 + (dx+1).
        Returns the (N, Co) f32 result as a value; the 9 tap matmuls are
        accumulated at value level -> no RMW stores, MXU fed back-to-back.
        """
        acc = None
        for t, s in enumerate(shifts):
            win = ext_ref[pl.ds(G + s, N), :]          # static-offset halo load
            yt = jnp.dot(win, w_ref[t], preferred_element_type=jnp.float32)
            acc = yt if acc is None else acc + yt
        return acc

    def body(x_ref, m_ref, s1_ref, b1_ref, w1_ref, bc1_ref, s2_ref, b2_ref,
             w2_ref, bc2_ref, wsc_ref, bsc_ref, out_ref, ext_ref):
        # Zero the guard rows once per step.  They are only ever read when
        # computing output pixels that lie in the spatial padding (discarded
        # by the wrapper), but keeping them zero avoids propagating stale
        # VMEM garbage / NaNs.
        ext_ref[pl.ds(0, G), :] = jnp.zeros((G, Cin), mm_dtype)
        ext_ref[pl.ds(G + N, G), :] = jnp.zeros((G, Cin), mm_dtype)

        x = x_ref[0].astype(jnp.float32)               # (N, Cin) f32
        interior = m_ref[...]                          # (N, 1) f32 {0,1}

        # BN1 (folded) + activation; re-zero the padding ring so conv_1 sees
        # true zero padding (folded-BN bias would otherwise leak into it).
        h1 = act(x * s1_ref[...] + b1_ref[...]) * interior
        ext_ref[pl.ds(G, N), :] = h1.astype(mm_dtype)  # one aligned store
        y1 = conv3x3(ext_ref, w1_ref) + bc1_ref[...]   # conv_1: Cin -> Cin

        # conv bias + BN2 (folded) + activation; re-zero padding ring.
        h2 = act(y1 * s2_ref[...] + b2_ref[...]) * interior
        ext_ref[pl.ds(G, N), :] = h2.astype(mm_dtype)
        y2 = conv3x3(ext_ref, w2_ref) + bc2_ref[...]   # conv_2: Cin -> Cout

        if use_conv_shortcut:
            # conv_shortcut(inputs): x is already zero in the padding ring.
            ext_ref[pl.ds(G, N), :] = x_ref[0].astype(mm_dtype)
            sc = conv3x3(ext_ref, wsc_ref) + bsc_ref[...]
        else:
            sc = x                                     # identity shortcut
        out_ref[0] = (sc + y2).astype(out_ref.dtype)

    if use_conv_shortcut:
        def kernel(x_ref, m_ref, s1_ref, b1_ref, w1_ref, bc1_ref, s2_ref,
                   b2_ref, w2_ref, bc2_ref, wsc_ref, bsc_ref, out_ref, ext_ref):
            body(x_ref, m_ref, s1_ref, b1_ref, w1_ref, bc1_ref, s2_ref, b2_ref,
                 w2_ref, bc2_ref, wsc_ref, bsc_ref, out_ref, ext_ref)
    else:
        def kernel(x_ref, m_ref, s1_ref, b1_ref, w1_ref, bc1_ref, s2_ref,
                   b2_ref, w2_ref, bc2_ref, out_ref, ext_ref):
            body(x_ref, m_ref, s1_ref, b1_ref, w1_ref, bc1_ref, s2_ref, b2_ref,
                 w2_ref, bc2_ref, None, None, out_ref, ext_ref)
    return kernel


# ----------------------------------------------------------------------------
# Wrapper
# ----------------------------------------------------------------------------
def _fold_bn(gamma, beta, mean, var, eps=_BN_EPS):
    s = gamma / jnp.sqrt(var + eps)
    b = beta - mean * s
    return (s.reshape(1, -1).astype(jnp.float32),
            b.reshape(1, -1).astype(jnp.float32))


def _pack_conv3x3(w, dtype):
    """(Cout, Cin, 3, 3) PyTorch weight -> (9, Cin, Cout), tap t = ky*3 + kx."""
    co, ci = w.shape[0], w.shape[1]
    return jnp.transpose(w, (2, 3, 1, 0)).reshape(9, ci, co).astype(dtype)


def residual_block_forward(x_nchw, params, *, resample=None, activate='relu',
                           use_bf16=False):
    """Forward pass of ResidualBlockClass (resample=None) via a fused Pallas kernel."""
    if resample is not None:
        # TODO(synk): 'down'/'up' resample paths are not implemented in Pallas.
        raise NotImplementedError("only resample=None is implemented")

    B, Cin, Himg, Wimg = x_nchw.shape
    Hp, Wp = Himg + 2, Wimg + 2                 # explicit zero-padding ring
    G = _round_up(Wp + 1, 8)                    # 8-aligned halo guard rows
    N = _round_up(Hp * Wp, 8)                   # flattened padded pixel count

    w1, bias1 = params['conv1']
    w2, bias2 = params['conv2']
    Cout = w2.shape[0]
    use_conv_shortcut = (Cout != Cin)
    mm_dtype = jnp.bfloat16 if use_bf16 else jnp.float32

    s1, b1 = _fold_bn(*params['bn1'])
    s2, b2 = _fold_bn(*params['bn2'])
    w1p = _pack_conv3x3(w1, mm_dtype)
    w2p = _pack_conv3x3(w2, mm_dtype)
    bc1 = bias1.reshape(1, -1).astype(jnp.float32)
    bc2 = bias2.reshape(1, -1).astype(jnp.float32)

    # NCHW -> zero-padded, flattened (B, N, C): pixels on sublanes, channels
    # on lanes.  The padding ring removes all per-tap edge masks in-kernel.
    # TODO(synk): accept NHWC / (B, N, C) at the layer boundary to drop the
    #             transpose + pad HBM round trips entirely.
    xt = jnp.transpose(x_nchw, (0, 2, 3, 1))                         # (B,H,W,C)
    xp = jnp.pad(xt, ((0, 0), (1, 1), (1, 1), (0, 0)))               # (B,Hp,Wp,C)
    x_flat = xp.reshape(B, Hp * Wp, Cin)
    if N > Hp * Wp:
        x_flat = jnp.pad(x_flat, ((0, 0), (0, N - Hp * Wp), (0, 0)))
    x_flat = x_flat.astype(mm_dtype)   # bf16 DMA when use_bf16, else f32

    # Interior-pixel mask, (N, 1) f32: re-zeroes the folded-BN bias leakage at
    # padding pixels (one multiply per conv input, replaces the old per-tap
    # (3, N, 1) cmask DMA + 6 mask multiplies per conv).
    n_idx = jnp.arange(N, dtype=jnp.int32)
    r = n_idx // Wp
    c = n_idx % Wp
    interior = ((r >= 1) & (r <= Himg) & (c >= 1) & (c <= Wimg))
    interior = interior.astype(jnp.float32).reshape(N, 1)

    operands = [x_flat, interior, s1, b1, w1p, bc1, s2, b2, w2p, bc2]
    in_specs = [
        pl.BlockSpec((1, N, Cin), lambda b: (b, 0, 0)),     # x
        pl.BlockSpec((N, 1), lambda b: (0, 0)),             # interior mask
        pl.BlockSpec((1, Cin), lambda b: (0, 0)),           # BN1 scale
        pl.BlockSpec((1, Cin), lambda b: (0, 0)),           # BN1 bias
        pl.BlockSpec((9, Cin, Cin), lambda b: (0, 0, 0)),   # conv_1 taps
        pl.BlockSpec((1, Cin), lambda b: (0, 0)),           # conv_1 bias
        pl.BlockSpec((1, Cin), lambda b: (0, 0)),           # BN2 scale
        pl.BlockSpec((1, Cin), lambda b: (0, 0)),           # BN2 bias
        pl.BlockSpec((9, Cin, Cout), lambda b: (0, 0, 0)),  # conv_2 taps
        pl.BlockSpec((1, Cout), lambda b: (0, 0)),          # conv_2 bias
    ]
    if use_conv_shortcut:
        wsc, bsc = params['conv_shortcut']
        operands += [_pack_conv3x3(wsc, mm_dtype),
                     bsc.reshape(1, -1).astype(jnp.float32)]
        in_specs += [pl.BlockSpec((9, Cin, Cout), lambda b: (0, 0, 0)),
                     pl.BlockSpec((1, Cout), lambda b: (0, 0))]

    kernel = make_resblock_kernel(Himg=Himg, Wimg=Wimg, Wp=Wp, N=N, G=G,
                                  Cin=Cin, Cout=Cout,
                                  use_conv_shortcut=use_conv_shortcut,
                                  leaky=(activate != 'relu'),
                                  mm_dtype=mm_dtype)

    # Scoped-VMEM budget derived from the actual working set (double-buffered
    # blocks + halo scratch + live f32 value temps), clamped to <= 64 MiB so
    # the identical kernel also fits v7x's physical VMEM.
    bpe = 2 if use_bf16 else 4
    est = (2 * N * Cin * bpe                          # x block (x2 buffers)
           + 2 * N * Cout * 4                         # out block (x2 buffers)
           + 2 * N * 128 * 4                          # mask block, lane-padded
           + 2 * 9 * Cin * (Cin + 2 * Cout) * bpe     # packed conv weights
           + (N + 2 * G) * Cin * bpe                  # halo scratch
           + 8 * N * max(Cin, Cout) * 4)              # live value temps headroom
    vmem_limit = int(min(64 * 1024 * 1024, max(8 * 1024 * 1024, 2 * est)))

    out_flat = pl.pallas_call(
        kernel,
        out_shape=jax.ShapeDtypeStruct((B, N, Cout), jnp.float32),
        grid_spec=pltpu.PrefetchScalarGridSpec(
            num_scalar_prefetch=0,
            grid=(B,),
            in_specs=in_specs,
            out_specs=pl.BlockSpec((1, N, Cout), lambda b: (b, 0, 0)),
            scratch_shapes=[pltpu.VMEM((N + 2 * G, Cin), mm_dtype)],
        ),
        compiler_params=pltpu.CompilerParams(
            dimension_semantics=("parallel",),
            vmem_limit_bytes=vmem_limit),
    )(*operands)

    out = out_flat[:, :Hp * Wp, :].reshape(B, Hp, Wp, Cout)
    out = out[:, 1:1 + Himg, 1:1 + Wimg, :]
    return jnp.transpose(out, (0, 3, 1, 2))


# ----------------------------------------------------------------------------
# Pure-JAX reference (mirrors the PyTorch forward, eval-mode BatchNorm)
# ----------------------------------------------------------------------------
def _bn2d_ref(x, gamma, beta, mean, var, eps=_BN_EPS):
    inv = (gamma / jnp.sqrt(var + eps))[None, :, None, None]
    return (x - mean[None, :, None, None]) * inv + beta[None, :, None, None]


def _conv3x3_ref(x, w, b):
    y = jax.lax.conv_general_dilated(
        x, w, window_strides=(1, 1), padding=((1, 1), (1, 1)),
        dimension_numbers=('NCHW', 'OIHW', 'NCHW'),
        precision=jax.lax.Precision.HIGHEST)
    return y + b[None, :, None, None]


def ref_forward(x, params, *, activate='relu'):
    if activate == 'relu':
        act = lambda z: jnp.maximum(z, 0.0)
    else:
        act = lambda z: jnp.where(z >= 0, z, _LEAKY_SLOPE * z)
    w1, bias1 = params['conv1']
    w2, bias2 = params['conv2']
    Cin, Cout = x.shape[1], w2.shape[0]
    if Cout == Cin:
        shortcut = x
    else:
        wsc, bsc = params['conv_shortcut']
        shortcut = _conv3x3_ref(x, wsc, bsc)
    h = act(_bn2d_ref(x, *params['bn1']))
    h = _conv3x3_ref(h, w1, bias1)
    h = act(_bn2d_ref(h, *params['bn2']))
    h = _conv3x3_ref(h, w2, bias2)
    return shortcut + h


# ----------------------------------------------------------------------------
# Test
# ----------------------------------------------------------------------------
def make_params(key, Cin, Cout):
    ks = jax.random.split(key, 12)
    conv_w = lambda k, co, ci: 0.15 * jax.random.normal(k, (co, ci, 3, 3), jnp.float32)
    vec = lambda k, c: 0.1 * jax.random.normal(k, (c,), jnp.float32)
    params = {
        'bn1': (1.0 + 0.1 * jax.random.normal(ks[0], (Cin,), jnp.float32),  # gamma
                vec(ks[1], Cin),                                            # beta
                vec(ks[2], Cin),                                            # running mean
                0.5 + jax.random.uniform(ks[3], (Cin,), jnp.float32)),      # running var
        'conv1': (conv_w(ks[4], Cin, Cin), vec(ks[5], Cin)),
        'bn2': (1.0 + 0.1 * jax.random.normal(ks[6], (Cin,), jnp.float32),
                vec(ks[7], Cin),
                vec(ks[8], Cin),
                0.5 + jax.random.uniform(ks[9], (Cin,), jnp.float32)),
        'conv2': (conv_w(ks[10], Cout, Cin), vec(ks[11], Cout)),
    }
    if Cout != Cin:
        k1, k2 = jax.random.split(jax.random.fold_in(key, 123))
        params['conv_shortcut'] = (conv_w(k1, Cout, Cin), vec(k2, Cout))
    return params


if __name__ == "__main__":
    B, C, Himg, Wimg = 2, 16, 8, 8
    key = jax.random.PRNGKey(0)
    x = jax.random.normal(jax.random.fold_in(key, 1), (B, C, Himg, Wimg), jnp.float32)

    # Tolerance note: the f32 path differs from the HIGHEST-precision XLA
    # reference only by tap accumulation order plus whatever pass-decomposition
    # the MXU uses for f32 operands, so 2e-2 is a conservative envelope.
    # Case A: resample=None, output_dim == input_dim -> identity shortcut, relu.
    pA = make_params(jax.random.fold_in(key, 2), C, C)
    outA = jax.block_until_ready(residual_block_forward(x, pA, activate='relu'))
    refA = ref_forward(x, pA, activate='relu')
    np.testing.assert_allclose(np.asarray(outA), np.asarray(refA), rtol=2e-2, atol=2e-2)

    # Case A with bf16 operands / bf16 activation DMA (f32 accumulation).
    outAb = jax.block_until_ready(
        residual_block_forward(x, pA, activate='relu', use_bf16=True))
    np.testing.assert_allclose(np.asarray(outAb), np.asarray(refA), rtol=1e-1, atol=1e-1)

    # Case B: resample=None, output_dim != input_dim -> conv_shortcut, leaky_relu.
    Cout = 32
    pB = make_params(jax.random.fold_in(key, 3), C, Cout)
    outB = jax.block_until_ready(residual_block_forward(x, pB, activate='leaky_relu'))
    refB = ref_forward(x, pB, activate='leaky_relu')
    np.testing.assert_allclose(np.asarray(outB), np.asarray(refB), rtol=2e-2, atol=2e-2)

    print("KERNEL_OK")
</pallas_src>

<mosaic_0001>
module attributes {stable_mosaic.version = 11 : i64} {
  func.func @kernel(%arg0: i32, %arg1: memref<1x104x16xf32, #tpu.memory_space<vmem>>, %arg2: memref<104x1xf32, #tpu.memory_space<vmem>>, %arg3: memref<1x16xf32, #tpu.memory_space<vmem>>, %arg4: memref<1x16xf32, #tpu.memory_space<vmem>>, %arg5: memref<9x16x16xf32, #tpu.memory_space<vmem>>, %arg6: memref<1x16xf32, #tpu.memory_space<vmem>>, %arg7: memref<1x16xf32, #tpu.memory_space<vmem>>, %arg8: memref<1x16xf32, #tpu.memory_space<vmem>>, %arg9: memref<9x16x16xf32, #tpu.memory_space<vmem>>, %arg10: memref<1x16xf32, #tpu.memory_space<vmem>>, %arg11: memref<1x104x16xf32, #tpu.memory_space<vmem>>, %arg12: memref<136x16xf32, #tpu.memory_space<vmem>>) attributes {dimension_semantics = [#tpu.dimension_semantics<parallel>], iteration_bounds = array<i64: 2>, scalar_prefetch = 0 : i64, scratch_operands = 1 : i64, tpu.core_type = #tpu.core_type<tc>, window_params = [{transform_indices = @transform_0, window_bounds = array<i64: 1, 104, 16>}, {pipeline_mode = #tpu.pipeline_mode<synchronous>, transform_indices = @transform_1, window_bounds = array<i64: 104, 1>}, {pipeline_mode = #tpu.pipeline_mode<synchronous>, transform_indices = @transform_2, window_bounds = array<i64: 1, 16>}, {pipeline_mode = #tpu.pipeline_mode<synchronous>, transform_indices = @transform_3, window_bounds = array<i64: 1, 16>}, {pipeline_mode = #tpu.pipeline_mode<synchronous>, transform_indices = @transform_4, window_bounds = array<i64: 9, 16, 16>}, {pipeline_mode = #tpu.pipeline_mode<synchronous>, transform_indices = @transform_5, window_bounds = array<i64: 1, 16>}, {pipeline_mode = #tpu.pipeline_mode<synchronous>, transform_indices = @transform_6, window_bounds = array<i64: 1, 16>}, {pipeline_mode = #tpu.pipeline_mode<synchronous>, transform_indices = @transform_7, window_bounds = array<i64: 1, 16>}, {pipeline_mode = #tpu.pipeline_mode<synchronous>, transform_indices = @transform_8, window_bounds = array<i64: 9, 16, 16>}, {pipeline_mode = #tpu.pipeline_mode<synchronous>, transform_indices = @transform_9, window_bounds = array<i64: 1, 16>}, {transform_indices = @transform_10, window_bounds = array<i64: 1, 104, 16>}]} {
    %cst = arith.constant 0.000000e+00 : f32
    %0 = vector.broadcast %cst : f32 to vector<16x16xf32>
    %c0 = arith.constant 0 : index
    %c0_0 = arith.constant 0 : index
    %1 = vector.load %arg12[%c0, %c0_0] : memref<136x16xf32, #tpu.memory_space<vmem>>, vector<16x16xf32>
    tpu.vector_store %arg12[%c0, %c0_0], %0 {strides = array<i32>} : memref<136x16xf32, #tpu.memory_space<vmem>>, vector<16x16xf32>,
    %cst_1 = arith.constant 0.000000e+00 : f32
    %2 = vector.broadcast %cst_1 : f32 to vector<16x16xf32>
    %c120 = arith.constant 120 : index
    %c0_2 = arith.constant 0 : index
    %3 = vector.load %arg12[%c120, %c0_2] : memref<136x16xf32, #tpu.memory_space<vmem>>, vector<16x16xf32>
    tpu.vector_store %arg12[%c120, %c0_2], %2 {strides = array<i32>} : memref<136x16xf32, #tpu.memory_space<vmem>>, vector<16x16xf32>,
    %c0_3 = arith.constant 0 : index
    %c0_4 = arith.constant 0 : index
    %c0_5 = arith.constant 0 : index
    %4 = vector.load %arg1[%c0_3, %c0_4, %c0_5] : memref<1x104x16xf32, #tpu.memory_space<vmem>>, vector<1x104x16xf32>
    %5 = vector.shape_cast %4 : vector<1x104x16xf32> to vector<104x16xf32>
    %c0_6 = arith.constant 0 : index
    %c0_7 = arith.constant 0 : index
    %6 = vector.load %arg2[%c0_6, %c0_7] : memref<104x1xf32, #tpu.memory_space<vmem>>, vector<104x1xf32>
    %c0_8 = arith.constant 0 : index
    %c0_9 = arith.constant 0 : index
    %7 = vector.load %arg3[%c0_8, %c0_9] : memref<1x16xf32, #tpu.memory_space<vmem>>, vector<1x16xf32>
    %8 = vector.broadcast %7 : vector<1x16xf32> to vector<104x16xf32>
    %9 = arith.mulf %5, %8 : vector<104x16xf32>
    %c0_10 = arith.constant 0 : index
    %c0_11 = arith.constant 0 : index
    %10 = vector.load %arg4[%c0_10, %c0_11] : memref<1x16xf32, #tpu.memory_space<vmem>>, vector<1x16xf32>
    %11 = vector.broadcast %10 : vector<1x16xf32> to vector<104x16xf32>
    %12 = arith.addf %9, %11 : vector<104x16xf32>
    %cst_12 = arith.constant 0.000000e+00 : f32
    %13 = vector.broadcast %cst_12 : f32 to vector<104x16xf32>
    %14 = arith.maximumf %12, %13 : vector<104x16xf32>
    %15 = vector.broadcast %6 : vector<104x1xf32> to vector<104x16xf32>
    %16 = arith.mulf %14, %15 : vector<104x16xf32>
    %c16 = arith.constant 16 : index
    %c0_13 = arith.constant 0 : index
    %17 = vector.load %arg12[%c16, %c0_13] : memref<136x16xf32, #tpu.memory_space<vmem>>, vector<104x16xf32>
    tpu.vector_store %arg12[%c16, %c0_13], %16 {strides = array<i32>} : memref<136x16xf32, #tpu.memory_space<vmem>>, vector<104x16xf32>,
    %c5 = arith.constant 5 : index
    %c0_14 = arith.constant 0 : index
    %18 = vector.load %arg12[%c5, %c0_14] : memref<136x16xf32, #tpu.memory_space<vmem>>, vector<104x16xf32>
    %c0_15 = arith.constant 0 : index
    %c0_16 = arith.constant 0 : index
    %c0_17 = arith.constant 0 : index
    %19 = vector.load %arg5[%c0_15, %c0_16, %c0_17] : memref<9x16x16xf32, #tpu.memory_space<vmem>>, vector<1x16x16xf32>
    %20 = vector.shape_cast %19 : vector<1x16x16xf32> to vector<16x16xf32>
    %cst_18 = arith.constant dense<0.000000e+00> : vector<104x16xf32>
    %21 = tpu.matmul %18, %20, %cst_18 {dimension_numbers = #tpu.dot_dimension_numbers<[1], [0], [0], [1], [0, 0, 1, 1], [], []>} : vector<104x16xf32>, vector<16x16xf32>, vector<104x16xf32> -> vector<104x16xf32>
    %c6 = arith.constant 6 : index
    %c0_19 = arith.constant 0 : index
    %22 = vector.load %arg12[%c6, %c0_19] : memref<136x16xf32, #tpu.memory_space<vmem>>, vector<104x16xf32>
    %c1 = arith.constant 1 : index
    %c0_20 = arith.constant 0 : index
    %c0_21 = arith.constant 0 : index
    %23 = vector.load %arg5[%c1, %c0_20, %c0_21] : memref<9x16x16xf32, #tpu.memory_space<vmem>>, vector<1x16x16xf32>
    %24 = vector.shape_cast %23 : vector<1x16x16xf32> to vector<16x16xf32>
    %cst_22 = arith.constant dense<0.000000e+00> : vector<104x16xf32>
    %25 = tpu.matmul %22, %24, %cst_22 {dimension_numbers = #tpu.dot_dimension_numbers<[1], [0], [0], [1], [0, 0, 1, 1], [], []>} : vector<104x16xf32>, vector<16x16xf32>, vector<104x16xf32> -> vector<104x16xf32>
    %26 = arith.addf %21, %25 : vector<104x16xf32>
    %c7 = arith.constant 7 : index
    %c0_23 = arith.constant 0 : index
    %27 = vector.load %arg12[%c7, %c0_23] : memref<136x16xf32, #tpu.memory_space<vmem>>, vector<104x16xf32>
    %c2 = arith.constant 2 : index
    %c0_24 = arith.constant 0 : index
    %c0_25 = arith.constant 0 : index
    %28 = vector.load %arg5[%c2, %c0_24, %c0_25] : memref<9x16x16xf32, #tpu.memory_space<vmem>>, vector<1x16x16xf32>
    %29 = vector.shape_cast %28 : vector<1x16x16xf32> to vector<16x16xf32>
    %cst_26 = arith.constant dense<0.000000e+00> : vector<104x16xf32>
    %30 = tpu.matmul %27, %29, %cst_26 {dimension_numbers = #tpu.dot_dimension_numbers<[1], [0], [0], [1], [0, 0, 1, 1], [], []>} : vector<104x16xf32>, vector<16x16xf32>, vector<104x16xf32> -> vector<104x16xf32>
    %31 = arith.addf %26, %30 : vector<104x16xf32>
    %c15 = arith.constant 15 : index
    %c0_27 = arith.constant 0 : index
    %32 = vector.load %arg12[%c15, %c0_27] : memref<136x16xf32, #tpu.memory_space<vmem>>, vector<104x16xf32>
    %c3 = arith.constant 3 : index
    %c0_28 = arith.constant 0 : index
    %c0_29 = arith.constant 0 : index
    %33 = vector.load %arg5[%c3, %c0_28, %c0_29] : memref<9x16x16xf32, #tpu.memory_space<vmem>>, vector<1x16x16xf32>
    %34 = vector.shape_cast %33 : vector<1x16x16xf32> to vector<16x16xf32>
    %cst_30 = arith.constant dense<0.000000e+00> : vector<104x16xf32>
    %35 = tpu.matmul %32, %34, %cst_30 {dimension_numbers = #tpu.dot_dimension_numbers<[1], [0], [0], [1], [0, 0, 1, 1], [], []>} : vector<104x16xf32>, vector<16x16xf32>, vector<104x16xf32> -> vector<104x16xf32>
    %36 = arith.addf %31, %35 : vector<104x16xf32>
    %c16_31 = arith.constant 16 : index
    %c0_32 = arith.constant 0 : index
    %37 = vector.load %arg12[%c16_31, %c0_32] : memref<136x16xf32, #tpu.memory_space<vmem>>, vector<104x16xf32>
    %c4 = arith.constant 4 : index
    %c0_33 = arith.constant 0 : index
    %c0_34 = arith.constant 0 : index
    %38 = vector.load %arg5[%c4, %c0_33, %c0_34] : memref<9x16x16xf32, #tpu.memory_space<vmem>>, vector<1x16x16xf32>
    %39 = vector.shape_cast %38 : vector<1x16x16xf32> to vector<16x16xf32>
    %cst_35 = arith.constant dense<0.000000e+00> : vector<104x16xf32>
    %40 = tpu.matmul %37, %39, %cst_35 {dimension_numbers = #tpu.dot_dimension_numbers<[1], [0], [0], [1], [0, 0, 1, 1], [], []>} : vector<104x16xf32>, vector<16x16xf32>, vector<104x16xf32> -> vector<104x16xf32>
    %41 = arith.addf %36, %40 : vector<104x16xf32>
    %c17 = arith.constant 17 : index
    %c0_36 = arith.constant 0 : index
    %42 = vector.load %arg12[%c17, %c0_36] : memref<136x16xf32, #tpu.memory_space<vmem>>, vector<104x16xf32>
    %c5_37 = arith.constant 5 : index
    %c0_38 = arith.constant 0 : index
    %c0_39 = arith.constant 0 : index
    %43 = vector.load %arg5[%c5_37, %c0_38, %c0_39] : memref<9x16x16xf32, #tpu.memory_space<vmem>>, vector<1x16x16xf32>
    %44 = vector.shape_cast %43 : vector<1x16x16xf32> to vector<16x16xf32>
    %cst_40 = arith.constant dense<0.000000e+00> : vector<104x16xf32>
    %45 = tpu.matmul %42, %44, %cst_40 {dimension_numbers = #tpu.dot_dimension_numbers<[1], [0], [0], [1], [0, 0, 1, 1], [], []>} : vector<104x16xf32>, vector<16x16xf32>, vector<104x16xf32> -> vector<104x16xf32>
    %46 = arith.addf %41, %45 : vector<104x16xf32>
    %c25 = arith.constant 25 : index
    %c0_41 = arith.constant 0 : index
    %47 = vector.load %arg12[%c25, %c0_41] : memref<136x16xf32, #tpu.memory_space<vmem>>, vector<104x16xf32>
    %c6_42 = arith.constant 6 : index
    %c0_43 = arith.constant 0 : index
    %c0_44 = arith.constant 0 : index
    %48 = vector.load %arg5[%c6_42, %c0_43, %c0_44] : memref<9x16x16xf32, #tpu.memory_space<vmem>>, vector<1x16x16xf32>
    %49 = vector.shape_cast %48 : vector<1x16x16xf32> to vector<16x16xf32>
    %cst_45 = arith.constant dense<0.000000e+00> : vector<104x16xf32>
    %50 = tpu.matmul %47, %49, %cst_45 {dimension_numbers = #tpu.dot_dimension_numbers<[1], [0], [0], [1], [0, 0, 1, 1], [], []>} : vector<104x16xf32>, vector<16x16xf32>, vector<104x16xf32> -> vector<104x16xf32>
    %51 = arith.addf %46, %50 : vector<104x16xf32>
    %c26 = arith.constant 26 : index
    %c0_46 = arith.constant 0 : index
    %52 = vector.load %arg12[%c26, %c0_46] : memref<136x16xf32, #tpu.memory_space<vmem>>, vector<104x16xf32>
    %c7_47 = arith.constant 7 : index
    %c0_48 = arith.constant 0 : index
    %c0_49 = arith.constant 0 : index
    %53 = vector.load %arg5[%c7_47, %c0_48, %c0_49] : memref<9x16x16xf32, #tpu.memory_space<vmem>>, vector<1x16x16xf32>
    %54 = vector.shape_cast %53 : vector<1x16x16xf32> to vector<16x16xf32>
    %cst_50 = arith.constant dense<0.000000e+00> : vector<104x16xf32>
    %55 = tpu.matmul %52, %54, %cst_50 {dimension_numbers = #tpu.dot_dimension_numbers<[1], [0], [0], [1], [0, 0, 1, 1], [], []>} : vector<104x16xf32>, vector<16x16xf32>, vector<104x16xf32> -> vector<104x16xf32>
    %56 = arith.addf %51, %55 : vector<104x16xf32>
    %c27 = arith.constant 27 : index
    %c0_51 = arith.constant 0 : index
    %57 = vector.load %arg12[%c27, %c0_51] : memref<136x16xf32, #tpu.memory_space<vmem>>, vector<104x16xf32>
    %c8 = arith.constant 8 : index
    %c0_52 = arith.constant 0 : index
    %c0_53 = arith.constant 0 : index
    %58 = vector.load %arg5[%c8, %c0_52, %c0_53] : memref<9x16x16xf32, #tpu.memory_space<vmem>>, vector<1x16x16xf32>
    %59 = vector.shape_cast %58 : vector<1x16x16xf32> to vector<16x16xf32>
    %cst_54 = arith.constant dense<0.000000e+00> : vector<104x16xf32>
    %60 = tpu.matmul %57, %59, %cst_54 {dimension_numbers = #tpu.dot_dimension_numbers<[1], [0], [0], [1], [0, 0, 1, 1], [], []>} : vector<104x16xf32>, vector<16x16xf32>, vector<104x16xf32> -> vector<104x16xf32>
    %61 = arith.addf %56, %60 : vector<104x16xf32>
    %c0_55 = arith.constant 0 : index
    %c0_56 = arith.constant 0 : index
    %62 = vector.load %arg6[%c0_55, %c0_56] : memref<1x16xf32, #tpu.memory_space<vmem>>, vector<1x16xf32>
    %63 = vector.broadcast %62 : vector<1x16xf32> to vector<104x16xf32>
    %64 = arith.addf %61, %63 : vector<104x16xf32>
    %c0_57 = arith.constant 0 : index
    %c0_58 = arith.constant 0 : index
    %65 = vector.load %arg7[%c0_57, %c0_58] : memref<1x16xf32, #tpu.memory_space<vmem>>, vector<1x16xf32>
    %66 = vector.broadcast %65 : vector<1x16xf32> to vector<104x16xf32>
    %67 = arith.mulf %64, %66 : vector<104x16xf32>
    %c0_59 = arith.constant 0 : index
    %c0_60 = arith.constant 0 : index
    %68 = vector.load %arg8[%c0_59, %c0_60] : memref<1x16xf32, #tpu.memory_space<vmem>>, vector<1x16xf32>
    %69 = vector.broadcast %68 : vector<1x16xf32> to vector<104x16xf32>
    %70 = arith.addf %67, %69 : vector<104x16xf32>
    %cst_61 = arith.constant 0.000000e+00 : f32
    %71 = vector.broadcast %cst_61 : f32 to vector<104x16xf32>
    %72 = arith.maximumf %70, %71 : vector<104x16xf32>
    %73 = vector.broadcast %6 : vector<104x1xf32> to vector<104x16xf32>
    %74 = arith.mulf %72, %73 : vector<104x16xf32>
    %c16_62 = arith.constant 16 : index
    %c0_63 = arith.constant 0 : index
    %75 = vector.load %arg12[%c16_62, %c0_63] : memref<136x16xf32, #tpu.memory_space<vmem>>, vector<104x16xf32>
    tpu.vector_store %arg12[%c16_62, %c0_63], %74 {strides = array<i32>} : memref<136x16xf32, #tpu.memory_space<vmem>>, vector<104x16xf32>,
    %c5_64 = arith.constant 5 : index
    %c0_65 = arith.constant 0 : index
    %76 = vector.load %arg12[%c5_64, %c0_65] : memref<136x16xf32, #tpu.memory_space<vmem>>, vector<104x16xf32>
    %c0_66 = arith.constant 0 : index
    %c0_67 = arith.constant 0 : index
    %c0_68 = arith.constant 0 : index
    %77 = vector.load %arg9[%c0_66, %c0_67, %c0_68] : memref<9x16x16xf32, #tpu.memory_space<vmem>>, vector<1x16x16xf32>
    %78 = vector.shape_cast %77 : vector<1x16x16xf32> to vector<16x16xf32>
    %cst_69 = arith.constant dense<0.000000e+00> : vector<104x16xf32>
    %79 = tpu.matmul %76, %78, %cst_69 {dimension_numbers = #tpu.dot_dimension_numbers<[1], [0], [0], [1], [0, 0, 1, 1], [], []>} : vector<104x16xf32>, vector<16x16xf32>, vector<104x16xf32> -> vector<104x16xf32>
    %c6_70 = arith.constant 6 : index
    %c0_71 = arith.constant 0 : index
    %80 = vector.load %arg12[%c6_70, %c0_71] : memref<136x16xf32, #tpu.memory_space<vmem>>, vector<104x16xf32>
    %c1_72 = arith.constant 1 : index
    %c0_73 = arith.constant 0 : index
    %c0_74 = arith.constant 0 : index
    %81 = vector.load %arg9[%c1_72, %c0_73, %c0_74] : memref<9x16x16xf32, #tpu.memory_space<vmem>>, vector<1x16x16xf32>
    %82 = vector.shape_cast %81 : vector<1x16x16xf32> to vector<16x16xf32>
    %cst_75 = arith.constant dense<0.000000e+00> : vector<104x16xf32>
    %83 = tpu.matmul %80, %82, %cst_75 {dimension_numbers = #tpu.dot_dimension_numbers<[1], [0], [0], [1], [0, 0, 1, 1], [], []>} : vector<104x16xf32>, vector<16x16xf32>, vector<104x16xf32> -> vector<104x16xf32>
    %84 = arith.addf %79, %83 : vector<104x16xf32>
    %c7_76 = arith.constant 7 : index
    %c0_77 = arith.constant 0 : index
    %85 = vector.load %arg12[%c7_76, %c0_77] : memref<136x16xf32, #tpu.memory_space<vmem>>, vector<104x16xf32>
    %c2_78 = arith.constant 2 : index
    %c0_79 = arith.constant 0 : index
    %c0_80 = arith.constant 0 : index
    %86 = vector.load %arg9[%c2_78, %c0_79, %c0_80] : memref<9x16x16xf32, #tpu.memory_space<vmem>>, vector<1x16x16xf32>
    %87 = vector.shape_cast %86 : vector<1x16x16xf32> to vector<16x16xf32>
    %cst_81 = arith.constant dense<0.000000e+00> : vector<104x16xf32>
    %88 = tpu.matmul %85, %87, %cst_81 {dimension_numbers = #tpu.dot_dimension_numbers<[1], [0], [0], [1], [0, 0, 1, 1], [], []>} : vector<104x16xf32>, vector<16x16xf32>, vector<104x16xf32> -> vector<104x16xf32>
    %89 = arith.addf %84, %88 : vector<104x16xf32>
    %c15_82 = arith.constant 15 : index
    %c0_83 = arith.constant 0 : index
    %90 = vector.load %arg12[%c15_82, %c0_83] : memref<136x16xf32, #tpu.memory_space<vmem>>, vector<104x16xf32>
    %c3_84 = arith.constant 3 : index
    %c0_85 = arith.constant 0 : index
    %c0_86 = arith.constant 0 : index
    %91 = vector.load %arg9[%c3_84, %c0_85, %c0_86] : memref<9x16x16xf32, #tpu.memory_space<vmem>>, vector<1x16x16xf32>
    %92 = vector.shape_cast %91 : vector<1x16x16xf32> to vector<16x16xf32>
    %cst_87 = arith.constant dense<0.000000e+00> : vector<104x16xf32>
    %93 = tpu.matmul %90, %92, %cst_87 {dimension_numbers = #tpu.dot_dimension_numbers<[1], [0], [0], [1], [0, 0, 1, 1], [], []>} : vector<104x16xf32>, vector<16x16xf32>, vector<104x16xf32> -> vector<104x16xf32>
    %94 = arith.addf %89, %93 : vector<104x16xf32>
    %c16_88 = arith.constant 16 : index
    %c0_89 = arith.constant 0 : index
    %95 = vector.load %arg12[%c16_88, %c0_89] : memref<136x16xf32, #tpu.memory_space<vmem>>, vector<104x16xf32>
    %c4_90 = arith.constant 4 : index
    %c0_91 = arith.constant 0 : index
    %c0_92 = arith.constant 0 : index
    %96 = vector.load %arg9[%c4_90, %c0_91, %c0_92] : memref<9x16x16xf32, #tpu.memory_space<vmem>>, vector<1x16x16xf32>
    %97 = vector.shape_cast %96 : vector<1x16x16xf32> to vector<16x16xf32>
    %cst_93 = arith.constant dense<0.000000e+00> : vector<104x16xf32>
    %98 = tpu.matmul %95, %97, %cst_93 {dimension_numbers = #tpu.dot_dimension_numbers<[1], [0], [0], [1], [0, 0, 1, 1], [], []>} : vector<104x16xf32>, vector<16x16xf32>, vector<104x16xf32> -> vector<104x16xf32>
    %99 = arith.addf %94, %98 : vector<104x16xf32>
    %c17_94 = arith.constant 17 : index
    %c0_95 = arith.constant 0 : index
    %100 = vector.load %arg12[%c17_94, %c0_95] : memref<136x16xf32, #tpu.memory_space<vmem>>, vector<104x16xf32>
    %c5_96 = arith.constant 5 : index
    %c0_97 = arith.constant 0 : index
    %c0_98 = arith.constant 0 : index
    %101 = vector.load %arg9[%c5_96, %c0_97, %c0_98] : memref<9x16x16xf32, #tpu.memory_space<vmem>>, vector<1x16x16xf32>
    %102 = vector.shape_cast %101 : vector<1x16x16xf32> to vector<16x16xf32>
    %cst_99 = arith.constant dense<0.000000e+00> : vector<104x16xf32>
    %103 = tpu.matmul %100, %102, %cst_99 {dimension_numbers = #tpu.dot_dimension_numbers<[1], [0], [0], [1], [0, 0, 1, 1], [], []>} : vector<104x16xf32>, vector<16x16xf32>, vector<104x16xf32> -> vector<104x16xf32>
    %104 = arith.addf %99, %103 : vector<104x16xf32>
    %c25_100 = arith.constant 25 : index
    %c0_101 = arith.constant 0 : index
    %105 = vector.load %arg12[%c25_100, %c0_101] : memref<136x16xf32, #tpu.memory_space<vmem>>, vector<104x16xf32>
    %c6_102 = arith.constant 6 : index
    %c0_103 = arith.constant 0 : index
    %c0_104 = arith.constant 0 : index
    %106 = vector.load %arg9[%c6_102, %c0_103, %c0_104] : memref<9x16x16xf32, #tpu.memory_space<vmem>>, vector<1x16x16xf32>
    %107 = vector.shape_cast %106 : vector<1x16x16xf32> to vector<16x16xf32>
    %cst_105 = arith.constant dense<0.000000e+00> : vector<104x16xf32>
    %108 = tpu.matmul %105, %107, %cst_105 {dimension_numbers = #tpu.dot_dimension_numbers<[1], [0], [0], [1], [0, 0, 1, 1], [], []>} : vector<104x16xf32>, vector<16x16xf32>, vector<104x16xf32> -> vector<104x16xf32>
    %109 = arith.addf %104, %108 : vector<104x16xf32>
    %c26_106 = arith.constant 26 : index
    %c0_107 = arith.constant 0 : index
    %110 = vector.load %arg12[%c26_106, %c0_107] : memref<136x16xf32, #tpu.memory_space<vmem>>, vector<104x16xf32>
    %c7_108 = arith.constant 7 : index
    %c0_109 = arith.constant 0 : index
    %c0_110 = arith.constant 0 : index
    %111 = vector.load %arg9[%c7_108, %c0_109, %c0_110] : memref<9x16x16xf32, #tpu.memory_space<vmem>>, vector<1x16x16xf32>
    %112 = vector.shape_cast %111 : vector<1x16x16xf32> to vector<16x16xf32>
    %cst_111 = arith.constant dense<0.000000e+00> : vector<104x16xf32>
    %113 = tpu.matmul %110, %112, %cst_111 {dimension_numbers = #tpu.dot_dimension_numbers<[1], [0], [0], [1], [0, 0, 1, 1], [], []>} : vector<104x16xf32>, vector<16x16xf32>, vector<104x16xf32> -> vector<104x16xf32>
    %114 = arith.addf %109, %113 : vector<104x16xf32>
    %c27_112 = arith.constant 27 : index
    %c0_113 = arith.constant 0 : index
    %115 = vector.load %arg12[%c27_112, %c0_113] : memref<136x16xf32, #tpu.memory_space<vmem>>, vector<104x16xf32>
    %c8_114 = arith.constant 8 : index
    %c0_115 = arith.constant 0 : index
    %c0_116 = arith.constant 0 : index
    %116 = vector.load %arg9[%c8_114, %c0_115, %c0_116] : memref<9x16x16xf32, #tpu.memory_space<vmem>>, vector<1x16x16xf32>
    %117 = vector.shape_cast %116 : vector<1x16x16xf32> to vector<16x16xf32>
    %cst_117 = arith.constant dense<0.000000e+00> : vector<104x16xf32>
    %118 = tpu.matmul %115, %117, %cst_117 {dimension_numbers = #tpu.dot_dimension_numbers<[1], [0], [0], [1], [0, 0, 1, 1], [], []>} : vector<104x16xf32>, vector<16x16xf32>, vector<104x16xf32> -> vector<104x16xf32>
    %119 = arith.addf %114, %118 : vector<104x16xf32>
    %c0_118 = arith.constant 0 : index
    %c0_119 = arith.constant 0 : index
    %120 = vector.load %arg10[%c0_118, %c0_119] : memref<1x16xf32, #tpu.memory_space<vmem>>, vector<1x16xf32>
    %121 = vector.broadcast %120 : vector<1x16xf32> to vector<104x16xf32>
    %122 = arith.addf %119, %121 : vector<104x16xf32>
    %123 = arith.addf %5, %122 : vector<104x16xf32>
    %c0_120 = arith.constant 0 : index
    %c0_121 = arith.constant 0 : index
    %c0_122 = arith.constant 0 : index
    %124 = vector.load %arg11[%c0_120, %c0_121, %c0_122] : memref<1x104x16xf32, #tpu.memory_space<vmem>>, vector<1x104x16xf32>
    %125 = vector.shape_cast %124 : vector<1x104x16xf32> to vector<104x16xf32>
    %126 = vector.shape_cast %123 : vector<104x16xf32> to vector<1x104x16xf32>
    tpu.vector_store %arg11[%c0_120, %c0_121, %c0_122], %126 {strides = array<i32>} : memref<1x104x16xf32, #tpu.memory_space<vmem>>, vector<1x104x16xf32>,
    return
  }
  func.func @transform_0(%arg0: i32) -> (i32, i32, i32) {
    %c0_i32 = arith.constant 0 : i32
    %c0_i32_0 = arith.constant 0 : i32
    %c0_i32_1 = arith.constant 0 : i32
    return %arg0, %c0_i32, %c0_i32_0 : i32, i32, i32
  }
  func.func @transform_1(%arg0: i32) -> (i32, i32) {
    %c0_i32 = arith.constant 0 : i32
    %c0_i32_0 = arith.constant 0 : i32
    %c0_i32_1 = arith.constant 0 : i32
    return %c0_i32, %c0_i32_0 : i32, i32
  }
  func.func @transform_2(%arg0: i32) -> (i32, i32) {
    %c0_i32 = arith.constant 0 : i32
    %c0_i32_0 = arith.constant 0 : i32
    %c0_i32_1 = arith.constant 0 : i32
    return %c0_i32, %c0_i32_0 : i32, i32
  }
  func.func @transform_3(%arg0: i32) -> (i32, i32) {
    %c0_i32 = arith.constant 0 : i32
    %c0_i32_0 = arith.constant 0 : i32
    %c0_i32_1 = arith.constant 0 : i32
    return %c0_i32, %c0_i32_0 : i32, i32
  }
  func.func @transform_4(%arg0: i32) -> (i32, i32, i32) {
    %c0_i32 = arith.constant 0 : i32
    %c0_i32_0 = arith.constant 0 : i32
    %c0_i32_1 = arith.constant 0 : i32
    %c0_i32_2 = arith.constant 0 : i32
    return %c0_i32, %c0_i32_0, %c0_i32_1 : i32, i32, i32
  }
  func.func @transform_5(%arg0: i32) -> (i32, i32) {
    %c0_i32 = arith.constant 0 : i32
    %c0_i32_0 = arith.constant 0 : i32
    %c0_i32_1 = arith.constant 0 : i32
    return %c0_i32, %c0_i32_0 : i32, i32
  }
  func.func @transform_6(%arg0: i32) -> (i32, i32) {
    %c0_i32 = arith.constant 0 : i32
    %c0_i32_0 = arith.constant 0 : i32
    %c0_i32_1 = arith.constant 0 : i32
    return %c0_i32, %c0_i32_0 : i32, i32
  }
  func.func @transform_7(%arg0: i32) -> (i32, i32) {
    %c0_i32 = arith.constant 0 : i32
    %c0_i32_0 = arith.constant 0 : i32
    %c0_i32_1 = arith.constant 0 : i32
    return %c0_i32, %c0_i32_0 : i32, i32
  }
  func.func @transform_8(%arg0: i32) -> (i32, i32, i32) {
    %c0_i32 = arith.constant 0 : i32
    %c0_i32_0 = arith.constant 0 : i32
    %c0_i32_1 = arith.constant 0 : i32
    %c0_i32_2 = arith.constant 0 : i32
    return %c0_i32, %c0_i32_0, %c0_i32_1 : i32, i32, i32
  }
  func.func @transform_9(%arg0: i32) -> (i32, i32) {
    %c0_i32 = arith.constant 0 : i32
    %c0_i32_0 = arith.constant 0 : i32
    %c0_i32_1 = arith.constant 0 : i32
    return %c0_i32, %c0_i32_0 : i32, i32
  }
  func.func @transform_10(%arg0: i32) -> (i32, i32, i32) {
    %c0_i32 = arith.constant 0 : i32
    %c0_i32_0 = arith.constant 0 : i32
    %c0_i32_1 = arith.constant 0 : i32
    return %arg0, %c0_i32, %c0_i32_0 : i32, i32, i32
  }
}

</mosaic_0001>

<llo_original>
// kernel: tpu_custom_call.1
$region0: #{tpu_custom_call.1}
  #allocation0 [shape = 'u32[]', space=smem, size = 0x4, offset = 0x4, fixed_abs, tag = 'smem constant byte address 0x4 - core index']
  #allocation1 [shape = 'u32[144,128]{1,0:T(1,128)}', space=vmem, size = 0x12000, scoped, tag = 'internal scratch']
  #allocation2 [shape = 'f32[136,16]{1,0:T(8,128)}', space=vmem, size = 0x11000, scoped, tag = 'scratch operand']
  %s0 = inlined_call_operand.vmem [shape: f32[2,104,16], index: 0, kind: input, shape index: {}]
  %s1 = inlined_call_operand.vmem [shape: f32[104,1], index: 1, kind: input, shape index: {}]
  %s2 = inlined_call_operand.vmem [shape: f32[1,16], index: 2, kind: input, shape index: {}]
  %s3 = inlined_call_operand.vmem [shape: f32[1,16], index: 3, kind: input, shape index: {}]
  %s4 = inlined_call_operand.vmem [shape: f32[9,16,16], index: 4, kind: input, shape index: {}]
  %s5 = inlined_call_operand.vmem [shape: f32[1,16], index: 5, kind: input, shape index: {}]
  %s6 = inlined_call_operand.vmem [shape: f32[1,16], index: 6, kind: input, shape index: {}]
  %s7 = inlined_call_operand.vmem [shape: f32[1,16], index: 7, kind: input, shape index: {}]
  %s8 = inlined_call_operand.vmem [shape: f32[9,16,16], index: 8, kind: input, shape index: {}]
  %s9 = inlined_call_operand.vmem [shape: f32[1,16], index: 9, kind: input, shape index: {}]
  %s10 = inlined_call_operand.vmem [shape: f32[2,104,16], index: 10, kind: output, shape index: {}]
  %s11 = sld [smem:[#allocation0]]
  $region73: #{tpu_custom_call.1} parent=0
    _
  %s13 = ssub.s32 1, %s11
  %s14 = scalar_select 0, %s13, %s11
  loop: start=0, step=1, limit=4
  $region2: #{tpu_custom_call.1} parent=0 // loop_pre_header
    _
  $region3: #{tpu_custom_call.1} parent=0 // loop_header
    %s16 = sphi 0, %s20
    %p17 = scmp.ge.s32.totalorder %s16, 4
    %s26 = sphi 0, %s28
    %s29 = sphi 0, %s26
    %s30 = sphi 0, %s29
    %s46 = sphi 0, %s30
    %s50 = sphi 0, %s50
    %s52 = sphi 0, %s50
    %s53 = sphi 0, %s52
    %s67 = sphi 0, %s53
    %s71 = sphi 0, %s71
    %s73 = sphi 0, %s71
    %s74 = sphi 0, %s73
    %s88 = sphi 0, %s74
    %s92 = sphi 0, %s92
    %s94 = sphi 0, %s92
    %s95 = sphi 0, %s94
    %s109 = sphi 0, %s95
    %s113 = sphi 0, %s113
    %s115 = sphi 0, %s113
    %s116 = sphi 0, %s115
    %s130 = sphi 0, %s116
    %s134 = sphi 0, %s134
    %s136 = sphi 0, %s134
    %s137 = sphi 0, %s136
    %s151 = sphi 0, %s137
    %s155 = sphi 0, %s155
    %s157 = sphi 0, %s155
    %s158 = sphi 0, %s157
    %s172 = sphi 0, %s158
    %s176 = sphi 0, %s176
    %s178 = sphi 0, %s176
    %s179 = sphi 0, %s178
    %s193 = sphi 0, %s179
    %s197 = sphi 0, %s197
    %s199 = sphi 0, %s197
    %s200 = sphi 0, %s199
    %s214 = sphi 0, %s200
    %s218 = sphi 0, %s218
    %s220 = sphi 0, %s218
    %s221 = sphi 0, %s220
    %s235 = sphi 0, %s221
    %s241 = sphi 0, %s243
    %s244 = sphi 0, %s241
    %s245 = sphi 0, %s244
    %s261 = sphi 0, %s245
  $region4: #{tpu_custom_call.1} parent=0 // loop_header_branch
    %19 = sbr.rel (%p17) target = $region8
  $region5: #{tpu_custom_call.1} parent=0 // loop_body
    %s21 = ssub.s32 %s16, 1
    %s22 = ssub.s32 %s16, 2
    %s23 = sadd.s32 %s16, 1
    %s24 = ssub.s32 %s16, %s23
    %p25 = scmp.eq.s32.totalorder %s24, 0
    %s27 = sadd.s32 %s26, 1
    %s28 = scalar_select %p25, %s26, %s27
    %p31 = pneg %p25
    %p32 = scmp.eq.s32.totalorder %s16, 1
    %p33 = por %p31, %p32
    %p34 = scmp.ne.s32.totalorder %s26, %s29
    %p35 = scmp.eq.s32.totalorder %s16, 0
    %p36 = por %p34, %p35
    %p37 = scmp.ne.s32.totalorder %s26, %s29
    %p38 = scmp.eq.s32.totalorder %s21, 1
    %p39 = por %p37, %p38
    %p40 = scmp.ne.s32.totalorder %s29, %s30
    %p41 = scmp.eq.s32.totalorder %s21, 0
    %p42 = por %p40, %p41
    %p43 = scmp.ne.s32.totalorder %s29, %s30
    %p44 = scmp.eq.s32.totalorder %s22, 1
    %p45 = por %p43, %p44
    %p47 = scmp.ne.s32.totalorder %s30, %s46
    %p48 = scmp.eq.s32.totalorder %s22, 0
    %p49 = por %p47, %p48
    %s51 = sadd.s32 %s50, 1
    %p54 = scmp.eq.s32.totalorder %s16, 1
    %p55 = scmp.ne.s32.totalorder %s50, %s52
    %p56 = scmp.eq.s32.totalorder %s16, 0
    %p57 = por %p55, %p56
    %p58 = scmp.ne.s32.totalorder %s50, %s52
    %p59 = scmp.eq.s32.totalorder %s21, 1
    %p60 = por %p58, %p59
    %p61 = scmp.ne.s32.totalorder %s52, %s53
    %p62 = scmp.eq.s32.totalorder %s21, 0
    %p63 = por %p61, %p62
    %p64 = scmp.ne.s32.totalorder %s52, %s53
    %p65 = scmp.eq.s32.totalorder %s22, 1
    %p66 = por %p64, %p65
    %p68 = scmp.ne.s32.totalorder %s53, %s67
    %p69 = scmp.eq.s32.totalorder %s22, 0
    %p70 = por %p68, %p69
    %s72 = sadd.s32 %s71, 1
    %p75 = scmp.eq.s32.totalorder %s16, 1
    %p76 = scmp.ne.s32.totalorder %s71, %s73
    %p77 = scmp.eq.s32.totalorder %s16, 0
    %p78 = por %p76, %p77
    %p79 = scmp.ne.s32.totalorder %s71, %s73
    %p80 = scmp.eq.s32.totalorder %s21, 1
    %p81 = por %p79, %p80
    %p82 = scmp.ne.s32.totalorder %s73, %s74
    %p83 = scmp.eq.s32.totalorder %s21, 0
    %p84 = por %p82, %p83
    %p85 = scmp.ne.s32.totalorder %s73, %s74
    %p86 = scmp.eq.s32.totalorder %s22, 1
    %p87 = por %p85, %p86
    %p89 = scmp.ne.s32.totalorder %s74, %s88
    %p90 = scmp.eq.s32.totalorder %s22, 0
    %p91 = por %p89, %p90
    %s93 = sadd.s32 %s92, 1
    %p96 = scmp.eq.s32.totalorder %s16, 1
    %p97 = scmp.ne.s32.totalorder %s92, %s94
    %p98 = scmp.eq.s32.totalorder %s16, 0
    %p99 = por %p97, %p98
    %p100 = scmp.ne.s32.totalorder %s92, %s94
    %p101 = scmp.eq.s32.totalorder %s21, 1
    %p102 = por %p100, %p101
    %p103 = scmp.ne.s32.totalorder %s94, %s95
    %p104 = scmp.eq.s32.totalorder %s21, 0
    %p105 = por %p103, %p104
    %p106 = scmp.ne.s32.totalorder %s94, %s95
    %p107 = scmp.eq.s32.totalorder %s22, 1
    %p108 = por %p106, %p107
    %p110 = scmp.ne.s32.totalorder %s95, %s109
    %p111 = scmp.eq.s32.totalorder %s22, 0
    %p112 = por %p110, %p111
    %s114 = sadd.s32 %s113, 1
    %p117 = scmp.eq.s32.totalorder %s16, 1
    %p118 = scmp.ne.s32.totalorder %s113, %s115
    %p119 = scmp.eq.s32.totalorder %s16, 0
    %p120 = por %p118, %p119
    %p121 = scmp.ne.s32.totalorder %s113, %s115
    %p122 = scmp.eq.s32.totalorder %s21, 1
    %p123 = por %p121, %p122
    %p124 = scmp.ne.s32.totalorder %s115, %s116
    %p125 = scmp.eq.s32.totalorder %s21, 0
    %p126 = por %p124, %p125
    %p127 = scmp.ne.s32.totalorder %s115, %s116
    %p128 = scmp.eq.s32.totalorder %s22, 1
    %p129 = por %p127, %p128
    %p131 = scmp.ne.s32.totalorder %s116, %s130
    %p132 = scmp.eq.s32.totalorder %s22, 0
    %p133 = por %p131, %p132
    %s135 = sadd.s32 %s134, 1
    %p138 = scmp.eq.s32.totalorder %s16, 1
    %p139 = scmp.ne.s32.totalorder %s134, %s136
    %p140 = scmp.eq.s32.totalorder %s16, 0
    %p141 = por %p139, %p140
    %p142 = scmp.ne.s32.totalorder %s134, %s136
    %p143 = scmp.eq.s32.totalorder %s21, 1
    %p144 = por %p142, %p143
    %p145 = scmp.ne.s32.totalorder %s136, %s137
    %p146 = scmp.eq.s32.totalorder %s21, 0
    %p147 = por %p145, %p146
    %p148 = scmp.ne.s32.totalorder %s136, %s137
    %p149 = scmp.eq.s32.totalorder %s22, 1
    %p150 = por %p148, %p149
    %p152 = scmp.ne.s32.totalorder %s137, %s151
    %p153 = scmp.eq.s32.totalorder %s22, 0
    %p154 = por %p152, %p153
    %s156 = sadd.s32 %s155, 1
    %p159 = scmp.eq.s32.totalorder %s16, 1
    %p160 = scmp.ne.s32.totalorder %s155, %s157
    %p161 = scmp.eq.s32.totalorder %s16, 0
    %p162 = por %p160, %p161
    %p163 = scmp.ne.s32.totalorder %s155, %s157
    %p164 = scmp.eq.s32.totalorder %s21, 1
    %p165 = por %p163, %p164
    %p166 = scmp.ne.s32.totalorder %s157, %s158
    %p167 = scmp.eq.s32.totalorder %s21, 0
    %p168 = por %p166, %p167
    %p169 = scmp.ne.s32.totalorder %s157, %s158
    %p170 = scmp.eq.s32.totalorder %s22, 1
    %p171 = por %p169, %p170
    %p173 = scmp.ne.s32.totalorder %s158, %s172
    %p174 = scmp.eq.s32.totalorder %s22, 0
    %p175 = por %p173, %p174
    %s177 = sadd.s32 %s176, 1
    %p180 = scmp.eq.s32.totalorder %s16, 1
    %p181 = scmp.ne.s32.totalorder %s176, %s178
    %p182 = scmp.eq.s32.totalorder %s16, 0
    %p183 = por %p181, %p182
    %p184 = scmp.ne.s32.totalorder %s176, %s178
    %p185 = scmp.eq.s32.totalorder %s21, 1
    %p186 = por %p184, %p185
    %p187 = scmp.ne.s32.totalorder %s178, %s179
    %p188 = scmp.eq.s32.totalorder %s21, 0
    %p189 = por %p187, %p188
    %p190 = scmp.ne.s32.totalorder %s178, %s179
    %p191 = scmp.eq.s32.totalorder %s22, 1
    %p192 = por %p190, %p191
    %p194 = scmp.ne.s32.totalorder %s179, %s193
    %p195 = scmp.eq.s32.totalorder %s22, 0
    %p196 = por %p194, %p195
    %s198 = sadd.s32 %s197, 1
    %p201 = scmp.eq.s32.totalorder %s16, 1
    %p202 = scmp.ne.s32.totalorder %s197, %s199
    %p203 = scmp.eq.s32.totalorder %s16, 0
    %p204 = por %p202, %p203
    %p205 = scmp.ne.s32.totalorder %s197, %s199
    %p206 = scmp.eq.s32.totalorder %s21, 1
    %p207 = por %p205, %p206
    %p208 = scmp.ne.s32.totalorder %s199, %s200
    %p209 = scmp.eq.s32.totalorder %s21, 0
    %p210 = por %p208, %p209
    %p211 = scmp.ne.s32.totalorder %s199, %s200
    %p212 = scmp.eq.s32.totalorder %s22, 1
    %p213 = por %p211, %p212
    %p215 = scmp.ne.s32.totalorder %s200, %s214
    %p216 = scmp.eq.s32.totalorder %s22, 0
    %p217 = por %p215, %p216
    %s219 = sadd.s32 %s218, 1
    %p222 = scmp.eq.s32.totalorder %s16, 1
    %p223 = scmp.ne.s32.totalorder %s218, %s220
    %p224 = scmp.eq.s32.totalorder %s16, 0
    %p225 = por %p223, %p224
    %p226 = scmp.ne.s32.totalorder %s218, %s220
    %p227 = scmp.eq.s32.totalorder %s21, 1
    %p228 = por %p226, %p227
    %p229 = scmp.ne.s32.totalorder %s220, %s221
    %p230 = scmp.eq.s32.totalorder %s21, 0
    %p231 = por %p229, %p230
    %p232 = scmp.ne.s32.totalorder %s220, %s221
    %p233 = scmp.eq.s32.totalorder %s22, 1
    %p234 = por %p232, %p233
    %p236 = scmp.ne.s32.totalorder %s221, %s235
    %p237 = scmp.eq.s32.totalorder %s22, 0
    %p238 = por %p236, %p237
    %s239 = ssub.s32 %s16, %s23
    %p240 = scmp.eq.s32.totalorder %s239, 0
    %s242 = sadd.s32 %s241, 1
    %s243 = scalar_select %p240, %s241, %s242
    %p246 = pneg %p240
    %p247 = scmp.eq.s32.totalorder %s16, 1
    %p248 = por %p246, %p247
    %p249 = scmp.ne.s32.totalorder %s241, %s244
    %p250 = scmp.eq.s32.totalorder %s16, 0
    %p251 = por %p249, %p250
    %p252 = scmp.ne.s32.totalorder %s241, %s244
    %p253 = scmp.eq.s32.totalorder %s21, 1
    %p254 = por %p252, %p253
    %p255 = scmp.ne.s32.totalorder %s244, %s245
    %p256 = scmp.eq.s32.totalorder %s21, 0
    %p257 = por %p255, %p256
    %p258 = scmp.ne.s32.totalorder %s244, %s245
    %p259 = scmp.eq.s32.totalorder %s22, 1
    %p260 = por %p258, %p259
    %p262 = scmp.ne.s32.totalorder %s245, %s261
    %p263 = scmp.eq.s32.totalorder %s22, 0
    %p264 = por %p262, %p263
    %p265 = scmp.le.s32.totalorder 1, %s16
    %p266 = scmp.lt.s32.totalorder %s16, 3
    %p267 = pnand %p265, %p266
    %p268 = pneg %p267
    // Predicated region
    $region9: #{tpu_custom_call.1} parent=5 // pred_check
      _
    $region10: #{tpu_custom_call.1} parent=5 // pred_check_branch
      %270 = sbr.rel (%p267) target = $region12
    $region11: #{tpu_custom_call.1} parent=5 // pred_region
      %s271 = ssub.s32 %s16, 1
      // Predicated region
      $region13: #{tpu_custom_call.1} parent=11 // pred_check
        %p272 = pneg %p63
      $region14: #{tpu_custom_call.1} parent=11 // pred_check_branch
        %274 = sbr.rel (%p272) target = $region16
      $region15: #{tpu_custom_call.1} parent=11 // pred_region
        _
      $region16: #{tpu_custom_call.1} parent=11 // pred_fallthru
        _
      // Predicated region
      $region17: #{tpu_custom_call.1} parent=11 // pred_check
        %p275 = pneg %p84
      $region18: #{tpu_custom_call.1} parent=11 // pred_check_branch
        %277 = sbr.rel (%p275) target = $region20
      $region19: #{tpu_custom_call.1} parent=11 // pred_region
        _
      $region20: #{tpu_custom_call.1} parent=11 // pred_fallthru
        _
      // Predicated region
      $region21: #{tpu_custom_call.1} parent=11 // pred_check
        %p278 = pneg %p105
      $region22: #{tpu_custom_call.1} parent=11 // pred_check_branch
        %280 = sbr.rel (%p278) target = $region24
      $region23: #{tpu_custom_call.1} parent=11 // pred_region
        _
      $region24: #{tpu_custom_call.1} parent=11 // pred_fallthru
        _
      // Predicated region
      $region25: #{tpu_custom_call.1} parent=11 // pred_check
        %p281 = pneg %p126
      $region26: #{tpu_custom_call.1} parent=11 // pred_check_branch
        %283 = sbr.rel (%p281) target = $region28
      $region27: #{tpu_custom_call.1} parent=11 // pred_region
        _
      $region28: #{tpu_custom_call.1} parent=11 // pred_fallthru
        _
      // Predicated region
      $region29: #{tpu_custom_call.1} parent=11 // pred_check
        %p284 = pneg %p147
      $region30: #{tpu_custom_call.1} parent=11 // pred_check_branch
        %286 = sbr.rel (%p284) target = $region32
      $region31: #{tpu_custom_call.1} parent=11 // pred_region
        _
      $region32: #{tpu_custom_call.1} parent=11 // pred_fallthru
        _
      // Predicated region
      $region33: #{tpu_custom_call.1} parent=11 // pred_check
        %p287 = pneg %p168
      $region34: #{tpu_custom_call.1} parent=11 // pred_check_branch
        %289 = sbr.rel (%p287) target = $region36
      $region35: #{tpu_custom_call.1} parent=11 // pred_region
        _
      $region36: #{tpu_custom_call.1} parent=11 // pred_fallthru
        _
      // Predicated region
      $region37: #{tpu_custom_call.1} parent=11 // pred_check
        %p290 = pneg %p189
      $region38: #{tpu_custom_call.1} parent=11 // pred_check_branch
        %292 = sbr.rel (%p290) target = $region40
      $region39: #{tpu_custom_call.1} parent=11 // pred_region
        _
      $region40: #{tpu_custom_call.1} parent=11 // pred_fallthru
        _
      // Predicated region
      $region41: #{tpu_custom_call.1} parent=11 // pred_check
        %p293 = pneg %p210
      $region42: #{tpu_custom_call.1} parent=11 // pred_check_branch
        %295 = sbr.rel (%p293) target = $region44
      $region43: #{tpu_custom_call.1} parent=11 // pred_region
        _
      $region44: #{tpu_custom_call.1} parent=11 // pred_fallthru
        _
      // Predicated region
      $region45: #{tpu_custom_call.1} parent=11 // pred_check
        %p296 = pneg %p231
      $region46: #{tpu_custom_call.1} parent=11 // pred_check_branch
        %298 = sbr.rel (%p296) target = $region48
      $region47: #{tpu_custom_call.1} parent=11 // pred_region
        _
      $region48: #{tpu_custom_call.1} parent=11 // pred_fallthru
        _
    $region12: #{tpu_custom_call.1} parent=5 // pred_fallthru
      _
    %p299 = scmp.lt.s32.totalorder %s16, 2
    // Predicated region
    $region49: #{tpu_custom_call.1} parent=5 // pred_check
      %p300 = pneg %p299
    $region50: #{tpu_custom_call.1} parent=5 // pred_check_branch
      %302 = sbr.rel (%p300) target = $region52
    $region51: #{tpu_custom_call.1} parent=5 // pred_region
      // Predicated region
      $region53: #{tpu_custom_call.1} parent=51 // pred_check
        %p303 = pneg %p36
      $region54: #{tpu_custom_call.1} parent=51 // pred_check_branch
        %305 = sbr.rel (%p303) target = $region56
      $region55: #{tpu_custom_call.1} parent=51 // pred_region
        %p306 = scmp.lt.s32.totalorder %s16, 1
        %s307 = scalar_select %p306, %s16, 1
        %s308 = smul.addr %s307, 13
        %s309 = smul.addr %s308, 8
        %s310 = scalar_lea.vmem %s0, %s309
      $region56: #{tpu_custom_call.1} parent=51 // pred_fallthru
        _
    $region52: #{tpu_custom_call.1} parent=5 // pred_fallthru
      _
    %p311 = scmp.le.s32.totalorder 1, %s16
    %p312 = scmp.lt.s32.totalorder %s16, 3
    %p313 = pnand %p311, %p312
    %p314 = pneg %p313
    // Predicated region
    $region57: #{tpu_custom_call.1} parent=5 // pred_check
      _
    $region58: #{tpu_custom_call.1} parent=5 // pred_check_branch
      %316 = sbr.rel (%p313) target = $region60
    $region59: #{tpu_custom_call.1} parent=5 // pred_region
      %s317 = ssub.s32 %s16, 1
      %p318 = scmp.lt.s32.totalorder %s21, 1
      %s319 = scalar_select %p318, %s21, 1
      %s320 = smul.addr %s319, 13
      %s321 = smul.addr %s320, 8
      %s322 = scalar_lea.vmem %s0, %s321
      %p323 = pneg %p42
      %p324 = pneg %p39
      %p325 = pneg %p63
      %p326 = pneg %p60
      %p327 = pneg %p84
      %p328 = pneg %p81
      %p329 = pneg %p105
      %p330 = pneg %p102
      %p331 = pneg %p126
      %p332 = pneg %p123
      %p333 = pneg %p147
      %p334 = pneg %p144
      %p335 = pneg %p168
      %p336 = pneg %p165
      %p337 = pneg %p189
      %p338 = pneg %p186
      %p339 = pneg %p210
      %p340 = pneg %p207
      %p341 = pneg %p231
      %p342 = pneg %p228
      %p343 = pneg %p257
      %p344 = pneg %p254
      %p345 = scmp.lt.s32.totalorder %s21, 1
      %s346 = scalar_select %p345, %s21, 1
      %s347 = smul.addr %s346, 13
      %s348 = smul.addr %s347, 8
      %s349 = scalar_lea.vmem %s10, %s348
      %p350 = scmp.lt.s32.totalorder %s21, 1
      %s351 = scalar_select %p350, %s21, 1
      %s352 = smul.addr %s351, 13
      %s353 = smul.addr %s352, 8
      %s354 = scalar_lea.vmem %s0, %s353
      %p355 = scmp.lt.s32.totalorder %s21, 1
      %s356 = scalar_select %p355, %s21, 1
      %s357 = smul.addr %s356, 13
      %s358 = smul.addr %s357, 8
      %s359 = scalar_lea.vmem %s10, %s358
      %vm360 = vcmask 130048
      %361 = vst.msk [vmem:[#allocation2] sm:$0xff] %vm360, 0.0
      %362 = vst.msk [vmem:[#allocation2 + $0x8] sm:$0xff] %vm360, 0.0
      %363 = vst.msk [vmem:[#allocation2 + $0x78] sm:$0xff] %vm360, 0.0
      %364 = vst.msk [vmem:[#allocation2 + $0x80] sm:$0xff] %vm360, 0.0
      %v365 = vld [vmem:[%s354] sm:$0xff]
      %v366 = vld [vmem:[%s354 + $0x8] sm:$0xff]
      %v367 = vld [vmem:[%s354 + $0x10] sm:$0xff]
      %v368 = vld [vmem:[%s354 + $0x18] sm:$0xff]
      %v369 = vld [vmem:[%s354 + $0x20] sm:$0xff]
      %v370 = vld [vmem:[%s354 + $0x28] sm:$0xff]
      %v371 = vld [vmem:[%s354 + $0x30] sm:$0xff]
      %v372 = vld [vmem:[%s354 + $0x38] sm:$0xff]
      %v373 = vld [vmem:[%s354 + $0x40] sm:$0xff]
      %v374 = vld [vmem:[%s354 + $0x48] sm:$0xff]
      %v375 = vld [vmem:[%s354 + $0x50] sm:$0xff]
      %v376 = vld [vmem:[%s354 + $0x58] sm:$0xff]
      %v377 = vld [vmem:[%s354 + $0x60] sm:$0xff]
      %v378 = vld [vmem:[%s1] sm:$0xff]
      %v379 = vld [vmem:[%s1 + $0x8] sm:$0xff]
      %v380 = vld [vmem:[%s1 + $0x10] sm:$0xff]
      %v381 = vld [vmem:[%s1 + $0x18] sm:$0xff]
      %v382 = vld [vmem:[%s1 + $0x20] sm:$0xff]
      %v383 = vld [vmem:[%s1 + $0x28] sm:$0xff]
      %v384 = vld [vmem:[%s1 + $0x30] sm:$0xff]
      %v385 = vld [vmem:[%s1 + $0x38] sm:$0xff]
      %v386 = vld [vmem:[%s1 + $0x40] sm:$0xff]
      %v387 = vld [vmem:[%s1 + $0x48] sm:$0xff]
      %v388 = vld [vmem:[%s1 + $0x50] sm:$0xff]
      %v389 = vld [vmem:[%s1 + $0x58] sm:$0xff]
      %v390 = vld [vmem:[%s1 + $0x60] sm:$0xff]
      %v391 = vld [vmem:[%s2] sm:$0x1]
      %v393 = vlaneseq
      %v394 = vshrl.u32 %v393, 7
      %v395 = vsub.s32 0, %v394
      %v396 = vrot.slane %v391, %v395
      %v398 = vmul.f32 %v365, %v396
      %v399 = vmul.f32 %v366, %v396
      %v400 = vmul.f32 %v367, %v396
      %v401 = vmul.f32 %v368, %v396
      %v402 = vmul.f32 %v369, %v396
      %v403 = vmul.f32 %v370, %v396
      %v404 = vmul.f32 %v371, %v396
      %v405 = vmul.f32 %v372, %v396
      %v406 = vmul.f32 %v373, %v396
      %v407 = vmul.f32 %v374, %v396
      %v408 = vmul.f32 %v375, %v396
      %v409 = vmul.f32 %v376, %v396
      %v410 = vmul.f32 %v377, %v396
      %v411 = vld [vmem:[%s3] sm:$0x1]
      %v413 = vlaneseq
      %v414 = vshrl.u32 %v413, 7
      %v415 = vsub.s32 0, %v414
      %v416 = vrot.slane %v411, %v415
      %v418 = vadd.f32 %v398, %v416
      %v419 = vadd.f32 %v399, %v416
      %v420 = vadd.f32 %v400, %v416
      %v421 = vadd.f32 %v401, %v416
      %v422 = vadd.f32 %v402, %v416
      %v423 = vadd.f32 %v403, %v416
      %v424 = vadd.f32 %v404, %v416
      %v425 = vadd.f32 %v405, %v416
      %v426 = vadd.f32 %v406, %v416
      %v427 = vadd.f32 %v407, %v416
      %v428 = vadd.f32 %v408, %v416
      %v429 = vadd.f32 %v409, %v416
      %v430 = vadd.f32 %v410, %v416
      %v431 = vmax.f32 %v418, 0.0
      %v432 = vmax.f32 %v419, 0.0
      %v433 = vmax.f32 %v420, 0.0
      %v434 = vmax.f32 %v421, 0.0
      %v435 = vmax.f32 %v422, 0.0
      %v436 = vmax.f32 %v423, 0.0
      %v437 = vmax.f32 %v424, 0.0
      %v438 = vmax.f32 %v425, 0.0
      %v439 = vmax.f32 %v426, 0.0
      %v440 = vmax.f32 %v427, 0.0
      %v441 = vmax.f32 %v428, 0.0
      %v442 = vmax.f32 %v429, 0.0
      %v443 = vmax.f32 %v430, 0.0
      %445 = vset.pattern.permute.xlu0 0
      %446 = vperm.xlu0 %445, %v378
      %v447 = vpop.permute.xlu0 %446
      %450 = vset.pattern.permute.xlu0 0
      %451 = vperm.xlu0 %450, %v379
      %v452 = vpop.permute.xlu0 %451
      %455 = vset.pattern.permute.xlu0 0
      %456 = vperm.xlu0 %455, %v380
      %v457 = vpop.permute.xlu0 %456
      %460 = vset.pattern.permute.xlu0 0
      %461 = vperm.xlu0 %460, %v381
      %v462 = vpop.permute.xlu0 %461
      %465 = vset.pattern.permute.xlu0 0
      %466 = vperm.xlu0 %465, %v382
      %v467 = vpop.permute.xlu0 %466
      %470 = vset.pattern.permute.xlu0 0
      %471 = vperm.xlu0 %470, %v383
      %v472 = vpop.permute.xlu0 %471
      %475 = vset.pattern.permute.xlu0 0
      %476 = vperm.xlu0 %475, %v384
      %v477 = vpop.permute.xlu0 %476
      %480 = vset.pattern.permute.xlu0 0
      %481 = vperm.xlu0 %480, %v385
      %v482 = vpop.permute.xlu0 %481
      %485 = vset.pattern.permute.xlu0 0
      %486 = vperm.xlu0 %485, %v386
      %v487 = vpop.permute.xlu0 %486
      %490 = vset.pattern.permute.xlu0 0
      %491 = vperm.xlu0 %490, %v387
      %v492 = vpop.permute.xlu0 %491
      %495 = vset.pattern.permute.xlu0 0
      %496 = vperm.xlu0 %495, %v388
      %v497 = vpop.permute.xlu0 %496
      %500 = vset.pattern.permute.xlu0 0
      %501 = vperm.xlu0 %500, %v389
      %v502 = vpop.permute.xlu0 %501
      %505 = vset.pattern.permute.xlu0 0
      %506 = vperm.xlu0 %505, %v390
      %v507 = vpop.permute.xlu0 %506
      %v509 = vmul.f32 %v431, %v447
      %v510 = vmul.f32 %v432, %v452
      %v511 = vmul.f32 %v433, %v457
      %v512 = vmul.f32 %v434, %v462
      %v513 = vmul.f32 %v435, %v467
      %v514 = vmul.f32 %v436, %v472
      %v515 = vmul.f32 %v437, %v477
      %v516 = vmul.f32 %v438, %v482
      %v517 = vmul.f32 %v439, %v487
      %v518 = vmul.f32 %v440, %v492
      %v519 = vmul.f32 %v441, %v497
      %v520 = vmul.f32 %v442, %v502
      %v521 = vmul.f32 %v443, %v507
      %522 = vst.msk [vmem:[#allocation2 + $0x10] sm:$0xff] %vm360, %v509
      %523 = vst.msk [vmem:[#allocation2 + $0x18] sm:$0xff] %vm360, %v510
      %524 = vst.msk [vmem:[#allocation2 + $0x20] sm:$0xff] %vm360, %v511
      %525 = vst.msk [vmem:[#allocation2 + $0x28] sm:$0xff] %vm360, %v512
      %526 = vst.msk [vmem:[#allocation2 + $0x30] sm:$0xff] %vm360, %v513
      %527 = vst.msk [vmem:[#allocation2 + $0x38] sm:$0xff] %vm360, %v514
      %528 = vst.msk [vmem:[#allocation2 + $0x40] sm:$0xff] %vm360, %v515
      %529 = vst.msk [vmem:[#allocation2 + $0x48] sm:$0xff] %vm360, %v516
      %530 = vst.msk [vmem:[#allocation2 + $0x50] sm:$0xff] %vm360, %v517
      %531 = vst.msk [vmem:[#allocation2 + $0x58] sm:$0xff] %vm360, %v518
      %532 = vst.msk [vmem:[#allocation2 + $0x60] sm:$0xff] %vm360, %v519
      %533 = vst.msk [vmem:[#allocation2 + $0x68] sm:$0xff] %vm360, %v520
      %534 = vst.msk [vmem:[#allocation2 + $0x70] sm:$0xff] %vm360, %v521
      %v535 = vld [vmem:[#allocation2 + $0x5] sm:$0xff]
      %v536 = vld [vmem:[#allocation2 + $0xd] sm:$0xff]
      %v537 = vld [vmem:[#allocation2 + $0x15] sm:$0xff]
      %v538 = vld [vmem:[#allocation2 + $0x1d] sm:$0xff]
      %v539 = vld [vmem:[#allocation2 + $0x25] sm:$0xff]
      %v540 = vld [vmem:[#allocation2 + $0x2d] sm:$0xff]
      %v541 = vld [vmem:[#allocation2 + $0x35] sm:$0xff]
      %v542 = vld [vmem:[#allocation2 + $0x3d] sm:$0xff]
      %v543 = vld [vmem:[#allocation2 + $0x45] sm:$0xff]
      %v544 = vld [vmem:[#allocation2 + $0x4d] sm:$0xff]
      %v545 = vld [vmem:[#allocation2 + $0x55] sm:$0xff]
      %v546 = vld [vmem:[#allocation2 + $0x5d] sm:$0xff]
      %v547 = vld [vmem:[#allocation2 + $0x65] sm:$0xff]
      %v548 = vld [vmem:[%s4] sm:$0xff]
      %v549 = vld [vmem:[%s4 + $0x8] sm:$0xff]
      %v550 = vld [vmem:[#allocation2 + $0x6] sm:$0xff]
      %v551 = vld [vmem:[#allocation2 + $0xe] sm:$0xff]
      %v552 = vld [vmem:[#allocation2 + $0x16] sm:$0xff]
      %v553 = vld [vmem:[#allocation2 + $0x1e] sm:$0xff]
      %v554 = vld [vmem:[#allocation2 + $0x26] sm:$0xff]
      %v555 = vld [vmem:[#allocation2 + $0x2e] sm:$0xff]
      %v556 = vld [vmem:[#allocation2 + $0x36] sm:$0xff]
      %v557 = vld [vmem:[#allocation2 + $0x3e] sm:$0xff]
      %v558 = vld [vmem:[#allocation2 + $0x46] sm:$0xff]
      %v559 = vld [vmem:[#allocation2 + $0x4e] sm:$0xff]
      %v560 = vld [vmem:[#allocation2 + $0x56] sm:$0xff]
      %v561 = vld [vmem:[#allocation2 + $0x5e] sm:$0xff]
      %v562 = vld [vmem:[#allocation2 + $0x66] sm:$0xff]
      %s563 = scalar_lea.vmem %s4, 16
      %v564 = vld [vmem:[%s563] sm:$0xff]
      %v565 = vld [vmem:[%s563 + $0x8] sm:$0xff]
      %v567 = vsel %vm360, %v550, 0
      %v570 = vsel %vm360, %v551, 0
      %v573 = vsel %vm360, %v552, 0
      %v576 = vsel %vm360, %v553, 0
      %v579 = vsel %vm360, %v554, 0
      %v582 = vsel %vm360, %v555, 0
      %v585 = vsel %vm360, %v556, 0
      %v588 = vsel %vm360, %v557, 0
      %v591 = vsel %vm360, %v558, 0
      %v594 = vsel %vm360, %v559, 0
      %v597 = vsel %vm360, %v560, 0
      %v600 = vsel %vm360, %v561, 0
      %v603 = vsel %vm360, %v562, 0
      %605 = vmatprep.subr.mxu0 0.0
      %606 = vmatpush1.msra.mxu0 %v564
      %607 = vmatprep.subr.mxu0 0.0
      %608 = vmatpush1.msra.mxu0 %v565
      %609 = vmatprep.subr.mxu0 0.0
      %610 = vmatpush1.msra.mxu0 0.0
      %611 = vmatprep.subr.mxu0 0.0
      %612 = vmatpush1.msra.mxu0 0.0
      %613 = vmatprep.subr.mxu0 0.0
      %614 = vmatpush1.msra.mxu0 0.0
      %615 = vmatprep.subr.mxu0 0.0
      %616 = vmatpush1.msra.mxu0 0.0
      %617 = vmatprep.subr.mxu0 0.0
      %618 = vmatpush1.msra.mxu0 0.0
      %619 = vmatprep.subr.mxu0 0.0
      %620 = vmatpush1.msra.mxu0 0.0
      %621 = vmatprep.subr.mxu0 0.0
      %622 = vmatpush1.msra.mxu0 0.0
      %623 = vmatprep.subr.mxu0 0.0
      %624 = vmatpush1.msra.mxu0 0.0
      %625 = vmatprep.subr.mxu0 0.0
      %626 = vmatpush1.msra.mxu0 0.0
      %627 = vmatprep.subr.mxu0 0.0
      %628 = vmatpush1.msra.mxu0 0.0
      %629 = vmatprep.subr.mxu0 0.0
      %630 = vmatpush1.msra.mxu0 0.0
      %631 = vmatprep.subr.mxu0 0.0
      %632 = vmatpush1.msra.mxu0 0.0
      %633 = vmatprep.subr.mxu0 0.0
      %634 = vmatpush1.msra.mxu0 0.0
      %635 = vmatprep.subr.mxu0 0.0
      %636 = vmatpush1.msra.mxu0 0.0
      %637 = vmatprep.subr.mxu0 0.0
      %638 = vmatpush1.msra.mxu0 0.0
      %639 = vmatprep.subr.mxu0 0.0
      %640 = vmatpush1.msra.mxu0 0.0
      %641 = vmatprep.subr.mxu0 0.0
      %642 = vmatpush1.msra.mxu0 0.0
      %643 = vmatprep.subr.mxu0 0.0
      %644 = vmatpush1.msra.mxu0 0.0
      %645 = vmatprep.subr.mxu0 0.0
      %646 = vmatpush1.msra.mxu0 0.0
      %647 = vmatprep.subr.mxu0 0.0
      %648 = vmatpush1.msra.mxu0 0.0
      %649 = vmatprep.subr.mxu0 0.0
      %650 = vmatpush1.msra.mxu0 0.0
      %651 = vmatprep.subr.mxu0 0.0
      %652 = vmatpush1.msra.mxu0 0.0
      %653 = vmatprep.subr.mxu0 0.0
      %654 = vmatpush1.msra.mxu0 0.0
      %655 = vmatprep.subr.mxu0 0.0
      %656 = vmatpush1.msra.mxu0 0.0
      %657 = vmatprep.subr.mxu0 0.0
      %658 = vmatpush1.msra.mxu0 0.0
      %659 = vmatprep.subr.mxu0 0.0
      %660 = vmatpush1.msra.mxu0 0.0
      %661 = vmatprep.subr.mxu0 0.0
      %662 = vmatpush1.msra.mxu0 0.0
      %663 = vmatprep.subr.mxu0 0.0
      %664 = vmatpush1.msra.mxu0 0.0
      %665 = vmatprep.subr.mxu0 0.0
      %666 = vmatpush1.msra.mxu0 0.0
      %667 = vmatprep.subr.mxu0 0.0
      %668 = vmatpush1.msra.mxu0 0.0
      %669 = vmatprep.mubr.f32.mxu0 0.0
      %670 = vmatmul.mubr.f32.gmra.mrb[0].mxu0 %v567
      %v671 = vpop.f32.mrb[0].mxu0
      %v672 = vadd.f32 0.0, %v671
      %v673 = vpop.f32.mrb[0].mxu0
      %674 = vmatprep.mubr.f32.mxu0 0.0
      %675 = vmatmul.mubr.f32.gmra.mrb[0].mxu0 %v570
      %v676 = vpop.f32.mrb[0].mxu0
      %v677 = vadd.f32 0.0, %v676
      %v678 = vpop.f32.mrb[0].mxu0
      %679 = vmatprep.mubr.f32.mxu0 0.0
      %680 = vmatmul.mubr.f32.gmra.mrb[0].mxu0 %v573
      %v681 = vpop.f32.mrb[0].mxu0
      %v682 = vadd.f32 0.0, %v681
      %v683 = vpop.f32.mrb[0].mxu0
      %684 = vmatprep.mubr.f32.mxu0 0.0
      %685 = vmatmul.mubr.f32.gmra.mrb[0].mxu0 %v576
      %v686 = vpop.f32.mrb[0].mxu0
      %v687 = vadd.f32 0.0, %v686
      %v688 = vpop.f32.mrb[0].mxu0
      %689 = vmatprep.mubr.f32.mxu0 0.0
      %690 = vmatmul.mubr.f32.gmra.mrb[0].mxu0 %v579
      %v691 = vpop.f32.mrb[0].mxu0
      %v692 = vadd.f32 0.0, %v691
      %v693 = vpop.f32.mrb[0].mxu0
      %694 = vmatprep.mubr.f32.mxu0 0.0
      %695 = vmatmul.mubr.f32.gmra.mrb[0].mxu0 %v582
      %v696 = vpop.f32.mrb[0].mxu0
      %v697 = vadd.f32 0.0, %v696
      %v698 = vpop.f32.mrb[0].mxu0
      %699 = vmatprep.mubr.f32.mxu0 0.0
      %700 = vmatmul.mubr.f32.gmra.mrb[0].mxu0 %v585
      %v701 = vpop.f32.mrb[0].mxu0
      %v702 = vadd.f32 0.0, %v701
      %v703 = vpop.f32.mrb[0].mxu0
      %704 = vmatprep.mubr.f32.mxu0 0.0
      %705 = vmatmul.mubr.f32.gmra.mrb[0].mxu0 %v588
      %v706 = vpop.f32.mrb[0].mxu0
      %v707 = vadd.f32 0.0, %v706
      %v708 = vpop.f32.mrb[0].mxu0
      %709 = vmatprep.mubr.f32.mxu0 0.0
      %710 = vmatmul.mubr.f32.gmra.mrb[0].mxu0 %v591
      %v711 = vpop.f32.mrb[0].mxu0
      %v712 = vadd.f32 0.0, %v711
      %v713 = vpop.f32.mrb[0].mxu0
      %714 = vmatprep.mubr.f32.mxu0 0.0
      %715 = vmatmul.mubr.f32.gmra.mrb[0].mxu0 %v594
      %v716 = vpop.f32.mrb[0].mxu0
      %v717 = vadd.f32 0.0, %v716
      %v718 = vpop.f32.mrb[0].mxu0
      %719 = vmatprep.mubr.f32.mxu0 0.0
      %720 = vmatmul.mubr.f32.gmra.mrb[0].mxu0 %v597
      %v721 = vpop.f32.mrb[0].mxu0
      %v722 = vadd.f32 0.0, %v721
      %v723 = vpop.f32.mrb[0].mxu0
      %724 = vmatprep.mubr.f32.mxu0 0.0
      %725 = vmatmul.mubr.f32.gmra.mrb[0].mxu0 %v600
      %v726 = vpop.f32.mrb[0].mxu0
      %v727 = vadd.f32 0.0, %v726
      %v728 = vpop.f32.mrb[0].mxu0
      %729 = vmatprep.mubr.f32.mxu0 0.0
      %730 = vmatmul.mubr.f32.gmra.mrb[0].mxu0 %v603
      %v731 = vpop.f32.mrb[0].mxu0
      %v732 = vadd.f32 0.0, %v731
      %v733 = vpop.f32.mrb[0].mxu0
      %734 = vdwg.mxu0
      %v736 = vsel %vm360, %v535, 0
      %v739 = vsel %vm360, %v536, 0
      %v742 = vsel %vm360, %v537, 0
      %v745 = vsel %vm360, %v538, 0
      %v748 = vsel %vm360, %v539, 0
      %v751 = vsel %vm360, %v540, 0
      %v754 = vsel %vm360, %v541, 0
      %v757 = vsel %vm360, %v542, 0
      %v760 = vsel %vm360, %v543, 0
      %v763 = vsel %vm360, %v544, 0
      %v766 = vsel %vm360, %v545, 0
      %v769 = vsel %vm360, %v546, 0
      %v772 = vsel %vm360, %v547, 0
      %774 = vmatprep.subr.mxu0 0.0
      %775 = vmatpush1.msra.mxu0 %v548
      %776 = vmatprep.subr.mxu0 0.0
      %777 = vmatpush1.msra.mxu0 %v549
      %778 = vmatprep.subr.mxu0 0.0
      %779 = vmatpush1.msra.mxu0 0.0
      %780 = vmatprep.subr.mxu0 0.0
      %781 = vmatpush1.msra.mxu0 0.0
      %782 = vmatprep.subr.mxu0 0.0
      %783 = vmatpush1.msra.mxu0 0.0
      %784 = vmatprep.subr.mxu0 0.0
      %785 = vmatpush1.msra.mxu0 0.0
      %786 = vmatprep.subr.mxu0 0.0
      %787 = vmatpush1.msra.mxu0 0.0
      %788 = vmatprep.subr.mxu0 0.0
      %789 = vmatpush1.msra.mxu0 0.0
      %790 = vmatprep.subr.mxu0 0.0
      %791 = vmatpush1.msra.mxu0 0.0
      %792 = vmatprep.subr.mxu0 0.0
      %793 = vmatpush1.msra.mxu0 0.0
      %794 = vmatprep.subr.mxu0 0.0
      %795 = vmatpush1.msra.mxu0 0.0
      %796 = vmatprep.subr.mxu0 0.0
      %797 = vmatpush1.msra.mxu0 0.0
      %798 = vmatprep.subr.mxu0 0.0
      %799 = vmatpush1.msra.mxu0 0.0
      %800 = vmatprep.subr.mxu0 0.0
      %801 = vmatpush1.msra.mxu0 0.0
      %802 = vmatprep.subr.mxu0 0.0
      %803 = vmatpush1.msra.mxu0 0.0
      %804 = vmatprep.subr.mxu0 0.0
      %805 = vmatpush1.msra.mxu0 0.0
      %806 = vmatprep.subr.mxu0 0.0
      %807 = vmatpush1.msra.mxu0 0.0
      %808 = vmatprep.subr.mxu0 0.0
      %809 = vmatpush1.msra.mxu0 0.0
      %810 = vmatprep.subr.mxu0 0.0
      %811 = vmatpush1.msra.mxu0 0.0
      %812 = vmatprep.subr.mxu0 0.0
      %813 = vmatpush1.msra.mxu0 0.0
      %814 = vmatprep.subr.mxu0 0.0
      %815 = vmatpush1.msra.mxu0 0.0
      %816 = vmatprep.subr.mxu0 0.0
      %817 = vmatpush1.msra.mxu0 0.0
      %818 = vmatprep.subr.mxu0 0.0
      %819 = vmatpush1.msra.mxu0 0.0
      %820 = vmatprep.subr.mxu0 0.0
      %821 = vmatpush1.msra.mxu0 0.0
      %822 = vmatprep.subr.mxu0 0.0
      %823 = vmatpush1.msra.mxu0 0.0
      %824 = vmatprep.subr.mxu0 0.0
      %825 = vmatpush1.msra.mxu0 0.0
      %826 = vmatprep.subr.mxu0 0.0
      %827 = vmatpush1.msra.mxu0 0.0
      %828 = vmatprep.subr.mxu0 0.0
      %829 = vmatpush1.msra.mxu0 0.0
      %830 = vmatprep.subr.mxu0 0.0
      %831 = vmatpush1.msra.mxu0 0.0
      %832 = vmatprep.subr.mxu0 0.0
      %833 = vmatpush1.msra.mxu0 0.0
      %834 = vmatprep.subr.mxu0 0.0
      %835 = vmatpush1.msra.mxu0 0.0
      %836 = vmatprep.subr.mxu0 0.0
      %837 = vmatpush1.msra.mxu0 0.0
      %838 = vmatprep.mubr.f32.mxu0 0.0
      %839 = vmatmul.mubr.f32.gmra.mrb[0].mxu0 %v736
      %v840 = vpop.f32.mrb[0].mxu0
      %v841 = vadd.f32 %v672, %v840
      %v842 = vpop.f32.mrb[0].mxu0
      %843 = vmatprep.mubr.f32.mxu0 0.0
      %844 = vmatmul.mubr.f32.gmra.mrb[0].mxu0 %v739
      %v845 = vpop.f32.mrb[0].mxu0
      %v846 = vadd.f32 %v677, %v845
      %v847 = vpop.f32.mrb[0].mxu0
      %848 = vmatprep.mubr.f32.mxu0 0.0
      %849 = vmatmul.mubr.f32.gmra.mrb[0].mxu0 %v742
      %v850 = vpop.f32.mrb[0].mxu0
      %v851 = vadd.f32 %v682, %v850
      %v852 = vpop.f32.mrb[0].mxu0
      %853 = vmatprep.mubr.f32.mxu0 0.0
      %854 = vmatmul.mubr.f32.gmra.mrb[0].mxu0 %v745
      %v855 = vpop.f32.mrb[0].mxu0
      %v856 = vadd.f32 %v687, %v855
      %v857 = vpop.f32.mrb[0].mxu0
      %858 = vmatprep.mubr.f32.mxu0 0.0
      %859 = vmatmul.mubr.f32.gmra.mrb[0].mxu0 %v748
      %v860 = vpop.f32.mrb[0].mxu0
      %v861 = vadd.f32 %v692, %v860
      %v862 = vpop.f32.mrb[0].mxu0
      %863 = vmatprep.mubr.f32.mxu0 0.0
      %864 = vmatmul.mubr.f32.gmra.mrb[0].mxu0 %v751
      %v865 = vpop.f32.mrb[0].mxu0
      %v866 = vadd.f32 %v697, %v865
      %v867 = vpop.f32.mrb[0].mxu0
      %868 = vmatprep.mubr.f32.mxu0 0.0
      %869 = vmatmul.mubr.f32.gmra.mrb[0].mxu0 %v754
      %v870 = vpop.f32.mrb[0].mxu0
      %v871 = vadd.f32 %v702, %v870
      %v872 = vpop.f32.mrb[0].mxu0
      %873 = vmatprep.mubr.f32.mxu0 0.0
      %874 = vmatmul.mubr.f32.gmra.mrb[0].mxu0 %v757
      %v875 = vpop.f32.mrb[0].mxu0
      %v876 = vadd.f32 %v707, %v875
      %v877 = vpop.f32.mrb[0].mxu0
      %878 = vmatprep.mubr.f32.mxu0 0.0
      %879 = vmatmul.mubr.f32.gmra.mrb[0].mxu0 %v760
      %v880 = vpop.f32.mrb[0].mxu0
      %v881 = vadd.f32 %v712, %v880
      %v882 = vpop.f32.mrb[0].mxu0
      %883 = vmatprep.mubr.f32.mxu0 0.0
      %884 = vmatmul.mubr.f32.gmra.mrb[0].mxu0 %v763
      %v885 = vpop.f32.mrb[0].mxu0
      %v886 = vadd.f32 %v717, %v885
      %v887 = vpop.f32.mrb[0].mxu0
      %888 = vmatprep.mubr.f32.mxu0 0.0
      %889 = vmatmul.mubr.f32.gmra.mrb[0].mxu0 %v766
      %v890 = vpop.f32.mrb[0].mxu0
      %v891 = vadd.f32 %v722, %v890
      %v892 = vpop.f32.mrb[0].mxu0
      %893 = vmatprep.mubr.f32.mxu0 0.0
      %894 = vmatmul.mubr.f32.gmra.mrb[0].mxu0 %v769
      %v895 = vpop.f32.mrb[0].mxu0
      %v896 = vadd.f32 %v727, %v895
      %v897 = vpop.f32.mrb[0].mxu0
      %898 = vmatprep.mubr.f32.mxu0 0.0
      %899 = vmatmul.mubr.f32.gmra.mrb[0].mxu0 %v772
      %v900 = vpop.f32.mrb[0].mxu0
      %v901 = vadd.f32 %v732, %v900
      %v902 = vpop.f32.mrb[0].mxu0
      %903 = vdwg.mxu0
      %v904 = vld [vmem:[#allocation2 + $0x7] sm:$0xff]
      %v905 = vld [vmem:[#allocation2 + $0xf] sm:$0xff]
      %v906 = vld [vmem:[#allocation2 + $0x17] sm:$0xff]
      %v907 = vld [vmem:[#allocation2 + $0x1f] sm:$0xff]
      %v908 = vld [vmem:[#allocation2 + $0x27] sm:$0xff]
      %v909 = vld [vmem:[#allocation2 + $0x2f] sm:$0xff]
      %v910 = vld [vmem:[#allocation2 + $0x37] sm:$0xff]
      %v911 = vld [vmem:[#allocation2 + $0x3f] sm:$0xff]
      %v912 = vld [vmem:[#allocation2 + $0x47] sm:$0xff]
      %v913 = vld [vmem:[#allocation2 + $0x4f] sm:$0xff]
      %v914 = vld [vmem:[#allocation2 + $0x57] sm:$0xff]
      %v915 = vld [vmem:[#allocation2 + $0x5f] sm:$0xff]
      %v916 = vld [vmem:[#allocation2 + $0x67] sm:$0xff]
      %s917 = scalar_lea.vmem %s4, 32
      %v918 = vld [vmem:[%s917] sm:$0xff]
      %v919 = vld [vmem:[%s917 + $0x8] sm:$0xff]
      %v921 = vsel %vm360, %v904, 0
      %v924 = vsel %vm360, %v905, 0
      %v927 = vsel %vm360, %v906, 0
      %v930 = vsel %vm360, %v907, 0
      %v933 = vsel %vm360, %v908, 0
      %v936 = vsel %vm360, %v909, 0
      %v939 = vsel %vm360, %v910, 0
      %v942 = vsel %vm360, %v911, 0
      %v945 = vsel %vm360, %v912, 0
      %v948 = vsel %vm360, %v913, 0
      %v951 = vsel %vm360, %v914, 0
      %v954 = vsel %vm360, %v915, 0
      %v957 = vsel %vm360, %v916, 0
      %959 = vmatprep.subr.mxu0 0.0
      %960 = vmatpush1.msra.mxu0 %v918
      %961 = vmatprep.subr.mxu0 0.0
      %962 = vmatpush1.msra.mxu0 %v919
      %963 = vmatprep.subr.mxu0 0.0
      %964 = vmatpush1.msra.mxu0 0.0
      %965 = vmatprep.subr.mxu0 0.0
      %966 = vmatpush1.msra.mxu0 0.0
      %967 = vmatprep.subr.mxu0 0.0
      %968 = vmatpush1.msra.mxu0 0.0
      %969 = vmatprep.subr.mxu0 0.0
      %970 = vmatpush1.msra.mxu0 0.0
      %971 = vmatprep.subr.mxu0 0.0
      %972 = vmatpush1.msra.mxu0 0.0
      %973 = vmatprep.subr.mxu0 0.0
      %974 = vmatpush1.msra.mxu0 0.0
      %975 = vmatprep.subr.mxu0 0.0
      %976 = vmatpush1.msra.mxu0 0.0
      %977 = vmatprep.subr.mxu0 0.0
      %978 = vmatpush1.msra.mxu0 0.0
      %979 = vmatprep.subr.mxu0 0.0
      %980 = vmatpush1.msra.mxu0 0.0
      %981 = vmatprep.subr.mxu0 0.0
      %982 = vmatpush1.msra.mxu0 0.0
      %983 = vmatprep.subr.mxu0 0.0
      %984 = vmatpush1.msra.mxu0 0.0
      %985 = vmatprep.subr.mxu0 0.0
      %986 = vmatpush1.msra.mxu0 0.0
      %987 = vmatprep.subr.mxu0 0.0
      %988 = vmatpush1.msra.mxu0 0.0
      %989 = vmatprep.subr.mxu0 0.0
      %990 = vmatpush1.msra.mxu0 0.0
      %991 = vmatprep.subr.mxu0 0.0
      %992 = vmatpush1.msra.mxu0 0.0
      %993 = vmatprep.subr.mxu0 0.0
      %994 = vmatpush1.msra.mxu0 0.0
      %995 = vmatprep.subr.mxu0 0.0
      %996 = vmatpush1.msra.mxu0 0.0
      %997 = vmatprep.subr.mxu0 0.0
      %998 = vmatpush1.msra.mxu0 0.0
      %999 = vmatprep.subr.mxu0 0.0
      %1000 = vmatpush1.msra.mxu0 0.0
      %1001 = vmatprep.subr.mxu0 0.0
      %1002 = vmatpush1.msra.mxu0 0.0
      %1003 = vmatprep.subr.mxu0 0.0
      %1004 = vmatpush1.msra.mxu0 0.0
      %1005 = vmatprep.subr.mxu0 0.0
      %1006 = vmatpush1.msra.mxu0 0.0
      %1007 = vmatprep.subr.mxu0 0.0
      %1008 = vmatpush1.msra.mxu0 0.0
      %1009 = vmatprep.subr.mxu0 0.0
      %1010 = vmatpush1.msra.mxu0 0.0
      %1011 = vmatprep.subr.mxu0 0.0
      %1012 = vmatpush1.msra.mxu0 0.0
      %1013 = vmatprep.subr.mxu0 0.0
      %1014 = vmatpush1.msra.mxu0 0.0
      %1015 = vmatprep.subr.mxu0 0.0
      %1016 = vmatpush1.msra.mxu0 0.0
      %1017 = vmatprep.subr.mxu0 0.0
      %1018 = vmatpush1.msra.mxu0 0.0
      %1019 = vmatprep.subr.mxu0 0.0
      %1020 = vmatpush1.msra.mxu0 0.0
      %1021 = vmatprep.subr.mxu0 0.0
      %1022 = vmatpush1.msra.mxu0 0.0
      %1023 = vmatprep.mubr.f32.mxu0 0.0
      %1024 = vmatmul.mubr.f32.gmra.mrb[0].mxu0 %v921
      %v1025 = vpop.f32.mrb[0].mxu0
      %v1026 = vadd.f32 0.0, %v1025
      %v1027 = vpop.f32.mrb[0].mxu0
      %1028 = vmatprep.mubr.f32.mxu0 0.0
      %1029 = vmatmul.mubr.f32.gmra.mrb[0].mxu0 %v924
      %v1030 = vpop.f32.mrb[0].mxu0
      %v1031 = vadd.f32 0.0, %v1030
      %v1032 = vpop.f32.mrb[0].mxu0
      %1033 = vmatprep.mubr.f32.mxu0 0.0
      %1034 = vmatmul.mubr.f32.gmra.mrb[0].mxu0 %v927
      %v1035 = vpop.f32.mrb[0].mxu0
      %v1036 = vadd.f32 0.0, %v1035
      %v1037 = vpop.f32.mrb[0].mxu0
      %1038 = vmatprep.mubr.f32.mxu0 0.0
      %1039 = vmatmul.mubr.f32.gmra.mrb[0].mxu0 %v930
      %v1040 = vpop.f32.mrb[0].mxu0
      %v1041 = vadd.f32 0.0, %v1040
      %v1042 = vpop.f32.mrb[0].mxu0
      %1043 = vmatprep.mubr.f32.mxu0 0.0
      %1044 = vmatmul.mubr.f32.gmra.mrb[0].mxu0 %v933
      %v1045 = vpop.f32.mrb[0].mxu0
      %v1046 = vadd.f32 0.0, %v1045
      %v1047 = vpop.f32.mrb[0].mxu0
      %1048 = vmatprep.mubr.f32.mxu0 0.0
      %1049 = vmatmul.mubr.f32.gmra.mrb[0].mxu0 %v936
      %v1050 = vpop.f32.mrb[0].mxu0
      %v1051 = vadd.f32 0.0, %v1050
      %v1052 = vpop.f32.mrb[0].mxu0
      %1053 = vmatprep.mubr.f32.mxu0 0.0
      %1054 = vmatmul.mubr.f32.gmra.mrb[0].mxu0 %v939
      %v1055 = vpop.f32.mrb[0].mxu0
      %v1056 = vadd.f32 0.0, %v1055
      %v1057 = vpop.f32.mrb[0].mxu0
      %1058 = vmatprep.mubr.f32.mxu0 0.0
      %1059 = vmatmul.mubr.f32.gmra.mrb[0].mxu0 %v942
      %v1060 = vpop.f32.mrb[0].mxu0
      %v1061 = vadd.f32 0.0, %v1060
      %v1062 = vpop.f32.mrb[0].mxu0
      %1063 = vmatprep.mubr.f32.mxu0 0.0
      %1064 = vmatmul.mubr.f32.gmra.mrb[0].mxu0 %v945
      %v1065 = vpop.f32.mrb[0].mxu0
      %v1066 = vadd.f32 0.0, %v1065
      %v1067 = vpop.f32.mrb[0].mxu0
      %1068 = vmatprep.mubr.f32.mxu0 0.0
      %1069 = vmatmul.mubr.f32.gmra.mrb[0].mxu0 %v948
      %v1070 = vpop.f32.mrb[0].mxu0
      %v1071 = vadd.f32 0.0, %v1070
      %v1072 = vpop.f32.mrb[0].mxu0
      %1073 = vmatprep.mubr.f32.mxu0 0.0
      %1074 = vmatmul.mubr.f32.gmra.mrb[0].mxu0 %v951
      %v1075 = vpop.f32.mrb[0].mxu0
      %v1076 = vadd.f32 0.0, %v1075
      %v1077 = vpop.f32.mrb[0].mxu0
      %1078 = vmatprep.mubr.f32.mxu0 0.0
      %1079 = vmatmul.mubr.f32.gmra.mrb[0].mxu0 %v954
      %v1080 = vpop.f32.mrb[0].mxu0
      %v1081 = vadd.f32 0.0, %v1080
      %v1082 = vpop.f32.mrb[0].mxu0
      %1083 = vmatprep.mubr.f32.mxu0 0.0
      %1084 = vmatmul.mubr.f32.gmra.mrb[0].mxu0 %v957
      %v1085 = vpop.f32.mrb[0].mxu0
      %v1086 = vadd.f32 0.0, %v1085
      %v1087 = vpop.f32.mrb[0].mxu0
      %1088 = vdwg.mxu0
      %v1089 = vadd.f32 %v841, %v1026
      %v1090 = vadd.f32 %v846, %v1031
      %v1091 = vadd.f32 %v851, %v1036
      %v1092 = vadd.f32 %v856, %v1041
      %v1093 = vadd.f32 %v861, %v1046
      %v1094 = vadd.f32 %v866, %v1051
      %v1095 = vadd.f32 %v871, %v1056
      %v1096 = vadd.f32 %v876, %v1061
      %v1097 = vadd.f32 %v881, %v1066
      %v1098 = vadd.f32 %v886, %v1071
      %v1099 = vadd.f32 %v891, %v1076
      %v1100 = vadd.f32 %v896, %v1081
      %v1101 = vadd.f32 %v901, %v1086
      %v1102 = vld [vmem:[#allocation2 + $0xf] sm:$0xff]
      %v1103 = vld [vmem:[#allocation2 + $0x17] sm:$0xff]
      %v1104 = vld [vmem:[#allocation2 + $0x1f] sm:$0xff]
      %v1105 = vld [vmem:[#allocation2 + $0x27] sm:$0xff]
      %v1106 = vld [vmem:[#allocation2 + $0x2f] sm:$0xff]
      %v1107 = vld [vmem:[#allocation2 + $0x37] sm:$0xff]
      %v1108 = vld [vmem:[#allocation2 + $0x3f] sm:$0xff]
      %v1109 = vld [vmem:[#allocation2 + $0x47] sm:$0xff]
      %v1110 = vld [vmem:[#allocation2 + $0x4f] sm:$0xff]
      %v1111 = vld [vmem:[#allocation2 + $0x57] sm:$0xff]
      %v1112 = vld [vmem:[#allocation2 + $0x5f] sm:$0xff]
      %v1113 = vld [vmem:[#allocation2 + $0x67] sm:$0xff]
      %v1114 = vld [vmem:[#allocation2 + $0x6f] sm:$0xff]
      %s1115 = scalar_lea.vmem %s4, 48
      %v1116 = vld [vmem:[%s1115] sm:$0xff]
      %v1117 = vld [vmem:[%s1115 + $0x8] sm:$0xff]
      %v1119 = vsel %vm360, %v1102, 0
      %v1122 = vsel %vm360, %v1103, 0
      %v1125 = vsel %vm360, %v1104, 0
      %v1128 = vsel %vm360, %v1105, 0
      %v1131 = vsel %vm360, %v1106, 0
      %v1134 = vsel %vm360, %v1107, 0
      %v1137 = vsel %vm360, %v1108, 0
      %v1140 = vsel %vm360, %v1109, 0
      %v1143 = vsel %vm360, %v1110, 0
      %v1146 = vsel %vm360, %v1111, 0
      %v1149 = vsel %vm360, %v1112, 0
      %v1152 = vsel %vm360, %v1113, 0
      %v1155 = vsel %vm360, %v1114, 0
      %1157 = vmatprep.subr.mxu0 0.0
      %1158 = vmatpush1.msra.mxu0 %v1116
      %1159 = vmatprep.subr.mxu0 0.0
      %1160 = vmatpush1.msra.mxu0 %v1117
      %1161 = vmatprep.subr.mxu0 0.0
      %1162 = vmatpush1.msra.mxu0 0.0
      %1163 = vmatprep.subr.mxu0 0.0
      %1164 = vmatpush1.msra.mxu0 0.0
      %1165 = vmatprep.subr.mxu0 0.0
      %1166 = vmatpush1.msra.mxu0 0.0
      %1167 = vmatprep.subr.mxu0 0.0
      %1168 = vmatpush1.msra.mxu0 0.0
      %1169 = vmatprep.subr.mxu0 0.0
      %1170 = vmatpush1.msra.mxu0 0.0
      %1171 = vmatprep.subr.mxu0 0.0
      %1172 = vmatpush1.msra.mxu0 0.0
      %1173 = vmatprep.subr.mxu0 0.0
      %1174 = vmatpush1.msra.mxu0 0.0
      %1175 = vmatprep.subr.mxu0 0.0
      %1176 = vmatpush1.msra.mxu0 0.0
      %1177 = vmatprep.subr.mxu0 0.0
      %1178 = vmatpush1.msra.mxu0 0.0
      %1179 = vmatprep.subr.mxu0 0.0
      %1180 = vmatpush1.msra.mxu0 0.0
      %1181 = vmatprep.subr.mxu0 0.0
      %1182 = vmatpush1.msra.mxu0 0.0
      %1183 = vmatprep.subr.mxu0 0.0
      %1184 = vmatpush1.msra.mxu0 0.0
      %1185 = vmatprep.subr.mxu0 0.0
      %1186 = vmatpush1.msra.mxu0 0.0
      %1187 = vmatprep.subr.mxu0 0.0
      %1188 = vmatpush1.msra.mxu0 0.0
      %1189 = vmatprep.subr.mxu0 0.0
      %1190 = vmatpush1.msra.mxu0 0.0
      %1191 = vmatprep.subr.mxu0 0.0
      %1192 = vmatpush1.msra.mxu0 0.0
      %1193 = vmatprep.subr.mxu0 0.0
      %1194 = vmatpush1.msra.mxu0 0.0
      %1195 = vmatprep.subr.mxu0 0.0
      %1196 = vmatpush1.msra.mxu0 0.0
      %1197 = vmatprep.subr.mxu0 0.0
      %1198 = vmatpush1.msra.mxu0 0.0
      %1199 = vmatprep.subr.mxu0 0.0
      %1200 = vmatpush1.msra.mxu0 0.0
      %1201 = vmatprep.subr.mxu0 0.0
      %1202 = vmatpush1.msra.mxu0 0.0
      %1203 = vmatprep.subr.mxu0 0.0
      %1204 = vmatpush1.msra.mxu0 0.0
      %1205 = vmatprep.subr.mxu0 0.0
      %1206 = vmatpush1.msra.mxu0 0.0
      %1207 = vmatprep.subr.mxu0 0.0
      %1208 = vmatpush1.msra.mxu0 0.0
      %1209 = vmatprep.subr.mxu0 0.0
      %1210 = vmatpush1.msra.mxu0 0.0
      %1211 = vmatprep.subr.mxu0 0.0
      %1212 = vmatpush1.msra.mxu0 0.0
      %1213 = vmatprep.subr.mxu0 0.0
      %1214 = vmatpush1.msra.mxu0 0.0
      %1215 = vmatprep.subr.mxu0 0.0
      %1216 = vmatpush1.msra.mxu0 0.0
      %1217 = vmatprep.subr.mxu0 0.0
      %1218 = vmatpush1.msra.mxu0 0.0
      %1219 = vmatprep.subr.mxu0 0.0
      %1220 = vmatpush1.msra.mxu0 0.0
      %1221 = vmatprep.mubr.f32.mxu0 0.0
      %1222 = vmatmul.mubr.f32.gmra.mrb[0].mxu0 %v1119
      %v1223 = vpop.f32.mrb[0].mxu0
      %v1224 = vadd.f32 0.0, %v1223
      %v1225 = vpop.f32.mrb[0].mxu0
      %1226 = vmatprep.mubr.f32.mxu0 0.0
      %1227 = vmatmul.mubr.f32.gmra.mrb[0].mxu0 %v1122
      %v1228 = vpop.f32.mrb[0].mxu0
      %v1229 = vadd.f32 0.0, %v1228
      %v1230 = vpop.f32.mrb[0].mxu0
      %1231 = vmatprep.mubr.f32.mxu0 0.0
      %1232 = vmatmul.mubr.f32.gmra.mrb[0].mxu0 %v1125
      %v1233 = vpop.f32.mrb[0].mxu0
      %v1234 = vadd.f32 0.0, %v1233
      %v1235 = vpop.f32.mrb[0].mxu0
      %1236 = vmatprep.mubr.f32.mxu0 0.0
      %1237 = vmatmul.mubr.f32.gmra.mrb[0].mxu0 %v1128
      %v1238 = vpop.f32.mrb[0].mxu0
      %v1239 = vadd.f32 0.0, %v1238
      %v1240 = vpop.f32.mrb[0].mxu0
      %1241 = vmatprep.mubr.f32.mxu0 0.0
      %1242 = vmatmul.mubr.f32.gmra.mrb[0].mxu0 %v1131
      %v1243 = vpop.f32.mrb[0].mxu0
      %v1244 = vadd.f32 0.0, %v1243
      %v1245 = vpop.f32.mrb[0].mxu0
      %1246 = vmatprep.mubr.f32.mxu0 0.0
      %1247 = vmatmul.mubr.f32.gmra.mrb[0].mxu0 %v1134
      %v1248 = vpop.f32.mrb[0].mxu0
      %v1249 = vadd.f32 0.0, %v1248
      %v1250 = vpop.f32.mrb[0].mxu0
      %1251 = vmatprep.mubr.f32.mxu0 0.0
      %1252 = vmatmul.mubr.f32.gmra.mrb[0].mxu0 %v1137
      %v1253 = vpop.f32.mrb[0].mxu0
      %v1254 = vadd.f32 0.0, %v1253
      %v1255 = vpop.f32.mrb[0].mxu0
      %1256 = vmatprep.mubr.f32.mxu0 0.0
      %1257 = vmatmul.mubr.f32.gmra.mrb[0].mxu0 %v1140
      %v1258 = vpop.f32.mrb[0].mxu0
      %v1259 = vadd.f32 0.0, %v1258
      %v1260 = vpop.f32.mrb[0].mxu0
      %1261 = vmatprep.mubr.f32.mxu0 0.0
      %1262 = vmatmul.mubr.f32.gmra.mrb[0].mxu0 %v1143
      %v1263 = vpop.f32.mrb[0].mxu0
      %v1264 = vadd.f32 0.0, %v1263
      %v1265 = vpop.f32.mrb[0].mxu0
      %1266 = vmatprep.mubr.f32.mxu0 0.0
      %1267 = vmatmul.mubr.f32.gmra.mrb[0].mxu0 %v1146
      %v1268 = vpop.f32.mrb[0].mxu0
      %v1269 = vadd.f32 0.0, %v1268
      %v1270 = vpop.f32.mrb[0].mxu0
      %1271 = vmatprep.mubr.f32.mxu0 0.0
      %1272 = vmatmul.mubr.f32.gmra.mrb[0].mxu0 %v1149
      %v1273 = vpop.f32.mrb[0].mxu0
      %v1274 = vadd.f32 0.0, %v1273
      %v1275 = vpop.f32.mrb[0].mxu0
      %1276 = vmatprep.mubr.f32.mxu0 0.0
      %1277 = vmatmul.mubr.f32.gmra.mrb[0].mxu0 %v1152
      %v1278 = vpop.f32.mrb[0].mxu0
      %v1279 = vadd.f32 0.0, %v1278
      %v1280 = vpop.f32.mrb[0].mxu0
      %1281 = vmatprep.mubr.f32.mxu0 0.0
      %1282 = vmatmul.mubr.f32.gmra.mrb[0].mxu0 %v1155
      %v1283 = vpop.f32.mrb[0].mxu0
      %v1284 = vadd.f32 0.0, %v1283
      %v1285 = vpop.f32.mrb[0].mxu0
      %1286 = vdwg.mxu0
      %v1287 = vadd.f32 %v1089, %v1224
      %v1288 = vadd.f32 %v1090, %v1229
      %v1289 = vadd.f32 %v1091, %v1234
      %v1290 = vadd.f32 %v1092, %v1239
      %v1291 = vadd.f32 %v1093, %v1244
      %v1292 = vadd.f32 %v1094, %v1249
      %v1293 = vadd.f32 %v1095, %v1254
      %v1294 = vadd.f32 %v1096, %v1259
      %v1295 = vadd.f32 %v1097, %v1264
      %v1296 = vadd.f32 %v1098, %v1269
      %v1297 = vadd.f32 %v1099, %v1274
      %v1298 = vadd.f32 %v1100, %v1279
      %v1299 = vadd.f32 %v1101, %v1284
      %v1300 = vld [vmem:[#allocation2 + $0x10] sm:$0xff]
      %v1301 = vld [vmem:[#allocation2 + $0x18] sm:$0xff]
      %v1302 = vld [vmem:[#allocation2 + $0x20] sm:$0xff]
      %v1303 = vld [vmem:[#allocation2 + $0x28] sm:$0xff]
      %v1304 = vld [vmem:[#allocation2 + $0x30] sm:$0xff]
      %v1305 = vld [vmem:[#allocation2 + $0x38] sm:$0xff]
      %v1306 = vld [vmem:[#allocation2 + $0x40] sm:$0xff]
      %v1307 = vld [vmem:[#allocation2 + $0x48] sm:$0xff]
      %v1308 = vld [vmem:[#allocation2 + $0x50] sm:$0xff]
      %v1309 = vld [vmem:[#allocation2 + $0x58] sm:$0xff]
      %v1310 = vld [vmem:[#allocation2 + $0x60] sm:$0xff]
      %v1311 = vld [vmem:[#allocation2 + $0x68] sm:$0xff]
      %v1312 = vld [vmem:[#allocation2 + $0x70] sm:$0xff]
      %s1313 = scalar_lea.vmem %s4, 64
      %v1314 = vld [vmem:[%s1313] sm:$0xff]
      %v1315 = vld [vmem:[%s1313 + $0x8] sm:$0xff]
      %v1317 = vsel %vm360, %v1300, 0
      %v1320 = vsel %vm360, %v1301, 0
      %v1323 = vsel %vm360, %v1302, 0
      %v1326 = vsel %vm360, %v1303, 0
      %v1329 = vsel %vm360, %v1304, 0
      %v1332 = vsel %vm360, %v1305, 0
      %v1335 = vsel %vm360, %v1306, 0
      %v1338 = vsel %vm360, %v1307, 0
      %v1341 = vsel %vm360, %v1308, 0
      %v1344 = vsel %vm360, %v1309, 0
      %v1347 = vsel %vm360, %v1310, 0
      %v1350 = vsel %vm360, %v1311, 0
      %v1353 = vsel %vm360, %v1312, 0
      %1355 = vmatprep.subr.mxu0 0.0
      %1356 = vmatpush1.msra.mxu0 %v1314
      %1357 = vmatprep.subr.mxu0 0.0
      %1358 = vmatpush1.msra.mxu0 %v1315
      %1359 = vmatprep.subr.mxu0 0.0
      %1360 = vmatpush1.msra.mxu0 0.0
      %1361 = vmatprep.subr.mxu0 0.0
      %1362 = vmatpush1.msra.mxu0 0.0
      %1363 = vmatprep.subr.mxu0 0.0
      %1364 = vmatpush1.msra.mxu0 0.0
      %1365 = vmatprep.subr.mxu0 0.0
      %1366 = vmatpush1.msra.mxu0 0.0
      %1367 = vmatprep.subr.mxu0 0.0
      %1368 = vmatpush1.msra.mxu0 0.0
      %1369 = vmatprep.subr.mxu0 0.0
      %1370 = vmatpush1.msra.mxu0 0.0
      %1371 = vmatprep.subr.mxu0 0.0
      %1372 = vmatpush1.msra.mxu0 0.0
      %1373 = vmatprep.subr.mxu0 0.0
      %1374 = vmatpush1.msra.mxu0 0.0
      %1375 = vmatprep.subr.mxu0 0.0
      %1376 = vmatpush1.msra.mxu0 0.0
      %1377 = vmatprep.subr.mxu0 0.0
      %1378 = vmatpush1.msra.mxu0 0.0
      %1379 = vmatprep.subr.mxu0 0.0
      %1380 = vmatpush1.msra.mxu0 0.0
      %1381 = vmatprep.subr.mxu0 0.0
      %1382 = vmatpush1.msra.mxu0 0.0
      %1383 = vmatprep.subr.mxu0 0.0
      %1384 = vmatpush1.msra.mxu0 0.0
      %1385 = vmatprep.subr.mxu0 0.0
      %1386 = vmatpush1.msra.mxu0 0.0
      %1387 = vmatprep.subr.mxu0 0.0
      %1388 = vmatpush1.msra.mxu0 0.0
      %1389 = vmatprep.subr.mxu0 0.0
      %1390 = vmatpush1.msra.mxu0 0.0
      %1391 = vmatprep.subr.mxu0 0.0
      %1392 = vmatpush1.msra.mxu0 0.0
      %1393 = vmatprep.subr.mxu0 0.0
      %1394 = vmatpush1.msra.mxu0 0.0
      %1395 = vmatprep.subr.mxu0 0.0
      %1396 = vmatpush1.msra.mxu0 0.0
      %1397 = vmatprep.subr.mxu0 0.0
      %1398 = vmatpush1.msra.mxu0 0.0
      %1399 = vmatprep.subr.mxu0 0.0
      %1400 = vmatpush1.msra.mxu0 0.0
      %1401 = vmatprep.subr.mxu0 0.0
      %1402 = vmatpush1.msra.mxu0 0.0
      %1403 = vmatprep.subr.mxu0 0.0
      %1404 = vmatpush1.msra.mxu0 0.0
      %1405 = vmatprep.subr.mxu0 0.0
      %1406 = vmatpush1.msra.mxu0 0.0
      %1407 = vmatprep.subr.mxu0 0.0
      %1408 = vmatpush1.msra.mxu0 0.0
      %1409 = vmatprep.subr.mxu0 0.0
      %1410 = vmatpush1.msra.mxu0 0.0
      %1411 = vmatprep.subr.mxu0 0.0
      %1412 = vmatpush1.msra.mxu0 0.0
      %1413 = vmatprep.subr.mxu0 0.0
      %1414 = vmatpush1.msra.mxu0 0.0
      %1415 = vmatprep.subr.mxu0 0.0
      %1416 = vmatpush1.msra.mxu0 0.0
      %1417 = vmatprep.subr.mxu0 0.0
      %1418 = vmatpush1.msra.mxu0 0.0
      %1419 = vmatprep.mubr.f32.mxu0 0.0
      %1420 = vmatmul.mubr.f32.gmra.mrb[0].mxu0 %v1317
      %v1421 = vpop.f32.mrb[0].mxu0
      %v1422 = vadd.f32 0.0, %v1421
      %v1423 = vpop.f32.mrb[0].mxu0
      %1424 = vmatprep.mubr.f32.mxu0 0.0
      %1425 = vmatmul.mubr.f32.gmra.mrb[0].mxu0 %v1320
      %v1426 = vpop.f32.mrb[0].mxu0
      %v1427 = vadd.f32 0.0, %v1426
      %v1428 = vpop.f32.mrb[0].mxu0
      %1429 = vmatprep.mubr.f32.mxu0 0.0
      %1430 = vmatmul.mubr.f32.gmra.mrb[0].mxu0 %v1323
      %v1431 = vpop.f32.mrb[0].mxu0
      %v1432 = vadd.f32 0.0, %v1431
      %v1433 = vpop.f32.mrb[0].mxu0
      %1434 = vmatprep.mubr.f32.mxu0 0.0
      %1435 = vmatmul.mubr.f32.gmra.mrb[0].mxu0 %v1326
      %v1436 = vpop.f32.mrb[0].mxu0
      %v1437 = vadd.f32 0.0, %v1436
      %v1438 = vpop.f32.mrb[0].mxu0
      %1439 = vmatprep.mubr.f32.mxu0 0.0
      %1440 = vmatmul.mubr.f32.gmra.mrb[0].mxu0 %v1329
      %v1441 = vpop.f32.mrb[0].mxu0
      %v1442 = vadd.f32 0.0, %v1441
      %v1443 = vpop.f32.mrb[0].mxu0
      %1444 = vmatprep.mubr.f32.mxu0 0.0
      %1445 = vmatmul.mubr.f32.gmra.mrb[0].mxu0 %v1332
      %v1446 = vpop.f32.mrb[0].mxu0
      %v1447 = vadd.f32 0.0, %v1446
      %v1448 = vpop.f32.mrb[0].mxu0
      %1449 = vmatprep.mubr.f32.mxu0 0.0
      %1450 = vmatmul.mubr.f32.gmra.mrb[0].mxu0 %v1335
      %v1451 = vpop.f32.mrb[0].mxu0
      %v1452 = vadd.f32 0.0, %v1451
      %v1453 = vpop.f32.mrb[0].mxu0
      %1454 = vmatprep.mubr.f32.mxu0 0.0
      %1455 = vmatmul.mubr.f32.gmra.mrb[0].mxu0 %v1338
      %v1456 = vpop.f32.mrb[0].mxu0
      %v1457 = vadd.f32 0.0, %v1456
      %v1458 = vpop.f32.mrb[0].mxu0
      %1459 = vmatprep.mubr.f32.mxu0 0.0
      %1460 = vmatmul.mubr.f32.gmra.mrb[0].mxu0 %v1341
      %v1461 = vpop.f32.mrb[0].mxu0
      %v1462 = vadd.f32 0.0, %v1461
      %v1463 = vpop.f32.mrb[0].mxu0
      %1464 = vmatprep.mubr.f32.mxu0 0.0
      %1465 = vmatmul.mubr.f32.gmra.mrb[0].mxu0 %v1344
      %v1466 = vpop.f32.mrb[0].mxu0
      %v1467 = vadd.f32 0.0, %v1466
      %v1468 = vpop.f32.mrb[0].mxu0
      %1469 = vmatprep.mubr.f32.mxu0 0.0
      %1470 = vmatmul.mubr.f32.gmra.mrb[0].mxu0 %v1347
      %v1471 = vpop.f32.mrb[0].mxu0
      %v1472 = vadd.f32 0.0, %v1471
      %v1473 = vpop.f32.mrb[0].mxu0
      %1474 = vmatprep.mubr.f32.mxu0 0.0
      %1475 = vmatmul.mubr.f32.gmra.mrb[0].mxu0 %v1350
      %v1476 = vpop.f32.mrb[0].mxu0
      %v1477 = vadd.f32 0.0, %v1476
      %v1478 = vpop.f32.mrb[0].mxu0
      %1479 = vmatprep.mubr.f32.mxu0 0.0
      %1480 = vmatmul.mubr.f32.gmra.mrb[0].mxu0 %v1353
      %v1481 = vpop.f32.mrb[0].mxu0
      %v1482 = vadd.f32 0.0, %v1481
      %v1483 = vpop.f32.mrb[0].mxu0
      %1484 = vdwg.mxu0
      %v1485 = vadd.f32 %v1287, %v1422
      %v1486 = vadd.f32 %v1288, %v1427
      %v1487 = vadd.f32 %v1289, %v1432
      %v1488 = vadd.f32 %v1290, %v1437
      %v1489 = vadd.f32 %v1291, %v1442
      %v1490 = vadd.f32 %v1292, %v1447
      %v1491 = vadd.f32 %v1293, %v1452
      %v1492 = vadd.f32 %v1294, %v1457
      %v1493 = vadd.f32 %v1295, %v1462
      %v1494 = vadd.f32 %v1296, %v1467
      %v1495 = vadd.f32 %v1297, %v1472
      %v1496 = vadd.f32 %v1298, %v1477
      %v1497 = vadd.f32 %v1299, %v1482
      %v1498 = vld [vmem:[#allocation2 + $0x11] sm:$0xff]
      %v1499 = vld [vmem:[#allocation2 + $0x19] sm:$0xff]
      %v1500 = vld [vmem:[#allocation2 + $0x21] sm:$0xff]
      %v1501 = vld [vmem:[#allocation2 + $0x29] sm:$0xff]
      %v1502 = vld [vmem:[#allocation2 + $0x31] sm:$0xff]
      %v1503 = vld [vmem:[#allocation2 + $0x39] sm:$0xff]
      %v1504 = vld [vmem:[#allocation2 + $0x41] sm:$0xff]
      %v1505 = vld [vmem:[#allocation2 + $0x49] sm:$0xff]
      %v1506 = vld [vmem:[#allocation2 + $0x51] sm:$0xff]
      %v1507 = vld [vmem:[#allocation2 + $0x59] sm:$0xff]
      %v1508 = vld [vmem:[#allocation2 + $0x61] sm:$0xff]
      %v1509 = vld [vmem:[#allocation2 + $0x69] sm:$0xff]
      %v1510 = vld [vmem:[#allocation2 + $0x71] sm:$0xff]
      %s1511 = scalar_lea.vmem %s4, 80
      %v1512 = vld [vmem:[%s1511] sm:$0xff]
      %v1513 = vld [vmem:[%s1511 + $0x8] sm:$0xff]
      %v1515 = vsel %vm360, %v1498, 0
      %v1518 = vsel %vm360, %v1499, 0
      %v1521 = vsel %vm360, %v1500, 0
      %v1524 = vsel %vm360, %v1501, 0
      %v1527 = vsel %vm360, %v1502, 0
      %v1530 = vsel %vm360, %v1503, 0
      %v1533 = vsel %vm360, %v1504, 0
      %v1536 = vsel %vm360, %v1505, 0
      %v1539 = vsel %vm360, %v1506, 0
      %v1542 = vsel %vm360, %v1507, 0
      %v1545 = vsel %vm360, %v1508, 0
      %v1548 = vsel %vm360, %v1509, 0
      %v1551 = vsel %vm360, %v1510, 0
      %1553 = vmatprep.subr.mxu0 0.0
      %1554 = vmatpush1.msra.mxu0 %v1512
      %1555 = vmatprep.subr.mxu0 0.0
      %1556 = vmatpush1.msra.mxu0 %v1513
      %1557 = vmatprep.subr.mxu0 0.0
      %1558 = vmatpush1.msra.mxu0 0.0
      %1559 = vmatprep.subr.mxu0 0.0
      %1560 = vmatpush1.msra.mxu0 0.0
      %1561 = vmatprep.subr.mxu0 0.0
      %1562 = vmatpush1.msra.mxu0 0.0
      %1563 = vmatprep.subr.mxu0 0.0
      %1564 = vmatpush1.msra.mxu0 0.0
      %1565 = vmatprep.subr.mxu0 0.0
      %1566 = vmatpush1.msra.mxu0 0.0
      %1567 = vmatprep.subr.mxu0 0.0
      %1568 = vmatpush1.msra.mxu0 0.0
      %1569 = vmatprep.subr.mxu0 0.0
      %1570 = vmatpush1.msra.mxu0 0.0
      %1571 = vmatprep.subr.mxu0 0.0
      %1572 = vmatpush1.msra.mxu0 0.0
      %1573 = vmatprep.subr.mxu0 0.0
      %1574 = vmatpush1.msra.mxu0 0.0
      %1575 = vmatprep.subr.mxu0 0.0
      %1576 = vmatpush1.msra.mxu0 0.0
      %1577 = vmatprep.subr.mxu0 0.0
      %1578 = vmatpush1.msra.mxu0 0.0
      %1579 = vmatprep.subr.mxu0 0.0
      %1580 = vmatpush1.msra.mxu0 0.0
      %1581 = vmatprep.subr.mxu0 0.0
      %1582 = vmatpush1.msra.mxu0 0.0
      %1583 = vmatprep.subr.mxu0 0.0
      %1584 = vmatpush1.msra.mxu0 0.0
      %1585 = vmatprep.subr.mxu0 0.0
      %1586 = vmatpush1.msra.mxu0 0.0
      %1587 = vmatprep.subr.mxu0 0.0
      %1588 = vmatpush1.msra.mxu0 0.0
      %1589 = vmatprep.subr.mxu0 0.0
      %1590 = vmatpush1.msra.mxu0 0.0
      %1591 = vmatprep.subr.mxu0 0.0
      %1592 = vmatpush1.msra.mxu0 0.0
      %1593 = vmatprep.subr.mxu0 0.0
      %1594 = vmatpush1.msra.mxu0 0.0
      %1595 = vmatprep.subr.mxu0 0.0
      %1596 = vmatpush1.msra.mxu0 0.0
      %1597 = vmatprep.subr.mxu0 0.0
      %1598 = vmatpush1.msra.mxu0 0.0
      %1599 = vmatprep.subr.mxu0 0.0
      %1600 = vmatpush1.msra.mxu0 0.0
      %1601 = vmatprep.subr.mxu0 0.0
      %1602 = vmatpush1.msra.mxu0 0.0
      %1603 = vmatprep.subr.mxu0 0.0
      %1604 = vmatpush1.msra.mxu0 0.0
      %1605 = vmatprep.subr.mxu0 0.0
      %1606 = vmatpush1.msra.mxu0 0.0
      %1607 = vmatprep.subr.mxu0 0.0
      %1608 = vmatpush1.msra.mxu0 0.0
      %1609 = vmatprep.subr.mxu0 0.0
      %1610 = vmatpush1.msra.mxu0 0.0
      %1611 = vmatprep.subr.mxu0 0.0
      %1612 = vmatpush1.msra.mxu0 0.0
      %1613 = vmatprep.subr.mxu0 0.0
      %1614 = vmatpush1.msra.mxu0 0.0
      %1615 = vmatprep.subr.mxu0 0.0
      %1616 = vmatpush1.msra.mxu0 0.0
      %1617 = vmatprep.mubr.f32.mxu0 0.0
      %1618 = vmatmul.mubr.f32.gmra.mrb[0].mxu0 %v1515
      %v1619 = vpop.f32.mrb[0].mxu0
      %v1620 = vadd.f32 0.0, %v1619
      %v1621 = vpop.f32.mrb[0].mxu0
      %1622 = vmatprep.mubr.f32.mxu0 0.0
      %1623 = vmatmul.mubr.f32.gmra.mrb[0].mxu0 %v1518
      %v1624 = vpop.f32.mrb[0].mxu0
      %v1625 = vadd.f32 0.0, %v1624
      %v1626 = vpop.f32.mrb[0].mxu0
      %1627 = vmatprep.mubr.f32.mxu0 0.0
      %1628 = vmatmul.mubr.f32.gmra.mrb[0].mxu0 %v1521
      %v1629 = vpop.f32.mrb[0].mxu0
      %v1630 = vadd.f32 0.0, %v1629
      %v1631 = vpop.f32.mrb[0].mxu0
      %1632 = vmatprep.mubr.f32.mxu0 0.0
      %1633 = vmatmul.mubr.f32.gmra.mrb[0].mxu0 %v1524
      %v1634 = vpop.f32.mrb[0].mxu0
      %v1635 = vadd.f32 0.0, %v1634
      %v1636 = vpop.f32.mrb[0].mxu0
      %1637 = vmatprep.mubr.f32.mxu0 0.0
      %1638 = vmatmul.mubr.f32.gmra.mrb[0].mxu0 %v1527
      %v1639 = vpop.f32.mrb[0].mxu0
      %v1640 = vadd.f32 0.0, %v1639
      %v1641 = vpop.f32.mrb[0].mxu0
      %1642 = vmatprep.mubr.f32.mxu0 0.0
      %1643 = vmatmul.mubr.f32.gmra.mrb[0].mxu0 %v1530
      %v1644 = vpop.f32.mrb[0].mxu0
      %v1645 = vadd.f32 0.0, %v1644
      %v1646 = vpop.f32.mrb[0].mxu0
      %1647 = vmatprep.mubr.f32.mxu0 0.0
      %1648 = vmatmul.mubr.f32.gmra.mrb[0].mxu0 %v1533
      %v1649 = vpop.f32.mrb[0].mxu0
      %v1650 = vadd.f32 0.0, %v1649
      %v1651 = vpop.f32.mrb[0].mxu0
      %1652 = vmatprep.mubr.f32.mxu0 0.0
      %1653 = vmatmul.mubr.f32.gmra.mrb[0].mxu0 %v1536
      %v1654 = vpop.f32.mrb[0].mxu0
      %v1655 = vadd.f32 0.0, %v1654
      %v1656 = vpop.f32.mrb[0].mxu0
      %1657 = vmatprep.mubr.f32.mxu0 0.0
      %1658 = vmatmul.mubr.f32.gmra.mrb[0].mxu0 %v1539
      %v1659 = vpop.f32.mrb[0].mxu0
      %v1660 = vadd.f32 0.0, %v1659
      %v1661 = vpop.f32.mrb[0].mxu0
      %1662 = vmatprep.mubr.f32.mxu0 0.0
      %1663 = vmatmul.mubr.f32.gmra.mrb[0].mxu0 %v1542
      %v1664 = vpop.f32.mrb[0].mxu0
      %v1665 = vadd.f32 0.0, %v1664
      %v1666 = vpop.f32.mrb[0].mxu0
      %1667 = vmatprep.mubr.f32.mxu0 0.0
      %1668 = vmatmul.mubr.f32.gmra.mrb[0].mxu0 %v1545
      %v1669 = vpop.f32.mrb[0].mxu0
      %v1670 = vadd.f32 0.0, %v1669
      %v1671 = vpop.f32.mrb[0].mxu0
      %1672 = vmatprep.mubr.f32.mxu0 0.0
      %1673 = vmatmul.mubr.f32.gmra.mrb[0].mxu0 %v1548
      %v1674 = vpop.f32.mrb[0].mxu0
      %v1675 = vadd.f32 0.0, %v1674
      %v1676 = vpop.f32.mrb[0].mxu0
      %1677 = vmatprep.mubr.f32.mxu0 0.0
      %1678 = vmatmul.mubr.f32.gmra.mrb[0].mxu0 %v1551
      %v1679 = vpop.f32.mrb[0].mxu0
      %v1680 = vadd.f32 0.0, %v1679
      %v1681 = vpop.f32.mrb[0].mxu0
      %1682 = vdwg.mxu0
      %v1683 = vadd.f32 %v1485, %v1620
      %v1684 = vadd.f32 %v1486, %v1625
      %v1685 = vadd.f32 %v1487, %v1630
      %v1686 = vadd.f32 %v1488, %v1635
      %v1687 = vadd.f32 %v1489, %v1640
      %v1688 = vadd.f32 %v1490, %v1645
      %v1689 = vadd.f32 %v1491, %v1650
      %v1690 = vadd.f32 %v1492, %v1655
      %v1691 = vadd.f32 %v1493, %v1660
      %v1692 = vadd.f32 %v1494, %v1665
      %v1693 = vadd.f32 %v1495, %v1670
      %v1694 = vadd.f32 %v1496, %v1675
      %v1695 = vadd.f32 %v1497, %v1680
      %v1696 = vld [vmem:[#allocation2 + $0x19] sm:$0xff]
      %v1697 = vld [vmem:[#allocation2 + $0x21] sm:$0xff]
      %v1698 = vld [vmem:[#allocation2 + $0x29] sm:$0xff]
      %v1699 = vld [vmem:[#allocation2 + $0x31] sm:$0xff]
      %v1700 = vld [vmem:[#allocation2 + $0x39] sm:$0xff]
      %v1701 = vld [vmem:[#allocation2 + $0x41] sm:$0xff]
      %v1702 = vld [vmem:[#allocation2 + $0x49] sm:$0xff]
      %v1703 = vld [vmem:[#allocation2 + $0x51] sm:$0xff]
      %v1704 = vld [vmem:[#allocation2 + $0x59] sm:$0xff]
      %v1705 = vld [vmem:[#allocation2 + $0x61] sm:$0xff]
      %v1706 = vld [vmem:[#allocation2 + $0x69] sm:$0xff]
      %v1707 = vld [vmem:[#allocation2 + $0x71] sm:$0xff]
      %v1708 = vld [vmem:[#allocation2 + $0x79] sm:$0xff]
      %s1709 = scalar_lea.vmem %s4, 96
      %v1710 = vld [vmem:[%s1709] sm:$0xff]
      %v1711 = vld [vmem:[%s1709 + $0x8] sm:$0xff]
      %v1713 = vsel %vm360, %v1696, 0
      %v1716 = vsel %vm360, %v1697, 0
      %v1719 = vsel %vm360, %v1698, 0
      %v1722 = vsel %vm360, %v1699, 0
      %v1725 = vsel %vm360, %v1700, 0
      %v1728 = vsel %vm360, %v1701, 0
      %v1731 = vsel %vm360, %v1702, 0
      %v1734 = vsel %vm360, %v1703, 0
      %v1737 = vsel %vm360, %v1704, 0
      %v1740 = vsel %vm360, %v1705, 0
      %v1743 = vsel %vm360, %v1706, 0
      %v1746 = vsel %vm360, %v1707, 0
      %v1749 = vsel %vm360, %v1708, 0
      %1751 = vmatprep.subr.mxu0 0.0
      %1752 = vmatpush1.msra.mxu0 %v1710
      %1753 = vmatprep.subr.mxu0 0.0
      %1754 = vmatpush1.msra.mxu0 %v1711
      %1755 = vmatprep.subr.mxu0 0.0
      %1756 = vmatpush1.msra.mxu0 0.0
      %1757 = vmatprep.subr.mxu0 0.0
      %1758 = vmatpush1.msra.mxu0 0.0
      %1759 = vmatprep.subr.mxu0 0.0
      %1760 = vmatpush1.msra.mxu0 0.0
      %1761 = vmatprep.subr.mxu0 0.0
      %1762 = vmatpush1.msra.mxu0 0.0
      %1763 = vmatprep.subr.mxu0 0.0
      %1764 = vmatpush1.msra.mxu0 0.0
      %1765 = vmatprep.subr.mxu0 0.0
      %1766 = vmatpush1.msra.mxu0 0.0
      %1767 = vmatprep.subr.mxu0 0.0
      %1768 = vmatpush1.msra.mxu0 0.0
      %1769 = vmatprep.subr.mxu0 0.0
      %1770 = vmatpush1.msra.mxu0 0.0
      %1771 = vmatprep.subr.mxu0 0.0
      %1772 = vmatpush1.msra.mxu0 0.0
      %1773 = vmatprep.subr.mxu0 0.0
      %1774 = vmatpush1.msra.mxu0 0.0
      %1775 = vmatprep.subr.mxu0 0.0
      %1776 = vmatpush1.msra.mxu0 0.0
      %1777 = vmatprep.subr.mxu0 0.0
      %1778 = vmatpush1.msra.mxu0 0.0
      %1779 = vmatprep.subr.mxu0 0.0
      %1780 = vmatpush1.msra.mxu0 0.0
      %1781 = vmatprep.subr.mxu0 0.0
      %1782 = vmatpush1.msra.mxu0 0.0
      %1783 = vmatprep.subr.mxu0 0.0
      %1784 = vmatpush1.msra.mxu0 0.0
      %1785 = vmatprep.subr.mxu0 0.0
      %1786 = vmatpush1.msra.mxu0 0.0
      %1787 = vmatprep.subr.mxu0 0.0
      %1788 = vmatpush1.msra.mxu0 0.0
      %1789 = vmatprep.subr.mxu0 0.0
      %1790 = vmatpush1.msra.mxu0 0.0
      %1791 = vmatprep.subr.mxu0 0.0
      %1792 = vmatpush1.msra.mxu0 0.0
      %1793 = vmatprep.subr.mxu0 0.0
      %1794 = vmatpush1.msra.mxu0 0.0
      %1795 = vmatprep.subr.mxu0 0.0
      %1796 = vmatpush1.msra.mxu0 0.0
      %1797 = vmatprep.subr.mxu0 0.0
      %1798 = vmatpush1.msra.mxu0 0.0
      %1799 = vmatprep.subr.mxu0 0.0
      %1800 = vmatpush1.msra.mxu0 0.0
      %1801 = vmatprep.subr.mxu0 0.0
      %1802 = vmatpush1.msra.mxu0 0.0
      %1803 = vmatprep.subr.mxu0 0.0
      %1804 = vmatpush1.msra.mxu0 0.0
      %1805 = vmatprep.subr.mxu0 0.0
      %1806 = vmatpush1.msra.mxu0 0.0
      %1807 = vmatprep.subr.mxu0 0.0
      %1808 = vmatpush1.msra.mxu0 0.0
      %1809 = vmatprep.subr.mxu0 0.0
      %1810 = vmatpush1.msra.mxu0 0.0
      %1811 = vmatprep.subr.mxu0 0.0
      %1812 = vmatpush1.msra.mxu0 0.0
      %1813 = vmatprep.subr.mxu0 0.0
      %1814 = vmatpush1.msra.mxu0 0.0
      %1815 = vmatprep.mubr.f32.mxu0 0.0
      %1816 = vmatmul.mubr.f32.gmra.mrb[0].mxu0 %v1713
      %v1817 = vpop.f32.mrb[0].mxu0
      %v1818 = vadd.f32 0.0, %v1817
      %v1819 = vpop.f32.mrb[0].mxu0
      %1820 = vmatprep.mubr.f32.mxu0 0.0
      %1821 = vmatmul.mubr.f32.gmra.mrb[0].mxu0 %v1716
      %v1822 = vpop.f32.mrb[0].mxu0
      %v1823 = vadd.f32 0.0, %v1822
      %v1824 = vpop.f32.mrb[0].mxu0
      %1825 = vmatprep.mubr.f32.mxu0 0.0
      %1826 = vmatmul.mubr.f32.gmra.mrb[0].mxu0 %v1719
      %v1827 = vpop.f32.mrb[0].mxu0
      %v1828 = vadd.f32 0.0, %v1827
      %v1829 = vpop.f32.mrb[0].mxu0
      %1830 = vmatprep.mubr.f32.mxu0 0.0
      %1831 = vmatmul.mubr.f32.gmra.mrb[0].mxu0 %v1722
      %v1832 = vpop.f32.mrb[0].mxu0
      %v1833 = vadd.f32 0.0, %v1832
      %v1834 = vpop.f32.mrb[0].mxu0
      %1835 = vmatprep.mubr.f32.mxu0 0.0
      %1836 = vmatmul.mubr.f32.gmra.mrb[0].mxu0 %v1725
      %v1837 = vpop.f32.mrb[0].mxu0
      %v1838 = vadd.f32 0.0, %v1837
      %v1839 = vpop.f32.mrb[0].mxu0
      %1840 = vmatprep.mubr.f32.mxu0 0.0
      %1841 = vmatmul.mubr.f32.gmra.mrb[0].mxu0 %v1728
      %v1842 = vpop.f32.mrb[0].mxu0
      %v1843 = vadd.f32 0.0, %v1842
      %v1844 = vpop.f32.mrb[0].mxu0
      %1845 = vmatprep.mubr.f32.mxu0 0.0
      %1846 = vmatmul.mubr.f32.gmra.mrb[0].mxu0 %v1731
      %v1847 = vpop.f32.mrb[0].mxu0
      %v1848 = vadd.f32 0.0, %v1847
      %v1849 = vpop.f32.mrb[0].mxu0
      %1850 = vmatprep.mubr.f32.mxu0 0.0
      %1851 = vmatmul.mubr.f32.gmra.mrb[0].mxu0 %v1734
      %v1852 = vpop.f32.mrb[0].mxu0
      %v1853 = vadd.f32 0.0, %v1852
      %v1854 = vpop.f32.mrb[0].mxu0
      %1855 = vmatprep.mubr.f32.mxu0 0.0
      %1856 = vmatmul.mubr.f32.gmra.mrb[0].mxu0 %v1737
      %v1857 = vpop.f32.mrb[0].mxu0
      %v1858 = vadd.f32 0.0, %v1857
      %v1859 = vpop.f32.mrb[0].mxu0
      %1860 = vmatprep.mubr.f32.mxu0 0.0
      %1861 = vmatmul.mubr.f32.gmra.mrb[0].mxu0 %v1740
      %v1862 = vpop.f32.mrb[0].mxu0
      %v1863 = vadd.f32 0.0, %v1862
      %v1864 = vpop.f32.mrb[0].mxu0
      %1865 = vmatprep.mubr.f32.mxu0 0.0
      %1866 = vmatmul.mubr.f32.gmra.mrb[0].mxu0 %v1743
      %v1867 = vpop.f32.mrb[0].mxu0
      %v1868 = vadd.f32 0.0, %v1867
      %v1869 = vpop.f32.mrb[0].mxu0
      %1870 = vmatprep.mubr.f32.mxu0 0.0
      %1871 = vmatmul.mubr.f32.gmra.mrb[0].mxu0 %v1746
      %v1872 = vpop.f32.mrb[0].mxu0
      %v1873 = vadd.f32 0.0, %v1872
      %v1874 = vpop.f32.mrb[0].mxu0
      %1875 = vmatprep.mubr.f32.mxu0 0.0
      %1876 = vmatmul.mubr.f32.gmra.mrb[0].mxu0 %v1749
      %v1877 = vpop.f32.mrb[0].mxu0
      %v1878 = vadd.f32 0.0, %v1877
      %v1879 = vpop.f32.mrb[0].mxu0
      %1880 = vdwg.mxu0
      %v1881 = vadd.f32 %v1683, %v1818
      %v1882 = vadd.f32 %v1684, %v1823
      %v1883 = vadd.f32 %v1685, %v1828
      %v1884 = vadd.f32 %v1686, %v1833
      %v1885 = vadd.f32 %v1687, %v1838
      %v1886 = vadd.f32 %v1688, %v1843
      %v1887 = vadd.f32 %v1689, %v1848
      %v1888 = vadd.f32 %v1690, %v1853
      %v1889 = vadd.f32 %v1691, %v1858
      %v1890 = vadd.f32 %v1692, %v1863
      %v1891 = vadd.f32 %v1693, %v1868
      %v1892 = vadd.f32 %v1694, %v1873
      %v1893 = vadd.f32 %v1695, %v1878
      %v1894 = vld [vmem:[#allocation2 + $0x1a] sm:$0xff]
      %v1895 = vld [vmem:[#allocation2 + $0x22] sm:$0xff]
      %v1896 = vld [vmem:[#allocation2 + $0x2a] sm:$0xff]
      %v1897 = vld [vmem:[#allocation2 + $0x32] sm:$0xff]
      %v1898 = vld [vmem:[#allocation2 + $0x3a] sm:$0xff]
      %v1899 = vld [vmem:[#allocation2 + $0x42] sm:$0xff]
      %v1900 = vld [vmem:[#allocation2 + $0x4a] sm:$0xff]
      %v1901 = vld [vmem:[#allocation2 + $0x52] sm:$0xff]
      %v1902 = vld [vmem:[#allocation2 + $0x5a] sm:$0xff]
      %v1903 = vld [vmem:[#allocation2 + $0x62] sm:$0xff]
      %v1904 = vld [vmem:[#allocation2 + $0x6a] sm:$0xff]
      %v1905 = vld [vmem:[#allocation2 + $0x72] sm:$0xff]
      %v1906 = vld [vmem:[#allocation2 + $0x7a] sm:$0xff]
      %s1907 = scalar_lea.vmem %s4, 112
      %v1908 = vld [vmem:[%s1907] sm:$0xff]
      %v1909 = vld [vmem:[%s1907 + $0x8] sm:$0xff]
      %v1911 = vsel %vm360, %v1894, 0
      %v1914 = vsel %vm360, %v1895, 0
      %v1917 = vsel %vm360, %v1896, 0
      %v1920 = vsel %vm360, %v1897, 0
      %v1923 = vsel %vm360, %v1898, 0
      %v1926 = vsel %vm360, %v1899, 0
      %v1929 = vsel %vm360, %v1900, 0
      %v1932 = vsel %vm360, %v1901, 0
      %v1935 = vsel %vm360, %v1902, 0
      %v1938 = vsel %vm360, %v1903, 0
      %v1941 = vsel %vm360, %v1904, 0
      %v1944 = vsel %vm360, %v1905, 0
      %v1947 = vsel %vm360, %v1906, 0
      %1949 = vmatprep.subr.mxu0 0.0
      %1950 = vmatpush1.msra.mxu0 %v1908
      %1951 = vmatprep.subr.mxu0 0.0
      %1952 = vmatpush1.msra.mxu0 %v1909
      %1953 = vmatprep.subr.mxu0 0.0
      %1954 = vmatpush1.msra.mxu0 0.0
      %1955 = vmatprep.subr.mxu0 0.0
      %1956 = vmatpush1.msra.mxu0 0.0
      %1957 = vmatprep.subr.mxu0 0.0
      %1958 = vmatpush1.msra.mxu0 0.0
      %1959 = vmatprep.subr.mxu0 0.0
      %1960 = vmatpush1.msra.mxu0 0.0
      %1961 = vmatprep.subr.mxu0 0.0
      %1962 = vmatpush1.msra.mxu0 0.0
      %1963 = vmatprep.subr.mxu0 0.0
      %1964 = vmatpush1.msra.mxu0 0.0
      %1965 = vmatprep.subr.mxu0 0.0
      %1966 = vmatpush1.msra.mxu0 0.0
      %1967 = vmatprep.subr.mxu0 0.0
      %1968 = vmatpush1.msra.mxu0 0.0
      %1969 = vmatprep.subr.mxu0 0.0
      %1970 = vmatpush1.msra.mxu0 0.0
      %1971 = vmatprep.subr.mxu0 0.0
      %1972 = vmatpush1.msra.mxu0 0.0
      %1973 = vmatprep.subr.mxu0 0.0
      %1974 = vmatpush1.msra.mxu0 0.0
      %1975 = vmatprep.subr.mxu0 0.0
      %1976 = vmatpush1.msra.mxu0 0.0
      %1977 = vmatprep.subr.mxu0 0.0
      %1978 = vmatpush1.msra.mxu0 0.0
      %1979 = vmatprep.subr.mxu0 0.0
      %1980 = vmatpush1.msra.mxu0 0.0
      %1981 = vmatprep.subr.mxu0 0.0
      %1982 = vmatpush1.msra.mxu0 0.0
      %1983 = vmatprep.subr.mxu0 0.0
      %1984 = vmatpush1.msra.mxu0 0.0
      %1985 = vmatprep.subr.mxu0 0.0
      %1986 = vmatpush1.msra.mxu0 0.0
      %1987 = vmatprep.subr.mxu0 0.0
      %1988 = vmatpush1.msra.mxu0 0.0
      %1989 = vmatprep.subr.mxu0 0.0
      %1990 = vmatpush1.msra.mxu0 0.0
      %1991 = vmatprep.subr.mxu0 0.0
      %1992 = vmatpush1.msra.mxu0 0.0
      %1993 = vmatprep.subr.mxu0 0.0
      %1994 = vmatpush1.msra.mxu0 0.0
      %1995 = vmatprep.subr.mxu0 0.0
      %1996 = vmatpush1.msra.mxu0 0.0
      %1997 = vmatprep.subr.mxu0 0.0
      %1998 = vmatpush1.msra.mxu0 0.0
      %1999 = vmatprep.subr.mxu0 0.0
      %2000 = vmatpush1.msra.mxu0 0.0
      %2001 = vmatprep.subr.mxu0 0.0
      %2002 = vmatpush1.msra.mxu0 0.0
      %2003 = vmatprep.subr.mxu0 0.0
      %2004 = vmatpush1.msra.mxu0 0.0
      %2005 = vmatprep.subr.mxu0 0.0
      %2006 = vmatpush1.msra.mxu0 0.0
      %2007 = vmatprep.subr.mxu0 0.0
      %2008 = vmatpush1.msra.mxu0 0.0
      %2009 = vmatprep.subr.mxu0 0.0
      %2010 = vmatpush1.msra.mxu0 0.0
      %2011 = vmatprep.subr.mxu0 0.0
      %2012 = vmatpush1.msra.mxu0 0.0
      %2013 = vmatprep.mubr.f32.mxu0 0.0
      %2014 = vmatmul.mubr.f32.gmra.mrb[0].mxu0 %v1911
      %v2015 = vpop.f32.mrb[0].mxu0
      %v2016 = vadd.f32 0.0, %v2015
      %v2017 = vpop.f32.mrb[0].mxu0
      %2018 = vmatprep.mubr.f32.mxu0 0.0
      %2019 = vmatmul.mubr.f32.gmra.mrb[0].mxu0 %v1914
      %v2020 = vpop.f32.mrb[0].mxu0
      %v2021 = vadd.f32 0.0, %v2020
      %v2022 = vpop.f32.mrb[0].mxu0
      %2023 = vmatprep.mubr.f32.mxu0 0.0
      %2024 = vmatmul.mubr.f32.gmra.mrb[0].mxu0 %v1917
      %v2025 = vpop.f32.mrb[0].mxu0
      %v2026 = vadd.f32 0.0, %v2025
      %v2027 = vpop.f32.mrb[0].mxu0
      %2028 = vmatprep.mubr.f32.mxu0 0.0
      %2029 = vmatmul.mubr.f32.gmra.mrb[0].mxu0 %v1920
      %v2030 = vpop.f32.mrb[0].mxu0
      %v2031 = vadd.f32 0.0, %v2030
      %v2032 = vpop.f32.mrb[0].mxu0
      %2033 = vmatprep.mubr.f32.mxu0 0.0
      %2034 = vmatmul.mubr.f32.gmra.mrb[0].mxu0 %v1923
      %v2035 = vpop.f32.mrb[0].mxu0
      %v2036 = vadd.f32 0.0, %v2035
      %v2037 = vpop.f32.mrb[0].mxu0
      %2038 = vmatprep.mubr.f32.mxu0 0.0
      %2039 = vmatmul.mubr.f32.gmra.mrb[0].mxu0 %v1926
      %v2040 = vpop.f32.mrb[0].mxu0
      %v2041 = vadd.f32 0.0, %v2040
      %v2042 = vpop.f32.mrb[0].mxu0
      %2043 = vmatprep.mubr.f32.mxu0 0.0
      %2044 = vmatmul.mubr.f32.gmra.mrb[0].mxu0 %v1929
      %v2045 = vpop.f32.mrb[0].mxu0
      %v2046 = vadd.f32 0.0, %v2045
      %v2047 = vpop.f32.mrb[0].mxu0
      %2048 = vmatprep.mubr.f32.mxu0 0.0
      %2049 = vmatmul.mubr.f32.gmra.mrb[0].mxu0 %v1932
      %v2050 = vpop.f32.mrb[0].mxu0
      %v2051 = vadd.f32 0.0, %v2050
      %v2052 = vpop.f32.mrb[0].mxu0
      %2053 = vmatprep.mubr.f32.mxu0 0.0
      %2054 = vmatmul.mubr.f32.gmra.mrb[0].mxu0 %v1935
      %v2055 = vpop.f32.mrb[0].mxu0
      %v2056 = vadd.f32 0.0, %v2055
      %v2057 = vpop.f32.mrb[0].mxu0
      %2058 = vmatprep.mubr.f32.mxu0 0.0
      %2059 = vmatmul.mubr.f32.gmra.mrb[0].mxu0 %v1938
      %v2060 = vpop.f32.mrb[0].mxu0
      %v2061 = vadd.f32 0.0, %v2060
      %v2062 = vpop.f32.mrb[0].mxu0
      %2063 = vmatprep.mubr.f32.mxu0 0.0
      %2064 = vmatmul.mubr.f32.gmra.mrb[0].mxu0 %v1941
      %v2065 = vpop.f32.mrb[0].mxu0
      %v2066 = vadd.f32 0.0, %v2065
      %v2067 = vpop.f32.mrb[0].mxu0
      %2068 = vmatprep.mubr.f32.mxu0 0.0
      %2069 = vmatmul.mubr.f32.gmra.mrb[0].mxu0 %v1944
      %v2070 = vpop.f32.mrb[0].mxu0
      %v2071 = vadd.f32 0.0, %v2070
      %v2072 = vpop.f32.mrb[0].mxu0
      %2073 = vmatprep.mubr.f32.mxu0 0.0
      %2074 = vmatmul.mubr.f32.gmra.mrb[0].mxu0 %v1947
      %v2075 = vpop.f32.mrb[0].mxu0
      %v2076 = vadd.f32 0.0, %v2075
      %v2077 = vpop.f32.mrb[0].mxu0
      %2078 = vdwg.mxu0
      %v2079 = vadd.f32 %v1881, %v2016
      %v2080 = vadd.f32 %v1882, %v2021
      %v2081 = vadd.f32 %v1883, %v2026
      %v2082 = vadd.f32 %v1884, %v2031
      %v2083 = vadd.f32 %v1885, %v2036
      %v2084 = vadd.f32 %v1886, %v2041
      %v2085 = vadd.f32 %v1887, %v2046
      %v2086 = vadd.f32 %v1888, %v2051
      %v2087 = vadd.f32 %v1889, %v2056
      %v2088 = vadd.f32 %v1890, %v2061
      %v2089 = vadd.f32 %v1891, %v2066
      %v2090 = vadd.f32 %v1892, %v2071
      %v2091 = vadd.f32 %v1893, %v2076
      %v2092 = vld [vmem:[#allocation2 + $0x1b] sm:$0xff]
      %v2093 = vld [vmem:[#allocation2 + $0x23] sm:$0xff]
      %v2094 = vld [vmem:[#allocation2 + $0x2b] sm:$0xff]
      %v2095 = vld [vmem:[#allocation2 + $0x33] sm:$0xff]
      %v2096 = vld [vmem:[#allocation2 + $0x3b] sm:$0xff]
      %v2097 = vld [vmem:[#allocation2 + $0x43] sm:$0xff]
      %v2098 = vld [vmem:[#allocation2 + $0x4b] sm:$0xff]
      %v2099 = vld [vmem:[#allocation2 + $0x53] sm:$0xff]
      %v2100 = vld [vmem:[#allocation2 + $0x5b] sm:$0xff]
      %v2101 = vld [vmem:[#allocation2 + $0x63] sm:$0xff]
      %v2102 = vld [vmem:[#allocation2 + $0x6b] sm:$0xff]
      %v2103 = vld [vmem:[#allocation2 + $0x73] sm:$0xff]
      %v2104 = vld [vmem:[#allocation2 + $0x7b] sm:$0xff]
      %s2105 = scalar_lea.vmem %s4, 128
      %v2106 = vld [vmem:[%s2105] sm:$0xff]
      %v2107 = vld [vmem:[%s2105 + $0x8] sm:$0xff]
      %v2109 = vsel %vm360, %v2092, 0
      %v2112 = vsel %vm360, %v2093, 0
      %v2115 = vsel %vm360, %v2094, 0
      %v2118 = vsel %vm360, %v2095, 0
      %v2121 = vsel %vm360, %v2096, 0
      %v2124 = vsel %vm360, %v2097, 0
      %v2127 = vsel %vm360, %v2098, 0
      %v2130 = vsel %vm360, %v2099, 0
      %v2133 = vsel %vm360, %v2100, 0
      %v2136 = vsel %vm360, %v2101, 0
      %v2139 = vsel %vm360, %v2102, 0
      %v2142 = vsel %vm360, %v2103, 0
      %v2145 = vsel %vm360, %v2104, 0
      %2147 = vmatprep.subr.mxu0 0.0
      %2148 = vmatpush1.msra.mxu0 %v2106
      %2149 = vmatprep.subr.mxu0 0.0
      %2150 = vmatpush1.msra.mxu0 %v2107
      %2151 = vmatprep.subr.mxu0 0.0
      %2152 = vmatpush1.msra.mxu0 0.0
      %2153 = vmatprep.subr.mxu0 0.0
      %2154 = vmatpush1.msra.mxu0 0.0
      %2155 = vmatprep.subr.mxu0 0.0
      %2156 = vmatpush1.msra.mxu0 0.0
      %2157 = vmatprep.subr.mxu0 0.0
      %2158 = vmatpush1.msra.mxu0 0.0
      %2159 = vmatprep.subr.mxu0 0.0
      %2160 = vmatpush1.msra.mxu0 0.0
      %2161 = vmatprep.subr.mxu0 0.0
      %2162 = vmatpush1.msra.mxu0 0.0
      %2163 = vmatprep.subr.mxu0 0.0
      %2164 = vmatpush1.msra.mxu0 0.0
      %2165 = vmatprep.subr.mxu0 0.0
      %2166 = vmatpush1.msra.mxu0 0.0
      %2167 = vmatprep.subr.mxu0 0.0
      %2168 = vmatpush1.msra.mxu0 0.0
      %2169 = vmatprep.subr.mxu0 0.0
      %2170 = vmatpush1.msra.mxu0 0.0
      %2171 = vmatprep.subr.mxu0 0.0
      %2172 = vmatpush1.msra.mxu0 0.0
      %2173 = vmatprep.subr.mxu0 0.0
      %2174 = vmatpush1.msra.mxu0 0.0
      %2175 = vmatprep.subr.mxu0 0.0
      %2176 = vmatpush1.msra.mxu0 0.0
      %2177 = vmatprep.subr.mxu0 0.0
      %2178 = vmatpush1.msra.mxu0 0.0
      %2179 = vmatprep.subr.mxu0 0.0
      %2180 = vmatpush1.msra.mxu0 0.0
      %2181 = vmatprep.subr.mxu0 0.0
      %2182 = vmatpush1.msra.mxu0 0.0
      %2183 = vmatprep.subr.mxu0 0.0
      %2184 = vmatpush1.msra.mxu0 0.0
      %2185 = vmatprep.subr.mxu0 0.0
      %2186 = vmatpush1.msra.mxu0 0.0
      %2187 = vmatprep.subr.mxu0 0.0
      %2188 = vmatpush1.msra.mxu0 0.0
      %2189 = vmatprep.subr.mxu0 0.0
      %2190 = vmatpush1.msra.mxu0 0.0
      %2191 = vmatprep.subr.mxu0 0.0
      %2192 = vmatpush1.msra.mxu0 0.0
      %2193 = vmatprep.subr.mxu0 0.0
      %2194 = vmatpush1.msra.mxu0 0.0
      %2195 = vmatprep.subr.mxu0 0.0
      %2196 = vmatpush1.msra.mxu0 0.0
      %2197 = vmatprep.subr.mxu0 0.0
      %2198 = vmatpush1.msra.mxu0 0.0
      %2199 = vmatprep.subr.mxu0 0.0
      %2200 = vmatpush1.msra.mxu0 0.0
      %2201 = vmatprep.subr.mxu0 0.0
      %2202 = vmatpush1.msra.mxu0 0.0
      %2203 = vmatprep.subr.mxu0 0.0
      %2204 = vmatpush1.msra.mxu0 0.0
      %2205 = vmatprep.subr.mxu0 0.0
      %2206 = vmatpush1.msra.mxu0 0.0
      %2207 = vmatprep.subr.mxu0 0.0
      %2208 = vmatpush1.msra.mxu0 0.0
      %2209 = vmatprep.subr.mxu0 0.0
      %2210 = vmatpush1.msra.mxu0 0.0
      %2211 = vmatprep.mubr.f32.mxu0 0.0
      %2212 = vmatmul.mubr.f32.gmra.mrb[0].mxu0 %v2109
      %v2213 = vpop.f32.mrb[0].mxu0
      %v2214 = vadd.f32 0.0, %v2213
      %v2215 = vpop.f32.mrb[0].mxu0
      %2216 = vmatprep.mubr.f32.mxu0 0.0
      %2217 = vmatmul.mubr.f32.gmra.mrb[0].mxu0 %v2112
      %v2218 = vpop.f32.mrb[0].mxu0
      %v2219 = vadd.f32 0.0, %v2218
      %v2220 = vpop.f32.mrb[0].mxu0
      %2221 = vmatprep.mubr.f32.mxu0 0.0
      %2222 = vmatmul.mubr.f32.gmra.mrb[0].mxu0 %v2115
      %v2223 = vpop.f32.mrb[0].mxu0
      %v2224 = vadd.f32 0.0, %v2223
      %v2225 = vpop.f32.mrb[0].mxu0
      %2226 = vmatprep.mubr.f32.mxu0 0.0
      %2227 = vmatmul.mubr.f32.gmra.mrb[0].mxu0 %v2118
      %v2228 = vpop.f32.mrb[0].mxu0
      %v2229 = vadd.f32 0.0, %v2228
      %v2230 = vpop.f32.mrb[0].mxu0
      %2231 = vmatprep.mubr.f32.mxu0 0.0
      %2232 = vmatmul.mubr.f32.gmra.mrb[0].mxu0 %v2121
      %v2233 = vpop.f32.mrb[0].mxu0
      %v2234 = vadd.f32 0.0, %v2233
      %v2235 = vpop.f32.mrb[0].mxu0
      %2236 = vmatprep.mubr.f32.mxu0 0.0
      %2237 = vmatmul.mubr.f32.gmra.mrb[0].mxu0 %v2124
      %v2238 = vpop.f32.mrb[0].mxu0
      %v2239 = vadd.f32 0.0, %v2238
      %v2240 = vpop.f32.mrb[0].mxu0
      %2241 = vmatprep.mubr.f32.mxu0 0.0
      %2242 = vmatmul.mubr.f32.gmra.mrb[0].mxu0 %v2127
      %v2243 = vpop.f32.mrb[0].mxu0
      %v2244 = vadd.f32 0.0, %v2243
      %v2245 = vpop.f32.mrb[0].mxu0
      %2246 = vmatprep.mubr.f32.mxu0 0.0
      %2247 = vmatmul.mubr.f32.gmra.mrb[0].mxu0 %v2130
      %v2248 = vpop.f32.mrb[0].mxu0
      %v2249 = vadd.f32 0.0, %v2248
      %v2250 = vpop.f32.mrb[0].mxu0
      %2251 = vmatprep.mubr.f32.mxu0 0.0
      %2252 = vmatmul.mubr.f32.gmra.mrb[0].mxu0 %v2133
      %v2253 = vpop.f32.mrb[0].mxu0
      %v2254 = vadd.f32 0.0, %v2253
      %v2255 = vpop.f32.mrb[0].mxu0
      %2256 = vmatprep.mubr.f32.mxu0 0.0
      %2257 = vmatmul.mubr.f32.gmra.mrb[0].mxu0 %v2136
      %v2258 = vpop.f32.mrb[0].mxu0
      %v2259 = vadd.f32 0.0, %v2258
      %v2260 = vpop.f32.mrb[0].mxu0
      %2261 = vmatprep.mubr.f32.mxu0 0.0
      %2262 = vmatmul.mubr.f32.gmra.mrb[0].mxu0 %v2139
      %v2263 = vpop.f32.mrb[0].mxu0
      %v2264 = vadd.f32 0.0, %v2263
      %v2265 = vpop.f32.mrb[0].mxu0
      %2266 = vmatprep.mubr.f32.mxu0 0.0
      %2267 = vmatmul.mubr.f32.gmra.mrb[0].mxu0 %v2142
      %v2268 = vpop.f32.mrb[0].mxu0
      %v2269 = vadd.f32 0.0, %v2268
      %v2270 = vpop.f32.mrb[0].mxu0
      %2271 = vmatprep.mubr.f32.mxu0 0.0
      %2272 = vmatmul.mubr.f32.gmra.mrb[0].mxu0 %v2145
      %v2273 = vpop.f32.mrb[0].mxu0
      %v2274 = vadd.f32 0.0, %v2273
      %v2275 = vpop.f32.mrb[0].mxu0
      %2276 = vdwg.mxu0
      %v2277 = vadd.f32 %v2079, %v2214
      %v2278 = vadd.f32 %v2080, %v2219
      %v2279 = vadd.f32 %v2081, %v2224
      %v2280 = vadd.f32 %v2082, %v2229
      %v2281 = vadd.f32 %v2083, %v2234
      %v2282 = vadd.f32 %v2084, %v2239
      %v2283 = vadd.f32 %v2085, %v2244
      %v2284 = vadd.f32 %v2086, %v2249
      %v2285 = vadd.f32 %v2087, %v2254
      %v2286 = vadd.f32 %v2088, %v2259
      %v2287 = vadd.f32 %v2089, %v2264
      %v2288 = vadd.f32 %v2090, %v2269
      %v2289 = vadd.f32 %v2091, %v2274
      %v2290 = vld [vmem:[%s5] sm:$0x1]
      %v2292 = vlaneseq
      %v2293 = vshrl.u32 %v2292, 7
      %v2294 = vsub.s32 0, %v2293
      %v2295 = vrot.slane %v2290, %v2294
      %v2297 = vadd.f32 %v2277, %v2295
      %v2298 = vadd.f32 %v2278, %v2295
      %v2299 = vadd.f32 %v2279, %v2295
      %v2300 = vadd.f32 %v2280, %v2295
      %v2301 = vadd.f32 %v2281, %v2295
      %v2302 = vadd.f32 %v2282, %v2295
      %v2303 = vadd.f32 %v2283, %v2295
      %v2304 = vadd.f32 %v2284, %v2295
      %v2305 = vadd.f32 %v2285, %v2295
      %v2306 = vadd.f32 %v2286, %v2295
      %v2307 = vadd.f32 %v2287, %v2295
      %v2308 = vadd.f32 %v2288, %v2295
      %v2309 = vadd.f32 %v2289, %v2295
      %v2310 = vld [vmem:[%s6] sm:$0x1]
      %v2312 = vlaneseq
      %v2313 = vshrl.u32 %v2312, 7
      %v2314 = vsub.s32 0, %v2313
      %v2315 = vrot.slane %v2310, %v2314
      %v2317 = vmul.f32 %v2297, %v2315
      %v2318 = vmul.f32 %v2298, %v2315
      %v2319 = vmul.f32 %v2299, %v2315
      %v2320 = vmul.f32 %v2300, %v2315
      %v2321 = vmul.f32 %v2301, %v2315
      %v2322 = vmul.f32 %v2302, %v2315
      %v2323 = vmul.f32 %v2303, %v2315
      %v2324 = vmul.f32 %v2304, %v2315
      %v2325 = vmul.f32 %v2305, %v2315
      %v2326 = vmul.f32 %v2306, %v2315
      %v2327 = vmul.f32 %v2307, %v2315
      %v2328 = vmul.f32 %v2308, %v2315
      %v2329 = vmul.f32 %v2309, %v2315
      %v2330 = vld [vmem:[%s7] sm:$0x1]
      %v2332 = vlaneseq
      %v2333 = vshrl.u32 %v2332, 7
      %v2334 = vsub.s32 0, %v2333
      %v2335 = vrot.slane %v2330, %v2334
      %v2337 = vadd.f32 %v2317, %v2335
      %v2338 = vadd.f32 %v2318, %v2335
      %v2339 = vadd.f32 %v2319, %v2335
      %v2340 = vadd.f32 %v2320, %v2335
      %v2341 = vadd.f32 %v2321, %v2335
      %v2342 = vadd.f32 %v2322, %v2335
      %v2343 = vadd.f32 %v2323, %v2335
      %v2344 = vadd.f32 %v2324, %v2335
      %v2345 = vadd.f32 %v2325, %v2335
      %v2346 = vadd.f32 %v2326, %v2335
      %v2347 = vadd.f32 %v2327, %v2335
      %v2348 = vadd.f32 %v2328, %v2335
      %v2349 = vadd.f32 %v2329, %v2335
      %v2350 = vmax.f32 %v2337, 0.0
      %v2351 = vmax.f32 %v2338, 0.0
      %v2352 = vmax.f32 %v2339, 0.0
      %v2353 = vmax.f32 %v2340, 0.0
      %v2354 = vmax.f32 %v2341, 0.0
      %v2355 = vmax.f32 %v2342, 0.0
      %v2356 = vmax.f32 %v2343, 0.0
      %v2357 = vmax.f32 %v2344, 0.0
      %v2358 = vmax.f32 %v2345, 0.0
      %v2359 = vmax.f32 %v2346, 0.0
      %v2360 = vmax.f32 %v2347, 0.0
      %v2361 = vmax.f32 %v2348, 0.0
      %v2362 = vmax.f32 %v2349, 0.0
      %v2363 = vmul.f32 %v2350, %v447
      %v2364 = vmul.f32 %v2351, %v452
      %v2365 = vmul.f32 %v2352, %v457
      %v2366 = vmul.f32 %v2353, %v462
      %v2367 = vmul.f32 %v2354, %v467
      %v2368 = vmul.f32 %v2355, %v472
      %v2369 = vmul.f32 %v2356, %v477
      %v2370 = vmul.f32 %v2357, %v482
      %v2371 = vmul.f32 %v2358, %v487
      %v2372 = vmul.f32 %v2359, %v492
      %v2373 = vmul.f32 %v2360, %v497
      %v2374 = vmul.f32 %v2361, %v502
      %v2375 = vmul.f32 %v2362, %v507
      %2376 = vst.msk [vmem:[#allocation2 + $0x10] sm:$0xff] %vm360, %v2363
      %2377 = vst.msk [vmem:[#allocation2 + $0x18] sm:$0xff] %vm360, %v2364
      %2378 = vst.msk [vmem:[#allocation2 + $0x20] sm:$0xff] %vm360, %v2365
      %2379 = vst.msk [vmem:[#allocation2 + $0x28] sm:$0xff] %vm360, %v2366
      %2380 = vst.msk [vmem:[#allocation2 + $0x30] sm:$0xff] %vm360, %v2367
      %2381 = vst.msk [vmem:[#allocation2 + $0x38] sm:$0xff] %vm360, %v2368
      %2382 = vst.msk [vmem:[#allocation2 + $0x40] sm:$0xff] %vm360, %v2369
      %2383 = vst.msk [vmem:[#allocation2 + $0x48] sm:$0xff] %vm360, %v2370
      %2384 = vst.msk [vmem:[#allocation2 + $0x50] sm:$0xff] %vm360, %v2371
      %2385 = vst.msk [vmem:[#allocation2 + $0x58] sm:$0xff] %vm360, %v2372
      %2386 = vst.msk [vmem:[#allocation2 + $0x60] sm:$0xff] %vm360, %v2373
      %2387 = vst.msk [vmem:[#allocation2 + $0x68] sm:$0xff] %vm360, %v2374
      %2388 = vst.msk [vmem:[#allocation2 + $0x70] sm:$0xff] %vm360, %v2375
      %v2389 = vld [vmem:[#allocation2 + $0x5] sm:$0xff]
      %v2390 = vld [vmem:[#allocation2 + $0xd] sm:$0xff]
      %v2391 = vld [vmem:[#allocation2 + $0x15] sm:$0xff]
      %v2392 = vld [vmem:[#allocation2 + $0x1d] sm:$0xff]
      %v2393 = vld [vmem:[#allocation2 + $0x25] sm:$0xff]
      %v2394 = vld [vmem:[#allocation2 + $0x2d] sm:$0xff]
      %v2395 = vld [vmem:[#allocation2 + $0x35] sm:$0xff]
      %v2396 = vld [vmem:[#allocation2 + $0x3d] sm:$0xff]
      %v2397 = vld [vmem:[#allocation2 + $0x45] sm:$0xff]
      %v2398 = vld [vmem:[#allocation2 + $0x4d] sm:$0xff]
      %v2399 = vld [vmem:[#allocation2 + $0x55] sm:$0xff]
      %v2400 = vld [vmem:[#allocation2 + $0x5d] sm:$0xff]
      %v2401 = vld [vmem:[#allocation2 + $0x65] sm:$0xff]
      %v2402 = vld [vmem:[%s8] sm:$0xff]
      %v2403 = vld [vmem:[%s8 + $0x8] sm:$0xff]
      %v2404 = vld [vmem:[#allocation2 + $0x6] sm:$0xff]
      %v2405 = vld [vmem:[#allocation2 + $0xe] sm:$0xff]
      %v2406 = vld [vmem:[#allocation2 + $0x16] sm:$0xff]
      %v2407 = vld [vmem:[#allocation2 + $0x1e] sm:$0xff]
      %v2408 = vld [vmem:[#allocation2 + $0x26] sm:$0xff]
      %v2409 = vld [vmem:[#allocation2 + $0x2e] sm:$0xff]
      %v2410 = vld [vmem:[#allocation2 + $0x36] sm:$0xff]
      %v2411 = vld [vmem:[#allocation2 + $0x3e] sm:$0xff]
      %v2412 = vld [vmem:[#allocation2 + $0x46] sm:$0xff]
      %v2413 = vld [vmem:[#allocation2 + $0x4e] sm:$0xff]
      %v2414 = vld [vmem:[#allocation2 + $0x56] sm:$0xff]
      %v2415 = vld [vmem:[#allocation2 + $0x5e] sm:$0xff]
      %v2416 = vld [vmem:[#allocation2 + $0x66] sm:$0xff]
      %s2417 = scalar_lea.vmem %s8, 16
      %v2418 = vld [vmem:[%s2417] sm:$0xff]
      %v2419 = vld [vmem:[%s2417 + $0x8] sm:$0xff]
      %v2421 = vsel %vm360, %v2404, 0
      %v2424 = vsel %vm360, %v2405, 0
      %v2427 = vsel %vm360, %v2406, 0
      %v2430 = vsel %vm360, %v2407, 0
      %v2433 = vsel %vm360, %v2408, 0
      %v2436 = vsel %vm360, %v2409, 0
      %v2439 = vsel %vm360, %v2410, 0
      %v2442 = vsel %vm360, %v2411, 0
      %v2445 = vsel %vm360, %v2412, 0
      %v2448 = vsel %vm360, %v2413, 0
      %v2451 = vsel %vm360, %v2414, 0
      %v2454 = vsel %vm360, %v2415, 0
      %v2457 = vsel %vm360, %v2416, 0
      %2459 = vmatprep.subr.mxu0 0.0
      %2460 = vmatpush1.msra.mxu0 %v2418
      %2461 = vmatprep.subr.mxu0 0.0
      %2462 = vmatpush1.msra.mxu0 %v2419
      %2463 = vmatprep.subr.mxu0 0.0
      %2464 = vmatpush1.msra.mxu0 0.0
      %2465 = vmatprep.subr.mxu0 0.0
      %2466 = vmatpush1.msra.mxu0 0.0
      %2467 = vmatprep.subr.mxu0 0.0
      %2468 = vmatpush1.msra.mxu0 0.0
      %2469 = vmatprep.subr.mxu0 0.0
      %2470 = vmatpush1.msra.mxu0 0.0
      %2471 = vmatprep.subr.mxu0 0.0
      %2472 = vmatpush1.msra.mxu0 0.0
      %2473 = vmatprep.subr.mxu0 0.0
      %2474 = vmatpush1.msra.mxu0 0.0
      %2475 = vmatprep.subr.mxu0 0.0
      %2476 = vmatpush1.msra.mxu0 0.0
      %2477 = vmatprep.subr.mxu0 0.0
      %2478 = vmatpush1.msra.mxu0 0.0
      %2479 = vmatprep.subr.mxu0 0.0
      %2480 = vmatpush1.msra.mxu0 0.0
      %2481 = vmatprep.subr.mxu0 0.0
      %2482 = vmatpush1.msra.mxu0 0.0
      %2483 = vmatprep.subr.mxu0 0.0
      %2484 = vmatpush1.msra.mxu0 0.0
      %2485 = vmatprep.subr.mxu0 0.0
      %2486 = vmatpush1.msra.mxu0 0.0
      %2487 = vmatprep.subr.mxu0 0.0
      %2488 = vmatpush1.msra.mxu0 0.0
      %2489 = vmatprep.subr.mxu0 0.0
      %2490 = vmatpush1.msra.mxu0 0.0
      %2491 = vmatprep.subr.mxu0 0.0
      %2492 = vmatpush1.msra.mxu0 0.0
      %2493 = vmatprep.subr.mxu0 0.0
      %2494 = vmatpush1.msra.mxu0 0.0
      %2495 = vmatprep.subr.mxu0 0.0
      %2496 = vmatpush1.msra.mxu0 0.0
      %2497 = vmatprep.subr.mxu0 0.0
      %2498 = vmatpush1.msra.mxu0 0.0
      %2499 = vmatprep.subr.mxu0 0.0
      %2500 = vmatpush1.msra.mxu0 0.0
      %2501 = vmatprep.subr.mxu0 0.0
      %2502 = vmatpush1.msra.mxu0 0.0
      %2503 = vmatprep.subr.mxu0 0.0
      %2504 = vmatpush1.msra.mxu0 0.0
      %2505 = vmatprep.subr.mxu0 0.0
      %2506 = vmatpush1.msra.mxu0 0.0
      %2507 = vmatprep.subr.mxu0 0.0
      %2508 = vmatpush1.msra.mxu0 0.0
      %2509 = vmatprep.subr.mxu0 0.0
      %2510 = vmatpush1.msra.mxu0 0.0
      %2511 = vmatprep.subr.mxu0 0.0
      %2512 = vmatpush1.msra.mxu0 0.0
      %2513 = vmatprep.subr.mxu0 0.0
      %2514 = vmatpush1.msra.mxu0 0.0
      %2515 = vmatprep.subr.mxu0 0.0
      %2516 = vmatpush1.msra.mxu0 0.0
      %2517 = vmatprep.subr.mxu0 0.0
      %2518 = vmatpush1.msra.mxu0 0.0
      %2519 = vmatprep.subr.mxu0 0.0
      %2520 = vmatpush1.msra.mxu0 0.0
      %2521 = vmatprep.subr.mxu0 0.0
      %2522 = vmatpush1.msra.mxu0 0.0
      %2523 = vmatprep.mubr.f32.mxu0 0.0
      %2524 = vmatmul.mubr.f32.gmra.mrb[0].mxu0 %v2421
      %v2525 = vpop.f32.mrb[0].mxu0
      %v2526 = vadd.f32 0.0, %v2525
      %v2527 = vpop.f32.mrb[0].mxu0
      %2528 = vmatprep.mubr.f32.mxu0 0.0
      %2529 = vmatmul.mubr.f32.gmra.mrb[0].mxu0 %v2424
      %v2530 = vpop.f32.mrb[0].mxu0
      %v2531 = vadd.f32 0.0, %v2530
      %v2532 = vpop.f32.mrb[0].mxu0
      %2533 = vmatprep.mubr.f32.mxu0 0.0
      %2534 = vmatmul.mubr.f32.gmra.mrb[0].mxu0 %v2427
      %v2535 = vpop.f32.mrb[0].mxu0
      %v2536 = vadd.f32 0.0, %v2535
      %v2537 = vpop.f32.mrb[0].mxu0
      %2538 = vmatprep.mubr.f32.mxu0 0.0
      %2539 = vmatmul.mubr.f32.gmra.mrb[0].mxu0 %v2430
      %v2540 = vpop.f32.mrb[0].mxu0
      %v2541 = vadd.f32 0.0, %v2540
      %v2542 = vpop.f32.mrb[0].mxu0
      %2543 = vmatprep.mubr.f32.mxu0 0.0
      %2544 = vmatmul.mubr.f32.gmra.mrb[0].mxu0 %v2433
      %v2545 = vpop.f32.mrb[0].mxu0
      %v2546 = vadd.f32 0.0, %v2545
      %v2547 = vpop.f32.mrb[0].mxu0
      %2548 = vmatprep.mubr.f32.mxu0 0.0
      %2549 = vmatmul.mubr.f32.gmra.mrb[0].mxu0 %v2436
      %v2550 = vpop.f32.mrb[0].mxu0
      %v2551 = vadd.f32 0.0, %v2550
      %v2552 = vpop.f32.mrb[0].mxu0
      %2553 = vmatprep.mubr.f32.mxu0 0.0
      %2554 = vmatmul.mubr.f32.gmra.mrb[0].mxu0 %v2439
      %v2555 = vpop.f32.mrb[0].mxu0
      %v2556 = vadd.f32 0.0, %v2555
      %v2557 = vpop.f32.mrb[0].mxu0
      %2558 = vmatprep.mubr.f32.mxu0 0.0
      %2559 = vmatmul.mubr.f32.gmra.mrb[0].mxu0 %v2442
      %v2560 = vpop.f32.mrb[0].mxu0
      %v2561 = vadd.f32 0.0, %v2560
      %v2562 = vpop.f32.mrb[0].mxu0
      %2563 = vmatprep.mubr.f32.mxu0 0.0
      %2564 = vmatmul.mubr.f32.gmra.mrb[0].mxu0 %v2445
      %v2565 = vpop.f32.mrb[0].mxu0
      %v2566 = vadd.f32 0.0, %v2565
      %v2567 = vpop.f32.mrb[0].mxu0
      %2568 = vmatprep.mubr.f32.mxu0 0.0
      %2569 = vmatmul.mubr.f32.gmra.mrb[0].mxu0 %v2448
      %v2570 = vpop.f32.mrb[0].mxu0
      %v2571 = vadd.f32 0.0, %v2570
      %v2572 = vpop.f32.mrb[0].mxu0
      %2573 = vmatprep.mubr.f32.mxu0 0.0
      %2574 = vmatmul.mubr.f32.gmra.mrb[0].mxu0 %v2451
      %v2575 = vpop.f32.mrb[0].mxu0
      %v2576 = vadd.f32 0.0, %v2575
      %v2577 = vpop.f32.mrb[0].mxu0
      %2578 = vmatprep.mubr.f32.mxu0 0.0
      %2579 = vmatmul.mubr.f32.gmra.mrb[0].mxu0 %v2454
      %v2580 = vpop.f32.mrb[0].mxu0
      %v2581 = vadd.f32 0.0, %v2580
      %v2582 = vpop.f32.mrb[0].mxu0
      %2583 = vmatprep.mubr.f32.mxu0 0.0
      %2584 = vmatmul.mubr.f32.gmra.mrb[0].mxu0 %v2457
      %v2585 = vpop.f32.mrb[0].mxu0
      %v2586 = vadd.f32 0.0, %v2585
      %v2587 = vpop.f32.mrb[0].mxu0
      %2588 = vdwg.mxu0
      %v2590 = vsel %vm360, %v2389, 0
      %v2593 = vsel %vm360, %v2390, 0
      %v2596 = vsel %vm360, %v2391, 0
      %v2599 = vsel %vm360, %v2392, 0
      %v2602 = vsel %vm360, %v2393, 0
      %v2605 = vsel %vm360, %v2394, 0
      %v2608 = vsel %vm360, %v2395, 0
      %v2611 = vsel %vm360, %v2396, 0
      %v2614 = vsel %vm360, %v2397, 0
      %v2617 = vsel %vm360, %v2398, 0
      %v2620 = vsel %vm360, %v2399, 0
      %v2623 = vsel %vm360, %v2400, 0
      %v2626 = vsel %vm360, %v2401, 0
      %2628 = vmatprep.subr.mxu0 0.0
      %2629 = vmatpush1.msra.mxu0 %v2402
      %2630 = vmatprep.subr.mxu0 0.0
      %2631 = vmatpush1.msra.mxu0 %v2403
      %2632 = vmatprep.subr.mxu0 0.0
      %2633 = vmatpush1.msra.mxu0 0.0
      %2634 = vmatprep.subr.mxu0 0.0
      %2635 = vmatpush1.msra.mxu0 0.0
      %2636 = vmatprep.subr.mxu0 0.0
      %2637 = vmatpush1.msra.mxu0 0.0
      %2638 = vmatprep.subr.mxu0 0.0
      %2639 = vmatpush1.msra.mxu0 0.0
      %2640 = vmatprep.subr.mxu0 0.0
      %2641 = vmatpush1.msra.mxu0 0.0
      %2642 = vmatprep.subr.mxu0 0.0
      %2643 = vmatpush1.msra.mxu0 0.0
      %2644 = vmatprep.subr.mxu0 0.0
      %2645 = vmatpush1.msra.mxu0 0.0
      %2646 = vmatprep.subr.mxu0 0.0
      %2647 = vmatpush1.msra.mxu0 0.0
      %2648 = vmatprep.subr.mxu0 0.0
      %2649 = vmatpush1.msra.mxu0 0.0
      %2650 = vmatprep.subr.mxu0 0.0
      %2651 = vmatpush1.msra.mxu0 0.0
      %2652 = vmatprep.subr.mxu0 0.0
      %2653 = vmatpush1.msra.mxu0 0.0
      %2654 = vmatprep.subr.mxu0 0.0
      %2655 = vmatpush1.msra.mxu0 0.0
      %2656 = vmatprep.subr.mxu0 0.0
      %2657 = vmatpush1.msra.mxu0 0.0
      %2658 = vmatprep.subr.mxu0 0.0
      %2659 = vmatpush1.msra.mxu0 0.0
      %2660 = vmatprep.subr.mxu0 0.0
      %2661 = vmatpush1.msra.mxu0 0.0
      %2662 = vmatprep.subr.mxu0 0.0
      %2663 = vmatpush1.msra.mxu0 0.0
      %2664 = vmatprep.subr.mxu0 0.0
      %2665 = vmatpush1.msra.mxu0 0.0
      %2666 = vmatprep.subr.mxu0 0.0
      %2667 = vmatpush1.msra.mxu0 0.0
      %2668 = vmatprep.subr.mxu0 0.0
      %2669 = vmatpush1.msra.mxu0 0.0
      %2670 = vmatprep.subr.mxu0 0.0
      %2671 = vmatpush1.msra.mxu0 0.0
      %2672 = vmatprep.subr.mxu0 0.0
      %2673 = vmatpush1.msra.mxu0 0.0
      %2674 = vmatprep.subr.mxu0 0.0
      %2675 = vmatpush1.msra.mxu0 0.0
      %2676 = vmatprep.subr.mxu0 0.0
      %2677 = vmatpush1.msra.mxu0 0.0
      %2678 = vmatprep.subr.mxu0 0.0
      %2679 = vmatpush1.msra.mxu0 0.0
      %2680 = vmatprep.subr.mxu0 0.0
      %2681 = vmatpush1.msra.mxu0 0.0
      %2682 = vmatprep.subr.mxu0 0.0
      %2683 = vmatpush1.msra.mxu0 0.0
      %2684 = vmatprep.subr.mxu0 0.0
      %2685 = vmatpush1.msra.mxu0 0.0
      %2686 = vmatprep.subr.mxu0 0.0
      %2687 = vmatpush1.msra.mxu0 0.0
      %2688 = vmatprep.subr.mxu0 0.0
      %2689 = vmatpush1.msra.mxu0 0.0
      %2690 = vmatprep.subr.mxu0 0.0
      %2691 = vmatpush1.msra.mxu0 0.0
      %2692 = vmatprep.mubr.f32.mxu0 0.0
      %2693 = vmatmul.mubr.f32.gmra.mrb[0].mxu0 %v2590
      %v2694 = vpop.f32.mrb[0].mxu0
      %v2695 = vadd.f32 %v2526, %v2694
      %v2696 = vpop.f32.mrb[0].mxu0
      %2697 = vmatprep.mubr.f32.mxu0 0.0
      %2698 = vmatmul.mubr.f32.gmra.mrb[0].mxu0 %v2593
      %v2699 = vpop.f32.mrb[0].mxu0
      %v2700 = vadd.f32 %v2531, %v2699
      %v2701 = vpop.f32.mrb[0].mxu0
      %2702 = vmatprep.mubr.f32.mxu0 0.0
      %2703 = vmatmul.mubr.f32.gmra.mrb[0].mxu0 %v2596
      %v2704 = vpop.f32.mrb[0].mxu0
      %v2705 = vadd.f32 %v2536, %v2704
      %v2706 = vpop.f32.mrb[0].mxu0
      %2707 = vmatprep.mubr.f32.mxu0 0.0
      %2708 = vmatmul.mubr.f32.gmra.mrb[0].mxu0 %v2599
      %v2709 = vpop.f32.mrb[0].mxu0
      %v2710 = vadd.f32 %v2541, %v2709
      %v2711 = vpop.f32.mrb[0].mxu0
      %2712 = vmatprep.mubr.f32.mxu0 0.0
      %2713 = vmatmul.mubr.f32.gmra.mrb[0].mxu0 %v2602
      %v2714 = vpop.f32.mrb[0].mxu0
      %v2715 = vadd.f32 %v2546, %v2714
      %v2716 = vpop.f32.mrb[0].mxu0
      %2717 = vmatprep.mubr.f32.mxu0 0.0
      %2718 = vmatmul.mubr.f32.gmra.mrb[0].mxu0 %v2605
      %v2719 = vpop.f32.mrb[0].mxu0
      %v2720 = vadd.f32 %v2551, %v2719
      %v2721 = vpop.f32.mrb[0].mxu0
      %2722 = vmatprep.mubr.f32.mxu0 0.0
      %2723 = vmatmul.mubr.f32.gmra.mrb[0].mxu0 %v2608
      %v2724 = vpop.f32.mrb[0].mxu0
      %v2725 = vadd.f32 %v2556, %v2724
      %v2726 = vpop.f32.mrb[0].mxu0
      %2727 = vmatprep.mubr.f32.mxu0 0.0
      %2728 = vmatmul.mubr.f32.gmra.mrb[0].mxu0 %v2611
      %v2729 = vpop.f32.mrb[0].mxu0
      %v2730 = vadd.f32 %v2561, %v2729
      %v2731 = vpop.f32.mrb[0].mxu0
      %2732 = vmatprep.mubr.f32.mxu0 0.0
      %2733 = vmatmul.mubr.f32.gmra.mrb[0].mxu0 %v2614
      %v2734 = vpop.f32.mrb[0].mxu0
      %v2735 = vadd.f32 %v2566, %v2734
      %v2736 = vpop.f32.mrb[0].mxu0
      %2737 = vmatprep.mubr.f32.mxu0 0.0
      %2738 = vmatmul.mubr.f32.gmra.mrb[0].mxu0 %v2617
      %v2739 = vpop.f32.mrb[0].mxu0
      %v2740 = vadd.f32 %v2571, %v2739
      %v2741 = vpop.f32.mrb[0].mxu0
      %2742 = vmatprep.mubr.f32.mxu0 0.0
      %2743 = vmatmul.mubr.f32.gmra.mrb[0].mxu0 %v2620
      %v2744 = vpop.f32.mrb[0].mxu0
      %v2745 = vadd.f32 %v2576, %v2744
      %v2746 = vpop.f32.mrb[0].mxu0
      %2747 = vmatprep.mubr.f32.mxu0 0.0
      %2748 = vmatmul.mubr.f32.gmra.mrb[0].mxu0 %v2623
      %v2749 = vpop.f32.mrb[0].mxu0
      %v2750 = vadd.f32 %v2581, %v2749
      %v2751 = vpop.f32.mrb[0].mxu0
      %2752 = vmatprep.mubr.f32.mxu0 0.0
      %2753 = vmatmul.mubr.f32.gmra.mrb[0].mxu0 %v2626
      %v2754 = vpop.f32.mrb[0].mxu0
      %v2755 = vadd.f32 %v2586, %v2754
      %v2756 = vpop.f32.mrb[0].mxu0
      %2757 = vdwg.mxu0
      %v2758 = vld [vmem:[#allocation2 + $0x7] sm:$0xff]
      %v2759 = vld [vmem:[#allocation2 + $0xf] sm:$0xff]
      %v2760 = vld [vmem:[#allocation2 + $0x17] sm:$0xff]
      %v2761 = vld [vmem:[#allocation2 + $0x1f] sm:$0xff]
      %v2762 = vld [vmem:[#allocation2 + $0x27] sm:$0xff]
      %v2763 = vld [vmem:[#allocation2 + $0x2f] sm:$0xff]
      %v2764 = vld [vmem:[#allocation2 + $0x37] sm:$0xff]
      %v2765 = vld [vmem:[#allocation2 + $0x3f] sm:$0xff]
      %v2766 = vld [vmem:[#allocation2 + $0x47] sm:$0xff]
      %v2767 = vld [vmem:[#allocation2 + $0x4f] sm:$0xff]
      %v2768 = vld [vmem:[#allocation2 + $0x57] sm:$0xff]
      %v2769 = vld [vmem:[#allocation2 + $0x5f] sm:$0xff]
      %v2770 = vld [vmem:[#allocation2 + $0x67] sm:$0xff]
      %s2771 = scalar_lea.vmem %s8, 32
      %v2772 = vld [vmem:[%s2771] sm:$0xff]
      %v2773 = vld [vmem:[%s2771 + $0x8] sm:$0xff]
      %v2775 = vsel %vm360, %v2758, 0
      %v2778 = vsel %vm360, %v2759, 0
      %v2781 = vsel %vm360, %v2760, 0
      %v2784 = vsel %vm360, %v2761, 0
      %v2787 = vsel %vm360, %v2762, 0
      %v2790 = vsel %vm360, %v2763, 0
      %v2793 = vsel %vm360, %v2764, 0
      %v2796 = vsel %vm360, %v2765, 0
      %v2799 = vsel %vm360, %v2766, 0
      %v2802 = vsel %vm360, %v2767, 0
      %v2805 = vsel %vm360, %v2768, 0
      %v2808 = vsel %vm360, %v2769, 0
      %v2811 = vsel %vm360, %v2770, 0
      %2813 = vmatprep.subr.mxu0 0.0
      %2814 = vmatpush1.msra.mxu0 %v2772
      %2815 = vmatprep.subr.mxu0 0.0
      %2816 = vmatpush1.msra.mxu0 %v2773
      %2817 = vmatprep.subr.mxu0 0.0
      %2818 = vmatpush1.msra.mxu0 0.0
      %2819 = vmatprep.subr.mxu0 0.0
      %2820 = vmatpush1.msra.mxu0 0.0
      %2821 = vmatprep.subr.mxu0 0.0
      %2822 = vmatpush1.msra.mxu0 0.0
      %2823 = vmatprep.subr.mxu0 0.0
      %2824 = vmatpush1.msra.mxu0 0.0
      %2825 = vmatprep.subr.mxu0 0.0
      %2826 = vmatpush1.msra.mxu0 0.0
      %2827 = vmatprep.subr.mxu0 0.0
      %2828 = vmatpush1.msra.mxu0 0.0
      %2829 = vmatprep.subr.mxu0 0.0
      %2830 = vmatpush1.msra.mxu0 0.0
      %2831 = vmatprep.subr.mxu0 0.0
      %2832 = vmatpush1.msra.mxu0 0.0
      %2833 = vmatprep.subr.mxu0 0.0
      %2834 = vmatpush1.msra.mxu0 0.0
      %2835 = vmatprep.subr.mxu0 0.0
      %2836 = vmatpush1.msra.mxu0 0.0
      %2837 = vmatprep.subr.mxu0 0.0
      %2838 = vmatpush1.msra.mxu0 0.0
      %2839 = vmatprep.subr.mxu0 0.0
      %2840 = vmatpush1.msra.mxu0 0.0
      %2841 = vmatprep.subr.mxu0 0.0
      %2842 = vmatpush1.msra.mxu0 0.0
      %2843 = vmatprep.subr.mxu0 0.0
      %2844 = vmatpush1.msra.mxu0 0.0
      %2845 = vmatprep.subr.mxu0 0.0
      %2846 = vmatpush1.msra.mxu0 0.0
      %2847 = vmatprep.subr.mxu0 0.0
      %2848 = vmatpush1.msra.mxu0 0.0
      %2849 = vmatprep.subr.mxu0 0.0
      %2850 = vmatpush1.msra.mxu0 0.0
      %2851 = vmatprep.subr.mxu0 0.0
      %2852 = vmatpush1.msra.mxu0 0.0
      %2853 = vmatprep.subr.mxu0 0.0
      %2854 = vmatpush1.msra.mxu0 0.0
      %2855 = vmatprep.subr.mxu0 0.0
      %2856 = vmatpush1.msra.mxu0 0.0
      %2857 = vmatprep.subr.mxu0 0.0
      %2858 = vmatpush1.msra.mxu0 0.0
      %2859 = vmatprep.subr.mxu0 0.0
      %2860 = vmatpush1.msra.mxu0 0.0
      %2861 = vmatprep.subr.mxu0 0.0
      %2862 = vmatpush1.msra.mxu0 0.0
      %2863 = vmatprep.subr.mxu0 0.0
      %2864 = vmatpush1.msra.mxu0 0.0
      %2865 = vmatprep.subr.mxu0 0.0
      %2866 = vmatpush1.msra.mxu0 0.0
      %2867 = vmatprep.subr.mxu0 0.0
      %2868 = vmatpush1.msra.mxu0 0.0
      %2869 = vmatprep.subr.mxu0 0.0
      %2870 = vmatpush1.msra.mxu0 0.0
      %2871 = vmatprep.subr.mxu0 0.0
      %2872 = vmatpush1.msra.mxu0 0.0
      %2873 = vmatprep.subr.mxu0 0.0
      %2874 = vmatpush1.msra.mxu0 0.0
      %2875 = vmatprep.subr.mxu0 0.0
      %2876 = vmatpush1.msra.mxu0 0.0
      %2877 = vmatprep.mubr.f32.mxu0 0.0
      %2878 = vmatmul.mubr.f32.gmra.mrb[0].mxu0 %v2775
      %v2879 = vpop.f32.mrb[0].mxu0
      %v2880 = vadd.f32 0.0, %v2879
      %v2881 = vpop.f32.mrb[0].mxu0
      %2882 = vmatprep.mubr.f32.mxu0 0.0
      %2883 = vmatmul.mubr.f32.gmra.mrb[0].mxu0 %v2778
      %v2884 = vpop.f32.mrb[0].mxu0
      %v2885 = vadd.f32 0.0, %v2884
      %v2886 = vpop.f32.mrb[0].mxu0
      %2887 = vmatprep.mubr.f32.mxu0 0.0
      %2888 = vmatmul.mubr.f32.gmra.mrb[0].mxu0 %v2781
      %v2889 = vpop.f32.mrb[0].mxu0
      %v2890 = vadd.f32 0.0, %v2889
      %v2891 = vpop.f32.mrb[0].mxu0
      %2892 = vmatprep.mubr.f32.mxu0 0.0
      %2893 = vmatmul.mubr.f32.gmra.mrb[0].mxu0 %v2784
      %v2894 = vpop.f32.mrb[0].mxu0
      %v2895 = vadd.f32 0.0, %v2894
      %v2896 = vpop.f32.mrb[0].mxu0
      %2897 = vmatprep.mubr.f32.mxu0 0.0
      %2898 = vmatmul.mubr.f32.gmra.mrb[0].mxu0 %v2787
      %v2899 = vpop.f32.mrb[0].mxu0
      %v2900 = vadd.f32 0.0, %v2899
      %v2901 = vpop.f32.mrb[0].mxu0
      %2902 = vmatprep.mubr.f32.mxu0 0.0
      %2903 = vmatmul.mubr.f32.gmra.mrb[0].mxu0 %v2790
      %v2904 = vpop.f32.mrb[0].mxu0
      %v2905 = vadd.f32 0.0, %v2904
      %v2906 = vpop.f32.mrb[0].mxu0
      %2907 = vmatprep.mubr.f32.mxu0 0.0
      %2908 = vmatmul.mubr.f32.gmra.mrb[0].mxu0 %v2793
      %v2909 = vpop.f32.mrb[0].mxu0
      %v2910 = vadd.f32 0.0, %v2909
      %v2911 = vpop.f32.mrb[0].mxu0
      %2912 = vmatprep.mubr.f32.mxu0 0.0
      %2913 = vmatmul.mubr.f32.gmra.mrb[0].mxu0 %v2796
      %v2914 = vpop.f32.mrb[0].mxu0
      %v2915 = vadd.f32 0.0, %v2914
      %v2916 = vpop.f32.mrb[0].mxu0
      %2917 = vmatprep.mubr.f32.mxu0 0.0
      %2918 = vmatmul.mubr.f32.gmra.mrb[0].mxu0 %v2799
      %v2919 = vpop.f32.mrb[0].mxu0
      %v2920 = vadd.f32 0.0, %v2919
      %v2921 = vpop.f32.mrb[0].mxu0
      %2922 = vmatprep.mubr.f32.mxu0 0.0
      %2923 = vmatmul.mubr.f32.gmra.mrb[0].mxu0 %v2802
      %v2924 = vpop.f32.mrb[0].mxu0
      %v2925 = vadd.f32 0.0, %v2924
      %v2926 = vpop.f32.mrb[0].mxu0
      %2927 = vmatprep.mubr.f32.mxu0 0.0
      %2928 = vmatmul.mubr.f32.gmra.mrb[0].mxu0 %v2805
      %v2929 = vpop.f32.mrb[0].mxu0
      %v2930 = vadd.f32 0.0, %v2929
      %v2931 = vpop.f32.mrb[0].mxu0
      %2932 = vmatprep.mubr.f32.mxu0 0.0
      %2933 = vmatmul.mubr.f32.gmra.mrb[0].mxu0 %v2808
      %v2934 = vpop.f32.mrb[0].mxu0
      %v2935 = vadd.f32 0.0, %v2934
      %v2936 = vpop.f32.mrb[0].mxu0
      %2937 = vmatprep.mubr.f32.mxu0 0.0
      %2938 = vmatmul.mubr.f32.gmra.mrb[0].mxu0 %v2811
      %v2939 = vpop.f32.mrb[0].mxu0
      %v2940 = vadd.f32 0.0, %v2939
      %v2941 = vpop.f32.mrb[0].mxu0
      %2942 = vdwg.mxu0
      %v2943 = vadd.f32 %v2695, %v2880
      %v2944 = vadd.f32 %v2700, %v2885
      %v2945 = vadd.f32 %v2705, %v2890
      %v2946 = vadd.f32 %v2710, %v2895
      %v2947 = vadd.f32 %v2715, %v2900
      %v2948 = vadd.f32 %v2720, %v2905
      %v2949 = vadd.f32 %v2725, %v2910
      %v2950 = vadd.f32 %v2730, %v2915
      %v2951 = vadd.f32 %v2735, %v2920
      %v2952 = vadd.f32 %v2740, %v2925
      %v2953 = vadd.f32 %v2745, %v2930
      %v2954 = vadd.f32 %v2750, %v2935
      %v2955 = vadd.f32 %v2755, %v2940
      %v2956 = vld [vmem:[#allocation2 + $0xf] sm:$0xff]
      %v2957 = vld [vmem:[#allocation2 + $0x17] sm:$0xff]
      %v2958 = vld [vmem:[#allocation2 + $0x1f] sm:$0xff]
      %v2959 = vld [vmem:[#allocation2 + $0x27] sm:$0xff]
      %v2960 = vld [vmem:[#allocation2 + $0x2f] sm:$0xff]
      %v2961 = vld [vmem:[#allocation2 + $0x37] sm:$0xff]
      %v2962 = vld [vmem:[#allocation2 + $0x3f] sm:$0xff]
      %v2963 = vld [vmem:[#allocation2 + $0x47] sm:$0xff]
      %v2964 = vld [vmem:[#allocation2 + $0x4f] sm:$0xff]
      %v2965 = vld [vmem:[#allocation2 + $0x57] sm:$0xff]
      %v2966 = vld [vmem:[#allocation2 + $0x5f] sm:$0xff]
      %v2967 = vld [vmem:[#allocation2 + $0x67] sm:$0xff]
      %v2968 = vld [vmem:[#allocation2 + $0x6f] sm:$0xff]
      %s2969 = scalar_lea.vmem %s8, 48
      %v2970 = vld [vmem:[%s2969] sm:$0xff]
      %v2971 = vld [vmem:[%s2969 + $0x8] sm:$0xff]
      %v2973 = vsel %vm360, %v2956, 0
      %v2976 = vsel %vm360, %v2957, 0
      %v2979 = vsel %vm360, %v2958, 0
      %v2982 = vsel %vm360, %v2959, 0
      %v2985 = vsel %vm360, %v2960, 0
      %v2988 = vsel %vm360, %v2961, 0
      %v2991 = vsel %vm360, %v2962, 0
      %v2994 = vsel %vm360, %v2963, 0
      %v2997 = vsel %vm360, %v2964, 0
      %v3000 = vsel %vm360, %v2965, 0
      %v3003 = vsel %vm360, %v2966, 0
      %v3006 = vsel %vm360, %v2967, 0
      %v3009 = vsel %vm360, %v2968, 0
      %3011 = vmatprep.subr.mxu0 0.0
      %3012 = vmatpush1.msra.mxu0 %v2970
      %3013 = vmatprep.subr.mxu0 0.0
      %3014 = vmatpush1.msra.mxu0 %v2971
      %3015 = vmatprep.subr.mxu0 0.0
      %3016 = vmatpush1.msra.mxu0 0.0
      %3017 = vmatprep.subr.mxu0 0.0
      %3018 = vmatpush1.msra.mxu0 0.0
      %3019 = vmatprep.subr.mxu0 0.0
      %3020 = vmatpush1.msra.mxu0 0.0
      %3021 = vmatprep.subr.mxu0 0.0
      %3022 = vmatpush1.msra.mxu0 0.0
      %3023 = vmatprep.subr.mxu0 0.0
      %3024 = vmatpush1.msra.mxu0 0.0
      %3025 = vmatprep.subr.mxu0 0.0
      %3026 = vmatpush1.msra.mxu0 0.0
      %3027 = vmatprep.subr.mxu0 0.0
      %3028 = vmatpush1.msra.mxu0 0.0
      %3029 = vmatprep.subr.mxu0 0.0
      %3030 = vmatpush1.msra.mxu0 0.0
      %3031 = vmatprep.subr.mxu0 0.0
      %3032 = vmatpush1.msra.mxu0 0.0
      %3033 = vmatprep.subr.mxu0 0.0
      %3034 = vmatpush1.msra.mxu0 0.0
      %3035 = vmatprep.subr.mxu0 0.0
      %3036 = vmatpush1.msra.mxu0 0.0
      %3037 = vmatprep.subr.mxu0 0.0
      %3038 = vmatpush1.msra.mxu0 0.0
      %3039 = vmatprep.subr.mxu0 0.0
      %3040 = vmatpush1.msra.mxu0 0.0
      %3041 = vmatprep.subr.mxu0 0.0
      %3042 = vmatpush1.msra.mxu0 0.0
      %3043 = vmatprep.subr.mxu0 0.0
      %3044 = vmatpush1.msra.mxu0 0.0
      %3045 = vmatprep.subr.mxu0 0.0
      %3046 = vmatpush1.msra.mxu0 0.0
      %3047 = vmatprep.subr.mxu0 0.0
      %3048 = vmatpush1.msra.mxu0 0.0
      %3049 = vmatprep.subr.mxu0 0.0
      %3050 = vmatpush1.msra.mxu0 0.0
      %3051 = vmatprep.subr.mxu0 0.0
      %3052 = vmatpush1.msra.mxu0 0.0
      %3053 = vmatprep.subr.mxu0 0.0
      %3054 = vmatpush1.msra.mxu0 0.0
      %3055 = vmatprep.subr.mxu0 0.0
      %3056 = vmatpush1.msra.mxu0 0.0
      %3057 = vmatprep.subr.mxu0 0.0
      %3058 = vmatpush1.msra.mxu0 0.0
      %3059 = vmatprep.subr.mxu0 0.0
      %3060 = vmatpush1.msra.mxu0 0.0
      %3061 = vmatprep.subr.mxu0 0.0
      %3062 = vmatpush1.msra.mxu0 0.0
      %3063 = vmatprep.subr.mxu0 0.0
      %3064 = vmatpush1.msra.mxu0 0.0
      %3065 = vmatprep.subr.mxu0 0.0
      %3066 = vmatpush1.msra.mxu0 0.0
      %3067 = vmatprep.subr.mxu0 0.0
      %3068 = vmatpush1.msra.mxu0 0.0
      %3069 = vmatprep.subr.mxu0 0.0
      %3070 = vmatpush1.msra.mxu0 0.0
      %3071 = vmatprep.subr.mxu0 0.0
      %3072 = vmatpush1.msra.mxu0 0.0
      %3073 = vmatprep.subr.mxu0 0.0
      %3074 = vmatpush1.msra.mxu0 0.0
      %3075 = vmatprep.mubr.f32.mxu0 0.0
      %3076 = vmatmul.mubr.f32.gmra.mrb[0].mxu0 %v2973
      %v3077 = vpop.f32.mrb[0].mxu0
      %v3078 = vadd.f32 0.0, %v3077
      %v3079 = vpop.f32.mrb[0].mxu0
      %3080 = vmatprep.mubr.f32.mxu0 0.0
      %3081 = vmatmul.mubr.f32.gmra.mrb[0].mxu0 %v2976
      %v3082 = vpop.f32.mrb[0].mxu0
      %v3083 = vadd.f32 0.0, %v3082
      %v3084 = vpop.f32.mrb[0].mxu0
      %3085 = vmatprep.mubr.f32.mxu0 0.0
      %3086 = vmatmul.mubr.f32.gmra.mrb[0].mxu0 %v2979
      %v3087 = vpop.f32.mrb[0].mxu0
      %v3088 = vadd.f32 0.0, %v3087
      %v3089 = vpop.f32.mrb[0].mxu0
      %3090 = vmatprep.mubr.f32.mxu0 0.0
      %3091 = vmatmul.mubr.f32.gmra.mrb[0].mxu0 %v2982
      %v3092 = vpop.f32.mrb[0].mxu0
      %v3093 = vadd.f32 0.0, %v3092
      %v3094 = vpop.f32.mrb[0].mxu0
      %3095 = vmatprep.mubr.f32.mxu0 0.0
      %3096 = vmatmul.mubr.f32.gmra.mrb[0].mxu0 %v2985
      %v3097 = vpop.f32.mrb[0].mxu0
      %v3098 = vadd.f32 0.0, %v3097
      %v3099 = vpop.f32.mrb[0].mxu0
      %3100 = vmatprep.mubr.f32.mxu0 0.0
      %3101 = vmatmul.mubr.f32.gmra.mrb[0].mxu0 %v2988
      %v3102 = vpop.f32.mrb[0].mxu0
      %v3103 = vadd.f32 0.0, %v3102
      %v3104 = vpop.f32.mrb[0].mxu0
      %3105 = vmatprep.mubr.f32.mxu0 0.0
      %3106 = vmatmul.mubr.f32.gmra.mrb[0].mxu0 %v2991
      %v3107 = vpop.f32.mrb[0].mxu0
      %v3108 = vadd.f32 0.0, %v3107
      %v3109 = vpop.f32.mrb[0].mxu0
      %3110 = vmatprep.mubr.f32.mxu0 0.0
      %3111 = vmatmul.mubr.f32.gmra.mrb[0].mxu0 %v2994
      %v3112 = vpop.f32.mrb[0].mxu0
      %v3113 = vadd.f32 0.0, %v3112
      %v3114 = vpop.f32.mrb[0].mxu0
      %3115 = vmatprep.mubr.f32.mxu0 0.0
      %3116 = vmatmul.mubr.f32.gmra.mrb[0].mxu0 %v2997
      %v3117 = vpop.f32.mrb[0].mxu0
      %v3118 = vadd.f32 0.0, %v3117
      %v3119 = vpop.f32.mrb[0].mxu0
      %3120 = vmatprep.mubr.f32.mxu0 0.0
      %3121 = vmatmul.mubr.f32.gmra.mrb[0].mxu0 %v3000
      %v3122 = vpop.f32.mrb[0].mxu0
      %v3123 = vadd.f32 0.0, %v3122
      %v3124 = vpop.f32.mrb[0].mxu0
      %3125 = vmatprep.mubr.f32.mxu0 0.0
      %3126 = vmatmul.mubr.f32.gmra.mrb[0].mxu0 %v3003
      %v3127 = vpop.f32.mrb[0].mxu0
      %v3128 = vadd.f32 0.0, %v3127
      %v3129 = vpop.f32.mrb[0].mxu0
      %3130 = vmatprep.mubr.f32.mxu0 0.0
      %3131 = vmatmul.mubr.f32.gmra.mrb[0].mxu0 %v3006
      %v3132 = vpop.f32.mrb[0].mxu0
      %v3133 = vadd.f32 0.0, %v3132
      %v3134 = vpop.f32.mrb[0].mxu0
      %3135 = vmatprep.mubr.f32.mxu0 0.0
      %3136 = vmatmul.mubr.f32.gmra.mrb[0].mxu0 %v3009
      %v3137 = vpop.f32.mrb[0].mxu0
      %v3138 = vadd.f32 0.0, %v3137
      %v3139 = vpop.f32.mrb[0].mxu0
      %3140 = vdwg.mxu0
      %v3141 = vadd.f32 %v2943, %v3078
      %v3142 = vadd.f32 %v2944, %v3083
      %v3143 = vadd.f32 %v2945, %v3088
      %v3144 = vadd.f32 %v2946, %v3093
      %v3145 = vadd.f32 %v2947, %v3098
      %v3146 = vadd.f32 %v2948, %v3103
      %v3147 = vadd.f32 %v2949, %v3108
      %v3148 = vadd.f32 %v2950, %v3113
      %v3149 = vadd.f32 %v2951, %v3118
      %v3150 = vadd.f32 %v2952, %v3123
      %v3151 = vadd.f32 %v2953, %v3128
      %v3152 = vadd.f32 %v2954, %v3133
      %v3153 = vadd.f32 %v2955, %v3138
      %v3154 = vld [vmem:[#allocation2 + $0x10] sm:$0xff]
      %v3155 = vld [vmem:[#allocation2 + $0x18] sm:$0xff]
      %v3156 = vld [vmem:[#allocation2 + $0x20] sm:$0xff]
      %v3157 = vld [vmem:[#allocation2 + $0x28] sm:$0xff]
      %v3158 = vld [vmem:[#allocation2 + $0x30] sm:$0xff]
      %v3159 = vld [vmem:[#allocation2 + $0x38] sm:$0xff]
      %v3160 = vld [vmem:[#allocation2 + $0x40] sm:$0xff]
      %v3161 = vld [vmem:[#allocation2 + $0x48] sm:$0xff]
      %v3162 = vld [vmem:[#allocation2 + $0x50] sm:$0xff]
      %v3163 = vld [vmem:[#allocation2 + $0x58] sm:$0xff]
      %v3164 = vld [vmem:[#allocation2 + $0x60] sm:$0xff]
      %v3165 = vld [vmem:[#allocation2 + $0x68] sm:$0xff]
      %v3166 = vld [vmem:[#allocation2 + $0x70] sm:$0xff]
      %s3167 = scalar_lea.vmem %s8, 64
      %v3168 = vld [vmem:[%s3167] sm:$0xff]
      %v3169 = vld [vmem:[%s3167 + $0x8] sm:$0xff]
      %v3171 = vsel %vm360, %v3154, 0
      %v3174 = vsel %vm360, %v3155, 0
      %v3177 = vsel %vm360, %v3156, 0
      %v3180 = vsel %vm360, %v3157, 0
      %v3183 = vsel %vm360, %v3158, 0
      %v3186 = vsel %vm360, %v3159, 0
      %v3189 = vsel %vm360, %v3160, 0
      %v3192 = vsel %vm360, %v3161, 0
      %v3195 = vsel %vm360, %v3162, 0
      %v3198 = vsel %vm360, %v3163, 0
      %v3201 = vsel %vm360, %v3164, 0
      %v3204 = vsel %vm360, %v3165, 0
      %v3207 = vsel %vm360, %v3166, 0
      %3209 = vmatprep.subr.mxu0 0.0
      %3210 = vmatpush1.msra.mxu0 %v3168
      %3211 = vmatprep.subr.mxu0 0.0
      %3212 = vmatpush1.msra.mxu0 %v3169
      %3213 = vmatprep.subr.mxu0 0.0
      %3214 = vmatpush1.msra.mxu0 0.0
      %3215 = vmatprep.subr.mxu0 0.0
      %3216 = vmatpush1.msra.mxu0 0.0
      %3217 = vmatprep.subr.mxu0 0.0
      %3218 = vmatpush1.msra.mxu0 0.0
      %3219 = vmatprep.subr.mxu0 0.0
      %3220 = vmatpush1.msra.mxu0 0.0
      %3221 = vmatprep.subr.mxu0 0.0
      %3222 = vmatpush1.msra.mxu0 0.0
      %3223 = vmatprep.subr.mxu0 0.0
      %3224 = vmatpush1.msra.mxu0 0.0
      %3225 = vmatprep.subr.mxu0 0.0
      %3226 = vmatpush1.msra.mxu0 0.0
      %3227 = vmatprep.subr.mxu0 0.0
      %3228 = vmatpush1.msra.mxu0 0.0
      %3229 = vmatprep.subr.mxu0 0.0
      %3230 = vmatpush1.msra.mxu0 0.0
      %3231 = vmatprep.subr.mxu0 0.0
      %3232 = vmatpush1.msra.mxu0 0.0
      %3233 = vmatprep.subr.mxu0 0.0
      %3234 = vmatpush1.msra.mxu0 0.0
      %3235 = vmatprep.subr.mxu0 0.0
      %3236 = vmatpush1.msra.mxu0 0.0
      %3237 = vmatprep.subr.mxu0 0.0
      %3238 = vmatpush1.msra.mxu0 0.0
      %3239 = vmatprep.subr.mxu0 0.0
      %3240 = vmatpush1.msra.mxu0 0.0
      %3241 = vmatprep.subr.mxu0 0.0
      %3242 = vmatpush1.msra.mxu0 0.0
      %3243 = vmatprep.subr.mxu0 0.0
      %3244 = vmatpush1.msra.mxu0 0.0
      %3245 = vmatprep.subr.mxu0 0.0
      %3246 = vmatpush1.msra.mxu0 0.0
      %3247 = vmatprep.subr.mxu0 0.0
      %3248 = vmatpush1.msra.mxu0 0.0
      %3249 = vmatprep.subr.mxu0 0.0
      %3250 = vmatpush1.msra.mxu0 0.0
      %3251 = vmatprep.subr.mxu0 0.0
      %3252 = vmatpush1.msra.mxu0 0.0
      %3253 = vmatprep.subr.mxu0 0.0
      %3254 = vmatpush1.msra.mxu0 0.0
      %3255 = vmatprep.subr.mxu0 0.0
      %3256 = vmatpush1.msra.mxu0 0.0
      %3257 = vmatprep.subr.mxu0 0.0
      %3258 = vmatpush1.msra.mxu0 0.0
      %3259 = vmatprep.subr.mxu0 0.0
      %3260 = vmatpush1.msra.mxu0 0.0
      %3261 = vmatprep.subr.mxu0 0.0
      %3262 = vmatpush1.msra.mxu0 0.0
      %3263 = vmatprep.subr.mxu0 0.0
      %3264 = vmatpush1.msra.mxu0 0.0
      %3265 = vmatprep.subr.mxu0 0.0
      %3266 = vmatpush1.msra.mxu0 0.0
      %3267 = vmatprep.subr.mxu0 0.0
      %3268 = vmatpush1.msra.mxu0 0.0
      %3269 = vmatprep.subr.mxu0 0.0
      %3270 = vmatpush1.msra.mxu0 0.0
      %3271 = vmatprep.subr.mxu0 0.0
      %3272 = vmatpush1.msra.mxu0 0.0
      %3273 = vmatprep.mubr.f32.mxu0 0.0
      %3274 = vmatmul.mubr.f32.gmra.mrb[0].mxu0 %v3171
      %v3275 = vpop.f32.mrb[0].mxu0
      %v3276 = vadd.f32 0.0, %v3275
      %v3277 = vpop.f32.mrb[0].mxu0
      %3278 = vmatprep.mubr.f32.mxu0 0.0
      %3279 = vmatmul.mubr.f32.gmra.mrb[0].mxu0 %v3174
      %v3280 = vpop.f32.mrb[0].mxu0
      %v3281 = vadd.f32 0.0, %v3280
      %v3282 = vpop.f32.mrb[0].mxu0
      %3283 = vmatprep.mubr.f32.mxu0 0.0
      %3284 = vmatmul.mubr.f32.gmra.mrb[0].mxu0 %v3177
      %v3285 = vpop.f32.mrb[0].mxu0
      %v3286 = vadd.f32 0.0, %v3285
      %v3287 = vpop.f32.mrb[0].mxu0
      %3288 = vmatprep.mubr.f32.mxu0 0.0
      %3289 = vmatmul.mubr.f32.gmra.mrb[0].mxu0 %v3180
      %v3290 = vpop.f32.mrb[0].mxu0
      %v3291 = vadd.f32 0.0, %v3290
      %v3292 = vpop.f32.mrb[0].mxu0
      %3293 = vmatprep.mubr.f32.mxu0 0.0
      %3294 = vmatmul.mubr.f32.gmra.mrb[0].mxu0 %v3183
      %v3295 = vpop.f32.mrb[0].mxu0
      %v3296 = vadd.f32 0.0, %v3295
      %v3297 = vpop.f32.mrb[0].mxu0
      %3298 = vmatprep.mubr.f32.mxu0 0.0
      %3299 = vmatmul.mubr.f32.gmra.mrb[0].mxu0 %v3186
      %v3300 = vpop.f32.mrb[0].mxu0
      %v3301 = vadd.f32 0.0, %v3300
      %v3302 = vpop.f32.mrb[0].mxu0
      %3303 = vmatprep.mubr.f32.mxu0 0.0
      %3304 = vmatmul.mubr.f32.gmra.mrb[0].mxu0 %v3189
      %v3305 = vpop.f32.mrb[0].mxu0
      %v3306 = vadd.f32 0.0, %v3305
      %v3307 = vpop.f32.mrb[0].mxu0
      %3308 = vmatprep.mubr.f32.mxu0 0.0
      %3309 = vmatmul.mubr.f32.gmra.mrb[0].mxu0 %v3192
      %v3310 = vpop.f32.mrb[0].mxu0
      %v3311 = vadd.f32 0.0, %v3310
      %v3312 = vpop.f32.mrb[0].mxu0
      %3313 = vmatprep.mubr.f32.mxu0 0.0
      %3314 = vmatmul.mubr.f32.gmra.mrb[0].mxu0 %v3195
      %v3315 = vpop.f32.mrb[0].mxu0
      %v3316 = vadd.f32 0.0, %v3315
      %v3317 = vpop.f32.mrb[0].mxu0
      %3318 = vmatprep.mubr.f32.mxu0 0.0
      %3319 = vmatmul.mubr.f32.gmra.mrb[0].mxu0 %v3198
      %v3320 = vpop.f32.mrb[0].mxu0
      %v3321 = vadd.f32 0.0, %v3320
      %v3322 = vpop.f32.mrb[0].mxu0
      %3323 = vmatprep.mubr.f32.mxu0 0.0
      %3324 = vmatmul.mubr.f32.gmra.mrb[0].mxu0 %v3201
      %v3325 = vpop.f32.mrb[0].mxu0
      %v3326 = vadd.f32 0.0, %v3325
      %v3327 = vpop.f32.mrb[0].mxu0
      %3328 = vmatprep.mubr.f32.mxu0 0.0
      %3329 = vmatmul.mubr.f32.gmra.mrb[0].mxu0 %v3204
      %v3330 = vpop.f32.mrb[0].mxu0
      %v3331 = vadd.f32 0.0, %v3330
      %v3332 = vpop.f32.mrb[0].mxu0
      %3333 = vmatprep.mubr.f32.mxu0 0.0
      %3334 = vmatmul.mubr.f32.gmra.mrb[0].mxu0 %v3207
      %v3335 = vpop.f32.mrb[0].mxu0
      %v3336 = vadd.f32 0.0, %v3335
      %v3337 = vpop.f32.mrb[0].mxu0
      %3338 = vdwg.mxu0
      %v3339 = vadd.f32 %v3141, %v3276
      %v3340 = vadd.f32 %v3142, %v3281
      %v3341 = vadd.f32 %v3143, %v3286
      %v3342 = vadd.f32 %v3144, %v3291
      %v3343 = vadd.f32 %v3145, %v3296
      %v3344 = vadd.f32 %v3146, %v3301
      %v3345 = vadd.f32 %v3147, %v3306
      %v3346 = vadd.f32 %v3148, %v3311
      %v3347 = vadd.f32 %v3149, %v3316
      %v3348 = vadd.f32 %v3150, %v3321
      %v3349 = vadd.f32 %v3151, %v3326
      %v3350 = vadd.f32 %v3152, %v3331
      %v3351 = vadd.f32 %v3153, %v3336
      %v3352 = vld [vmem:[#allocation2 + $0x11] sm:$0xff]
      %v3353 = vld [vmem:[#allocation2 + $0x19] sm:$0xff]
      %v3354 = vld [vmem:[#allocation2 + $0x21] sm:$0xff]
      %v3355 = vld [vmem:[#allocation2 + $0x29] sm:$0xff]
      %v3356 = vld [vmem:[#allocation2 + $0x31] sm:$0xff]
      %v3357 = vld [vmem:[#allocation2 + $0x39] sm:$0xff]
      %v3358 = vld [vmem:[#allocation2 + $0x41] sm:$0xff]
      %v3359 = vld [vmem:[#allocation2 + $0x49] sm:$0xff]
      %v3360 = vld [vmem:[#allocation2 + $0x51] sm:$0xff]
      %v3361 = vld [vmem:[#allocation2 + $0x59] sm:$0xff]
      %v3362 = vld [vmem:[#allocation2 + $0x61] sm:$0xff]
      %v3363 = vld [vmem:[#allocation2 + $0x69] sm:$0xff]
      %v3364 = vld [vmem:[#allocation2 + $0x71] sm:$0xff]
      %s3365 = scalar_lea.vmem %s8, 80
      %v3366 = vld [vmem:[%s3365] sm:$0xff]
      %v3367 = vld [vmem:[%s3365 + $0x8] sm:$0xff]
      %v3369 = vsel %vm360, %v3352, 0
      %v3372 = vsel %vm360, %v3353, 0
      %v3375 = vsel %vm360, %v3354, 0
      %v3378 = vsel %vm360, %v3355, 0
      %v3381 = vsel %vm360, %v3356, 0
      %v3384 = vsel %vm360, %v3357, 0
      %v3387 = vsel %vm360, %v3358, 0
      %v3390 = vsel %vm360, %v3359, 0
      %v3393 = vsel %vm360, %v3360, 0
      %v3396 = vsel %vm360, %v3361, 0
      %v3399 = vsel %vm360, %v3362, 0
      %v3402 = vsel %vm360, %v3363, 0
      %v3405 = vsel %vm360, %v3364, 0
      %3407 = vmatprep.subr.mxu0 0.0
      %3408 = vmatpush1.msra.mxu0 %v3366
      %3409 = vmatprep.subr.mxu0 0.0
      %3410 = vmatpush1.msra.mxu0 %v3367
      %3411 = vmatprep.subr.mxu0 0.0
      %3412 = vmatpush1.msra.mxu0 0.0
      %3413 = vmatprep.subr.mxu0 0.0
      %3414 = vmatpush1.msra.mxu0 0.0
      %3415 = vmatprep.subr.mxu0 0.0
      %3416 = vmatpush1.msra.mxu0 0.0
      %3417 = vmatprep.subr.mxu0 0.0
      %3418 = vmatpush1.msra.mxu0 0.0
      %3419 = vmatprep.subr.mxu0 0.0
      %3420 = vmatpush1.msra.mxu0 0.0
      %3421 = vmatprep.subr.mxu0 0.0
      %3422 = vmatpush1.msra.mxu0 0.0
      %3423 = vmatprep.subr.mxu0 0.0
      %3424 = vmatpush1.msra.mxu0 0.0
      %3425 = vmatprep.subr.mxu0 0.0
      %3426 = vmatpush1.msra.mxu0 0.0
      %3427 = vmatprep.subr.mxu0 0.0
      %3428 = vmatpush1.msra.mxu0 0.0
      %3429 = vmatprep.subr.mxu0 0.0
      %3430 = vmatpush1.msra.mxu0 0.0
      %3431 = vmatprep.subr.mxu0 0.0
      %3432 = vmatpush1.msra.mxu0 0.0
      %3433 = vmatprep.subr.mxu0 0.0
      %3434 = vmatpush1.msra.mxu0 0.0
      %3435 = vmatprep.subr.mxu0 0.0
      %3436 = vmatpush1.msra.mxu0 0.0
      %3437 = vmatprep.subr.mxu0 0.0
      %3438 = vmatpush1.msra.mxu0 0.0
      %3439 = vmatprep.subr.mxu0 0.0
      %3440 = vmatpush1.msra.mxu0 0.0
      %3441 = vmatprep.subr.mxu0 0.0
      %3442 = vmatpush1.msra.mxu0 0.0
      %3443 = vmatprep.subr.mxu0 0.0
      %3444 = vmatpush1.msra.mxu0 0.0
      %3445 = vmatprep.subr.mxu0 0.0
      %3446 = vmatpush1.msra.mxu0 0.0
      %3447 = vmatprep.subr.mxu0 0.0
      %3448 = vmatpush1.msra.mxu0 0.0
      %3449 = vmatprep.subr.mxu0 0.0
      %3450 = vmatpush1.msra.mxu0 0.0
      %3451 = vmatprep.subr.mxu0 0.0
      %3452 = vmatpush1.msra.mxu0 0.0
      %3453 = vmatprep.subr.mxu0 0.0
      %3454 = vmatpush1.msra.mxu0 0.0
      %3455 = vmatprep.subr.mxu0 0.0
      %3456 = vmatpush1.msra.mxu0 0.0
      %3457 = vmatprep.subr.mxu0 0.0
      %3458 = vmatpush1.msra.mxu0 0.0
      %3459 = vmatprep.subr.mxu0 0.0
      %3460 = vmatpush1.msra.mxu0 0.0
      %3461 = vmatprep.subr.mxu0 0.0
      %3462 = vmatpush1.msra.mxu0 0.0
      %3463 = vmatprep.subr.mxu0 0.0
      %3464 = vmatpush1.msra.mxu0 0.0
      %3465 = vmatprep.subr.mxu0 0.0
      %3466 = vmatpush1.msra.mxu0 0.0
      %3467 = vmatprep.subr.mxu0 0.0
      %3468 = vmatpush1.msra.mxu0 0.0
      %3469 = vmatprep.subr.mxu0 0.0
      %3470 = vmatpush1.msra.mxu0 0.0
      %3471 = vmatprep.mubr.f32.mxu0 0.0
      %3472 = vmatmul.mubr.f32.gmra.mrb[0].mxu0 %v3369
      %v3473 = vpop.f32.mrb[0].mxu0
      %v3474 = vadd.f32 0.0, %v3473
      %v3475 = vpop.f32.mrb[0].mxu0
      %3476 = vmatprep.mubr.f32.mxu0 0.0
      %3477 = vmatmul.mubr.f32.gmra.mrb[0].mxu0 %v3372
      %v3478 = vpop.f32.mrb[0].mxu0
      %v3479 = vadd.f32 0.0, %v3478
      %v3480 = vpop.f32.mrb[0].mxu0
      %3481 = vmatprep.mubr.f32.mxu0 0.0
      %3482 = vmatmul.mubr.f32.gmra.mrb[0].mxu0 %v3375
      %v3483 = vpop.f32.mrb[0].mxu0
      %v3484 = vadd.f32 0.0, %v3483
      %v3485 = vpop.f32.mrb[0].mxu0
      %3486 = vmatprep.mubr.f32.mxu0 0.0
      %3487 = vmatmul.mubr.f32.gmra.mrb[0].mxu0 %v3378
      %v3488 = vpop.f32.mrb[0].mxu0
      %v3489 = vadd.f32 0.0, %v3488
      %v3490 = vpop.f32.mrb[0].mxu0
      %3491 = vmatprep.mubr.f32.mxu0 0.0
      %3492 = vmatmul.mubr.f32.gmra.mrb[0].mxu0 %v3381
      %v3493 = vpop.f32.mrb[0].mxu0
      %v3494 = vadd.f32 0.0, %v3493
      %v3495 = vpop.f32.mrb[0].mxu0
      %3496 = vmatprep.mubr.f32.mxu0 0.0
      %3497 = vmatmul.mubr.f32.gmra.mrb[0].mxu0 %v3384
      %v3498 = vpop.f32.mrb[0].mxu0
      %v3499 = vadd.f32 0.0, %v3498
      %v3500 = vpop.f32.mrb[0].mxu0
      %3501 = vmatprep.mubr.f32.mxu0 0.0
      %3502 = vmatmul.mubr.f32.gmra.mrb[0].mxu0 %v3387
      %v3503 = vpop.f32.mrb[0].mxu0
      %v3504 = vadd.f32 0.0, %v3503
      %v3505 = vpop.f32.mrb[0].mxu0
      %3506 = vmatprep.mubr.f32.mxu0 0.0
      %3507 = vmatmul.mubr.f32.gmra.mrb[0].mxu0 %v3390
      %v3508 = vpop.f32.mrb[0].mxu0
      %v3509 = vadd.f32 0.0, %v3508
      %v3510 = vpop.f32.mrb[0].mxu0
      %3511 = vmatprep.mubr.f32.mxu0 0.0
      %3512 = vmatmul.mubr.f32.gmra.mrb[0].mxu0 %v3393
      %v3513 = vpop.f32.mrb[0].mxu0
      %v3514 = vadd.f32 0.0, %v3513
      %v3515 = vpop.f32.mrb[0].mxu0
      %3516 = vmatprep.mubr.f32.mxu0 0.0
      %3517 = vmatmul.mubr.f32.gmra.mrb[0].mxu0 %v3396
      %v3518 = vpop.f32.mrb[0].mxu0
      %v3519 = vadd.f32 0.0, %v3518
      %v3520 = vpop.f32.mrb[0].mxu0
      %3521 = vmatprep.mubr.f32.mxu0 0.0
      %3522 = vmatmul.mubr.f32.gmra.mrb[0].mxu0 %v3399
      %v3523 = vpop.f32.mrb[0].mxu0
      %v3524 = vadd.f32 0.0, %v3523
      %v3525 = vpop.f32.mrb[0].mxu0
      %3526 = vmatprep.mubr.f32.mxu0 0.0
      %3527 = vmatmul.mubr.f32.gmra.mrb[0].mxu0 %v3402
      %v3528 = vpop.f32.mrb[0].mxu0
      %v3529 = vadd.f32 0.0, %v3528
      %v3530 = vpop.f32.mrb[0].mxu0
      %3531 = vmatprep.mubr.f32.mxu0 0.0
      %3532 = vmatmul.mubr.f32.gmra.mrb[0].mxu0 %v3405
      %v3533 = vpop.f32.mrb[0].mxu0
      %v3534 = vadd.f32 0.0, %v3533
      %v3535 = vpop.f32.mrb[0].mxu0
      %3536 = vdwg.mxu0
      %v3537 = vadd.f32 %v3339, %v3474
      %v3538 = vadd.f32 %v3340, %v3479
      %v3539 = vadd.f32 %v3341, %v3484
      %v3540 = vadd.f32 %v3342, %v3489
      %v3541 = vadd.f32 %v3343, %v3494
      %v3542 = vadd.f32 %v3344, %v3499
      %v3543 = vadd.f32 %v3345, %v3504
      %v3544 = vadd.f32 %v3346, %v3509
      %v3545 = vadd.f32 %v3347, %v3514
      %v3546 = vadd.f32 %v3348, %v3519
      %v3547 = vadd.f32 %v3349, %v3524
      %v3548 = vadd.f32 %v3350, %v3529
      %v3549 = vadd.f32 %v3351, %v3534
      %v3550 = vld [vmem:[#allocation2 + $0x19] sm:$0xff]
      %v3551 = vld [vmem:[#allocation2 + $0x21] sm:$0xff]
      %v3552 = vld [vmem:[#allocation2 + $0x29] sm:$0xff]
      %v3553 = vld [vmem:[#allocation2 + $0x31] sm:$0xff]
      %v3554 = vld [vmem:[#allocation2 + $0x39] sm:$0xff]
      %v3555 = vld [vmem:[#allocation2 + $0x41] sm:$0xff]
      %v3556 = vld [vmem:[#allocation2 + $0x49] sm:$0xff]
      %v3557 = vld [vmem:[#allocation2 + $0x51] sm:$0xff]
      %v3558 = vld [vmem:[#allocation2 + $0x59] sm:$0xff]
      %v3559 = vld [vmem:[#allocation2 + $0x61] sm:$0xff]
      %v3560 = vld [vmem:[#allocation2 + $0x69] sm:$0xff]
      %v3561 = vld [vmem:[#allocation2 + $0x71] sm:$0xff]
      %v3562 = vld [vmem:[#allocation2 + $0x79] sm:$0xff]
      %s3563 = scalar_lea.vmem %s8, 96
      %v3564 = vld [vmem:[%s3563] sm:$0xff]
      %v3565 = vld [vmem:[%s3563 + $0x8] sm:$0xff]
      %v3567 = vsel %vm360, %v3550, 0
      %v3570 = vsel %vm360, %v3551, 0
      %v3573 = vsel %vm360, %v3552, 0
      %v3576 = vsel %vm360, %v3553, 0
      %v3579 = vsel %vm360, %v3554, 0
      %v3582 = vsel %vm360, %v3555, 0
      %v3585 = vsel %vm360, %v3556, 0
      %v3588 = vsel %vm360, %v3557, 0
      %v3591 = vsel %vm360, %v3558, 0
      %v3594 = vsel %vm360, %v3559, 0
      %v3597 = vsel %vm360, %v3560, 0
      %v3600 = vsel %vm360, %v3561, 0
      %v3603 = vsel %vm360, %v3562, 0
      %3605 = vmatprep.subr.mxu0 0.0
      %3606 = vmatpush1.msra.mxu0 %v3564
      %3607 = vmatprep.subr.mxu0 0.0
      %3608 = vmatpush1.msra.mxu0 %v3565
      %3609 = vmatprep.subr.mxu0 0.0
      %3610 = vmatpush1.msra.mxu0 0.0
      %3611 = vmatprep.subr.mxu0 0.0
      %3612 = vmatpush1.msra.mxu0 0.0
      %3613 = vmatprep.subr.mxu0 0.0
      %3614 = vmatpush1.msra.mxu0 0.0
      %3615 = vmatprep.subr.mxu0 0.0
      %3616 = vmatpush1.msra.mxu0 0.0
      %3617 = vmatprep.subr.mxu0 0.0
      %3618 = vmatpush1.msra.mxu0 0.0
      %3619 = vmatprep.subr.mxu0 0.0
      %3620 = vmatpush1.msra.mxu0 0.0
      %3621 = vmatprep.subr.mxu0 0.0
      %3622 = vmatpush1.msra.mxu0 0.0
      %3623 = vmatprep.subr.mxu0 0.0
      %3624 = vmatpush1.msra.mxu0 0.0
      %3625 = vmatprep.subr.mxu0 0.0
      %3626 = vmatpush1.msra.mxu0 0.0
      %3627 = vmatprep.subr.mxu0 0.0
      %3628 = vmatpush1.msra.mxu0 0.0
      %3629 = vmatprep.subr.mxu0 0.0
      %3630 = vmatpush1.msra.mxu0 0.0
      %3631 = vmatprep.subr.mxu0 0.0
      %3632 = vmatpush1.msra.mxu0 0.0
      %3633 = vmatprep.subr.mxu0 0.0
      %3634 = vmatpush1.msra.mxu0 0.0
      %3635 = vmatprep.subr.mxu0 0.0
      %3636 = vmatpush1.msra.mxu0 0.0
      %3637 = vmatprep.subr.mxu0 0.0
      %3638 = vmatpush1.msra.mxu0 0.0
      %3639 = vmatprep.subr.mxu0 0.0
      %3640 = vmatpush1.msra.mxu0 0.0
      %3641 = vmatprep.subr.mxu0 0.0
      %3642 = vmatpush1.msra.mxu0 0.0
      %3643 = vmatprep.subr.mxu0 0.0
      %3644 = vmatpush1.msra.mxu0 0.0
      %3645 = vmatprep.subr.mxu0 0.0
      %3646 = vmatpush1.msra.mxu0 0.0
      %3647 = vmatprep.subr.mxu0 0.0
      %3648 = vmatpush1.msra.mxu0 0.0
      %3649 = vmatprep.subr.mxu0 0.0
      %3650 = vmatpush1.msra.mxu0 0.0
      %3651 = vmatprep.subr.mxu0 0.0
      %3652 = vmatpush1.msra.mxu0 0.0
      %3653 = vmatprep.subr.mxu0 0.0
      %3654 = vmatpush1.msra.mxu0 0.0
      %3655 = vmatprep.subr.mxu0 0.0
      %3656 = vmatpush1.msra.mxu0 0.0
      %3657 = vmatprep.subr.mxu0 0.0
      %3658 = vmatpush1.msra.mxu0 0.0
      %3659 = vmatprep.subr.mxu0 0.0
      %3660 = vmatpush1.msra.mxu0 0.0
      %3661 = vmatprep.subr.mxu0 0.0
      %3662 = vmatpush1.msra.mxu0 0.0
      %3663 = vmatprep.subr.mxu0 0.0
      %3664 = vmatpush1.msra.mxu0 0.0
      %3665 = vmatprep.subr.mxu0 0.0
      %3666 = vmatpush1.msra.mxu0 0.0
      %3667 = vmatprep.subr.mxu0 0.0
      %3668 = vmatpush1.msra.mxu0 0.0
      %3669 = vmatprep.mubr.f32.mxu0 0.0
      %3670 = vmatmul.mubr.f32.gmra.mrb[0].mxu0 %v3567
      %v3671 = vpop.f32.mrb[0].mxu0
      %v3672 = vadd.f32 0.0, %v3671
      %v3673 = vpop.f32.mrb[0].mxu0
      %3674 = vmatprep.mubr.f32.mxu0 0.0
      %3675 = vmatmul.mubr.f32.gmra.mrb[0].mxu0 %v3570
      %v3676 = vpop.f32.mrb[0].mxu0
      %v3677 = vadd.f32 0.0, %v3676
      %v3678 = vpop.f32.mrb[0].mxu0
      %3679 = vmatprep.mubr.f32.mxu0 0.0
      %3680 = vmatmul.mubr.f32.gmra.mrb[0].mxu0 %v3573
      %v3681 = vpop.f32.mrb[0].mxu0
      %v3682 = vadd.f32 0.0, %v3681
      %v3683 = vpop.f32.mrb[0].mxu0
      %3684 = vmatprep.mubr.f32.mxu0 0.0
      %3685 = vmatmul.mubr.f32.gmra.mrb[0].mxu0 %v3576
      %v3686 = vpop.f32.mrb[0].mxu0
      %v3687 = vadd.f32 0.0, %v3686
      %v3688 = vpop.f32.mrb[0].mxu0
      %3689 = vmatprep.mubr.f32.mxu0 0.0
      %3690 = vmatmul.mubr.f32.gmra.mrb[0].mxu0 %v3579
      %v3691 = vpop.f32.mrb[0].mxu0
      %v3692 = vadd.f32 0.0, %v3691
      %v3693 = vpop.f32.mrb[0].mxu0
      %3694 = vmatprep.mubr.f32.mxu0 0.0
      %3695 = vmatmul.mubr.f32.gmra.mrb[0].mxu0 %v3582
      %v3696 = vpop.f32.mrb[0].mxu0
      %v3697 = vadd.f32 0.0, %v3696
      %v3698 = vpop.f32.mrb[0].mxu0
      %3699 = vmatprep.mubr.f32.mxu0 0.0
      %3700 = vmatmul.mubr.f32.gmra.mrb[0].mxu0 %v3585
      %v3701 = vpop.f32.mrb[0].mxu0
      %v3702 = vadd.f32 0.0, %v3701
      %v3703 = vpop.f32.mrb[0].mxu0
      %3704 = vmatprep.mubr.f32.mxu0 0.0
      %3705 = vmatmul.mubr.f32.gmra.mrb[0].mxu0 %v3588
      %v3706 = vpop.f32.mrb[0].mxu0
      %v3707 = vadd.f32 0.0, %v3706
      %v3708 = vpop.f32.mrb[0].mxu0
      %3709 = vmatprep.mubr.f32.mxu0 0.0
      %3710 = vmatmul.mubr.f32.gmra.mrb[0].mxu0 %v3591
      %v3711 = vpop.f32.mrb[0].mxu0
      %v3712 = vadd.f32 0.0, %v3711
      %v3713 = vpop.f32.mrb[0].mxu0
      %3714 = vmatprep.mubr.f32.mxu0 0.0
      %3715 = vmatmul.mubr.f32.gmra.mrb[0].mxu0 %v3594
      %v3716 = vpop.f32.mrb[0].mxu0
      %v3717 = vadd.f32 0.0, %v3716
      %v3718 = vpop.f32.mrb[0].mxu0
      %3719 = vmatprep.mubr.f32.mxu0 0.0
      %3720 = vmatmul.mubr.f32.gmra.mrb[0].mxu0 %v3597
      %v3721 = vpop.f32.mrb[0].mxu0
      %v3722 = vadd.f32 0.0, %v3721
      %v3723 = vpop.f32.mrb[0].mxu0
      %3724 = vmatprep.mubr.f32.mxu0 0.0
      %3725 = vmatmul.mubr.f32.gmra.mrb[0].mxu0 %v3600
      %v3726 = vpop.f32.mrb[0].mxu0
      %v3727 = vadd.f32 0.0, %v3726
      %v3728 = vpop.f32.mrb[0].mxu0
      %3729 = vmatprep.mubr.f32.mxu0 0.0
      %3730 = vmatmul.mubr.f32.gmra.mrb[0].mxu0 %v3603
      %v3731 = vpop.f32.mrb[0].mxu0
      %v3732 = vadd.f32 0.0, %v3731
      %v3733 = vpop.f32.mrb[0].mxu0
      %3734 = vdwg.mxu0
      %v3735 = vadd.f32 %v3537, %v3672
      %v3736 = vadd.f32 %v3538, %v3677
      %v3737 = vadd.f32 %v3539, %v3682
      %v3738 = vadd.f32 %v3540, %v3687
      %v3739 = vadd.f32 %v3541, %v3692
      %v3740 = vadd.f32 %v3542, %v3697
      %v3741 = vadd.f32 %v3543, %v3702
      %v3742 = vadd.f32 %v3544, %v3707
      %v3743 = vadd.f32 %v3545, %v3712
      %v3744 = vadd.f32 %v3546, %v3717
      %v3745 = vadd.f32 %v3547, %v3722
      %v3746 = vadd.f32 %v3548, %v3727
      %v3747 = vadd.f32 %v3549, %v3732
      %v3748 = vld [vmem:[#allocation2 + $0x1a] sm:$0xff]
      %v3749 = vld [vmem:[#allocation2 + $0x22] sm:$0xff]
      %v3750 = vld [vmem:[#allocation2 + $0x2a] sm:$0xff]
      %v3751 = vld [vmem:[#allocation2 + $0x32] sm:$0xff]
      %v3752 = vld [vmem:[#allocation2 + $0x3a] sm:$0xff]
      %v3753 = vld [vmem:[#allocation2 + $0x42] sm:$0xff]
      %v3754 = vld [vmem:[#allocation2 + $0x4a] sm:$0xff]
      %v3755 = vld [vmem:[#allocation2 + $0x52] sm:$0xff]
      %v3756 = vld [vmem:[#allocation2 + $0x5a] sm:$0xff]
      %v3757 = vld [vmem:[#allocation2 + $0x62] sm:$0xff]
      %v3758 = vld [vmem:[#allocation2 + $0x6a] sm:$0xff]
      %v3759 = vld [vmem:[#allocation2 + $0x72] sm:$0xff]
      %v3760 = vld [vmem:[#allocation2 + $0x7a] sm:$0xff]
      %s3761 = scalar_lea.vmem %s8, 112
      %v3762 = vld [vmem:[%s3761] sm:$0xff]
      %v3763 = vld [vmem:[%s3761 + $0x8] sm:$0xff]
      %v3765 = vsel %vm360, %v3748, 0
      %v3768 = vsel %vm360, %v3749, 0
      %v3771 = vsel %vm360, %v3750, 0
      %v3774 = vsel %vm360, %v3751, 0
      %v3777 = vsel %vm360, %v3752, 0
      %v3780 = vsel %vm360, %v3753, 0
      %v3783 = vsel %vm360, %v3754, 0
      %v3786 = vsel %vm360, %v3755, 0
      %v3789 = vsel %vm360, %v3756, 0
      %v3792 = vsel %vm360, %v3757, 0
      %v3795 = vsel %vm360, %v3758, 0
      %v3798 = vsel %vm360, %v3759, 0
      %v3801 = vsel %vm360, %v3760, 0
      %3803 = vmatprep.subr.mxu0 0.0
      %3804 = vmatpush1.msra.mxu0 %v3762
      %3805 = vmatprep.subr.mxu0 0.0
      %3806 = vmatpush1.msra.mxu0 %v3763
      %3807 = vmatprep.subr.mxu0 0.0
      %3808 = vmatpush1.msra.mxu0 0.0
      %3809 = vmatprep.subr.mxu0 0.0
      %3810 = vmatpush1.msra.mxu0 0.0
      %3811 = vmatprep.subr.mxu0 0.0
      %3812 = vmatpush1.msra.mxu0 0.0
      %3813 = vmatprep.subr.mxu0 0.0
      %3814 = vmatpush1.msra.mxu0 0.0
      %3815 = vmatprep.subr.mxu0 0.0
      %3816 = vmatpush1.msra.mxu0 0.0
      %3817 = vmatprep.subr.mxu0 0.0
      %3818 = vmatpush1.msra.mxu0 0.0
      %3819 = vmatprep.subr.mxu0 0.0
      %3820 = vmatpush1.msra.mxu0 0.0
      %3821 = vmatprep.subr.mxu0 0.0
      %3822 = vmatpush1.msra.mxu0 0.0
      %3823 = vmatprep.subr.mxu0 0.0
      %3824 = vmatpush1.msra.mxu0 0.0
      %3825 = vmatprep.subr.mxu0 0.0
      %3826 = vmatpush1.msra.mxu0 0.0
      %3827 = vmatprep.subr.mxu0 0.0
      %3828 = vmatpush1.msra.mxu0 0.0
      %3829 = vmatprep.subr.mxu0 0.0
      %3830 = vmatpush1.msra.mxu0 0.0
      %3831 = vmatprep.subr.mxu0 0.0
      %3832 = vmatpush1.msra.mxu0 0.0
      %3833 = vmatprep.subr.mxu0 0.0
      %3834 = vmatpush1.msra.mxu0 0.0
      %3835 = vmatprep.subr.mxu0 0.0
      %3836 = vmatpush1.msra.mxu0 0.0
      %3837 = vmatprep.subr.mxu0 0.0
      %3838 = vmatpush1.msra.mxu0 0.0
      %3839 = vmatprep.subr.mxu0 0.0
      %3840 = vmatpush1.msra.mxu0 0.0
      %3841 = vmatprep.subr.mxu0 0.0
      %3842 = vmatpush1.msra.mxu0 0.0
      %3843 = vmatprep.subr.mxu0 0.0
      %3844 = vmatpush1.msra.mxu0 0.0
      %3845 = vmatprep.subr.mxu0 0.0
      %3846 = vmatpush1.msra.mxu0 0.0
      %3847 = vmatprep.subr.mxu0 0.0
      %3848 = vmatpush1.msra.mxu0 0.0
      %3849 = vmatprep.subr.mxu0 0.0
      %3850 = vmatpush1.msra.mxu0 0.0
      %3851 = vmatprep.subr.mxu0 0.0
      %3852 = vmatpush1.msra.mxu0 0.0
      %3853 = vmatprep.subr.mxu0 0.0
      %3854 = vmatpush1.msra.mxu0 0.0
      %3855 = vmatprep.subr.mxu0 0.0
      %3856 = vmatpush1.msra.mxu0 0.0
      %3857 = vmatprep.subr.mxu0 0.0
      %3858 = vmatpush1.msra.mxu0 0.0
      %3859 = vmatprep.subr.mxu0 0.0
      %3860 = vmatpush1.msra.mxu0 0.0
      %3861 = vmatprep.subr.mxu0 0.0
      %3862 = vmatpush1.msra.mxu0 0.0
      %3863 = vmatprep.subr.mxu0 0.0
      %3864 = vmatpush1.msra.mxu0 0.0
      %3865 = vmatprep.subr.mxu0 0.0
      %3866 = vmatpush1.msra.mxu0 0.0
      %3867 = vmatprep.mubr.f32.mxu0 0.0
      %3868 = vmatmul.mubr.f32.gmra.mrb[0].mxu0 %v3765
      %v3869 = vpop.f32.mrb[0].mxu0
      %v3870 = vadd.f32 0.0, %v3869
      %v3871 = vpop.f32.mrb[0].mxu0
      %3872 = vmatprep.mubr.f32.mxu0 0.0
      %3873 = vmatmul.mubr.f32.gmra.mrb[0].mxu0 %v3768
      %v3874 = vpop.f32.mrb[0].mxu0
      %v3875 = vadd.f32 0.0, %v3874
      %v3876 = vpop.f32.mrb[0].mxu0
      %3877 = vmatprep.mubr.f32.mxu0 0.0
      %3878 = vmatmul.mubr.f32.gmra.mrb[0].mxu0 %v3771
      %v3879 = vpop.f32.mrb[0].mxu0
      %v3880 = vadd.f32 0.0, %v3879
      %v3881 = vpop.f32.mrb[0].mxu0
      %3882 = vmatprep.mubr.f32.mxu0 0.0
      %3883 = vmatmul.mubr.f32.gmra.mrb[0].mxu0 %v3774
      %v3884 = vpop.f32.mrb[0].mxu0
      %v3885 = vadd.f32 0.0, %v3884
      %v3886 = vpop.f32.mrb[0].mxu0
      %3887 = vmatprep.mubr.f32.mxu0 0.0
      %3888 = vmatmul.mubr.f32.gmra.mrb[0].mxu0 %v3777
      %v3889 = vpop.f32.mrb[0].mxu0
      %v3890 = vadd.f32 0.0, %v3889
      %v3891 = vpop.f32.mrb[0].mxu0
      %3892 = vmatprep.mubr.f32.mxu0 0.0
      %3893 = vmatmul.mubr.f32.gmra.mrb[0].mxu0 %v3780
      %v3894 = vpop.f32.mrb[0].mxu0
      %v3895 = vadd.f32 0.0, %v3894
      %v3896 = vpop.f32.mrb[0].mxu0
      %3897 = vmatprep.mubr.f32.mxu0 0.0
      %3898 = vmatmul.mubr.f32.gmra.mrb[0].mxu0 %v3783
      %v3899 = vpop.f32.mrb[0].mxu0
      %v3900 = vadd.f32 0.0, %v3899
      %v3901 = vpop.f32.mrb[0].mxu0
      %3902 = vmatprep.mubr.f32.mxu0 0.0
      %3903 = vmatmul.mubr.f32.gmra.mrb[0].mxu0 %v3786
      %v3904 = vpop.f32.mrb[0].mxu0
      %v3905 = vadd.f32 0.0, %v3904
      %v3906 = vpop.f32.mrb[0].mxu0
      %3907 = vmatprep.mubr.f32.mxu0 0.0
      %3908 = vmatmul.mubr.f32.gmra.mrb[0].mxu0 %v3789
      %v3909 = vpop.f32.mrb[0].mxu0
      %v3910 = vadd.f32 0.0, %v3909
      %v3911 = vpop.f32.mrb[0].mxu0
      %3912 = vmatprep.mubr.f32.mxu0 0.0
      %3913 = vmatmul.mubr.f32.gmra.mrb[0].mxu0 %v3792
      %v3914 = vpop.f32.mrb[0].mxu0
      %v3915 = vadd.f32 0.0, %v3914
      %v3916 = vpop.f32.mrb[0].mxu0
      %3917 = vmatprep.mubr.f32.mxu0 0.0
      %3918 = vmatmul.mubr.f32.gmra.mrb[0].mxu0 %v3795
      %v3919 = vpop.f32.mrb[0].mxu0
      %v3920 = vadd.f32 0.0, %v3919
      %v3921 = vpop.f32.mrb[0].mxu0
      %3922 = vmatprep.mubr.f32.mxu0 0.0
      %3923 = vmatmul.mubr.f32.gmra.mrb[0].mxu0 %v3798
      %v3924 = vpop.f32.mrb[0].mxu0
      %v3925 = vadd.f32 0.0, %v3924
      %v3926 = vpop.f32.mrb[0].mxu0
      %3927 = vmatprep.mubr.f32.mxu0 0.0
      %3928 = vmatmul.mubr.f32.gmra.mrb[0].mxu0 %v3801
      %v3929 = vpop.f32.mrb[0].mxu0
      %v3930 = vadd.f32 0.0, %v3929
      %v3931 = vpop.f32.mrb[0].mxu0
      %3932 = vdwg.mxu0
      %v3933 = vadd.f32 %v3735, %v3870
      %v3934 = vadd.f32 %v3736, %v3875
      %v3935 = vadd.f32 %v3737, %v3880
      %v3936 = vadd.f32 %v3738, %v3885
      %v3937 = vadd.f32 %v3739, %v3890
      %v3938 = vadd.f32 %v3740, %v3895
      %v3939 = vadd.f32 %v3741, %v3900
      %v3940 = vadd.f32 %v3742, %v3905
      %v3941 = vadd.f32 %v3743, %v3910
      %v3942 = vadd.f32 %v3744, %v3915
      %v3943 = vadd.f32 %v3745, %v3920
      %v3944 = vadd.f32 %v3746, %v3925
      %v3945 = vadd.f32 %v3747, %v3930
      %v3946 = vld [vmem:[#allocation2 + $0x1b] sm:$0xff]
      %v3947 = vld [vmem:[#allocation2 + $0x23] sm:$0xff]
      %v3948 = vld [vmem:[#allocation2 + $0x2b] sm:$0xff]
      %v3949 = vld [vmem:[#allocation2 + $0x33] sm:$0xff]
      %v3950 = vld [vmem:[#allocation2 + $0x3b] sm:$0xff]
      %v3951 = vld [vmem:[#allocation2 + $0x43] sm:$0xff]
      %v3952 = vld [vmem:[#allocation2 + $0x4b] sm:$0xff]
      %v3953 = vld [vmem:[#allocation2 + $0x53] sm:$0xff]
      %v3954 = vld [vmem:[#allocation2 + $0x5b] sm:$0xff]
      %v3955 = vld [vmem:[#allocation2 + $0x63] sm:$0xff]
      %v3956 = vld [vmem:[#allocation2 + $0x6b] sm:$0xff]
      %v3957 = vld [vmem:[#allocation2 + $0x73] sm:$0xff]
      %v3958 = vld [vmem:[#allocation2 + $0x7b] sm:$0xff]
      %s3959 = scalar_lea.vmem %s8, 128
      %v3960 = vld [vmem:[%s3959] sm:$0xff]
      %v3961 = vld [vmem:[%s3959 + $0x8] sm:$0xff]
      %v3963 = vsel %vm360, %v3946, 0
      %v3966 = vsel %vm360, %v3947, 0
      %v3969 = vsel %vm360, %v3948, 0
      %v3972 = vsel %vm360, %v3949, 0
      %v3975 = vsel %vm360, %v3950, 0
      %v3978 = vsel %vm360, %v3951, 0
      %v3981 = vsel %vm360, %v3952, 0
      %v3984 = vsel %vm360, %v3953, 0
      %v3987 = vsel %vm360, %v3954, 0
      %v3990 = vsel %vm360, %v3955, 0
      %v3993 = vsel %vm360, %v3956, 0
      %v3996 = vsel %vm360, %v3957, 0
      %v3999 = vsel %vm360, %v3958, 0
      %4001 = vmatprep.subr.mxu0 0.0
      %4002 = vmatpush1.msra.mxu0 %v3960
      %4003 = vmatprep.subr.mxu0 0.0
      %4004 = vmatpush1.msra.mxu0 %v3961
      %4005 = vmatprep.subr.mxu0 0.0
      %4006 = vmatpush1.msra.mxu0 0.0
      %4007 = vmatprep.subr.mxu0 0.0
      %4008 = vmatpush1.msra.mxu0 0.0
      %4009 = vmatprep.subr.mxu0 0.0
      %4010 = vmatpush1.msra.mxu0 0.0
      %4011 = vmatprep.subr.mxu0 0.0
      %4012 = vmatpush1.msra.mxu0 0.0
      %4013 = vmatprep.subr.mxu0 0.0
      %4014 = vmatpush1.msra.mxu0 0.0
      %4015 = vmatprep.subr.mxu0 0.0
      %4016 = vmatpush1.msra.mxu0 0.0
      %4017 = vmatprep.subr.mxu0 0.0
      %4018 = vmatpush1.msra.mxu0 0.0
      %4019 = vmatprep.subr.mxu0 0.0
      %4020 = vmatpush1.msra.mxu0 0.0
      %4021 = vmatprep.subr.mxu0 0.0
      %4022 = vmatpush1.msra.mxu0 0.0
      %4023 = vmatprep.subr.mxu0 0.0
      %4024 = vmatpush1.msra.mxu0 0.0
      %4025 = vmatprep.subr.mxu0 0.0
      %4026 = vmatpush1.msra.mxu0 0.0
      %4027 = vmatprep.subr.mxu0 0.0
      %4028 = vmatpush1.msra.mxu0 0.0
      %4029 = vmatprep.subr.mxu0 0.0
      %4030 = vmatpush1.msra.mxu0 0.0
      %4031 = vmatprep.subr.mxu0 0.0
      %4032 = vmatpush1.msra.mxu0 0.0
      %4033 = vmatprep.subr.mxu0 0.0
      %4034 = vmatpush1.msra.mxu0 0.0
      %4035 = vmatprep.subr.mxu0 0.0
      %4036 = vmatpush1.msra.mxu0 0.0
      %4037 = vmatprep.subr.mxu0 0.0
      %4038 = vmatpush1.msra.mxu0 0.0
      %4039 = vmatprep.subr.mxu0 0.0
      %4040 = vmatpush1.msra.mxu0 0.0
      %4041 = vmatprep.subr.mxu0 0.0
      %4042 = vmatpush1.msra.mxu0 0.0
      %4043 = vmatprep.subr.mxu0 0.0
      %4044 = vmatpush1.msra.mxu0 0.0
      %4045 = vmatprep.subr.mxu0 0.0
      %4046 = vmatpush1.msra.mxu0 0.0
      %4047 = vmatprep.subr.mxu0 0.0
      %4048 = vmatpush1.msra.mxu0 0.0
      %4049 = vmatprep.subr.mxu0 0.0
      %4050 = vmatpush1.msra.mxu0 0.0
      %4051 = vmatprep.subr.mxu0 0.0
      %4052 = vmatpush1.msra.mxu0 0.0
      %4053 = vmatprep.subr.mxu0 0.0
      %4054 = vmatpush1.msra.mxu0 0.0
      %4055 = vmatprep.subr.mxu0 0.0
      %4056 = vmatpush1.msra.mxu0 0.0
      %4057 = vmatprep.subr.mxu0 0.0
      %4058 = vmatpush1.msra.mxu0 0.0
      %4059 = vmatprep.subr.mxu0 0.0
      %4060 = vmatpush1.msra.mxu0 0.0
      %4061 = vmatprep.subr.mxu0 0.0
      %4062 = vmatpush1.msra.mxu0 0.0
      %4063 = vmatprep.subr.mxu0 0.0
      %4064 = vmatpush1.msra.mxu0 0.0
      %4065 = vmatprep.mubr.f32.mxu0 0.0
      %4066 = vmatmul.mubr.f32.gmra.mrb[0].mxu0 %v3963
      %v4067 = vpop.f32.mrb[0].mxu0
      %v4068 = vadd.f32 0.0, %v4067
      %v4069 = vpop.f32.mrb[0].mxu0
      %4070 = vmatprep.mubr.f32.mxu0 0.0
      %4071 = vmatmul.mubr.f32.gmra.mrb[0].mxu0 %v3966
      %v4072 = vpop.f32.mrb[0].mxu0
      %v4073 = vadd.f32 0.0, %v4072
      %v4074 = vpop.f32.mrb[0].mxu0
      %4075 = vmatprep.mubr.f32.mxu0 0.0
      %4076 = vmatmul.mubr.f32.gmra.mrb[0].mxu0 %v3969
      %v4077 = vpop.f32.mrb[0].mxu0
      %v4078 = vadd.f32 0.0, %v4077
      %v4079 = vpop.f32.mrb[0].mxu0
      %4080 = vmatprep.mubr.f32.mxu0 0.0
      %4081 = vmatmul.mubr.f32.gmra.mrb[0].mxu0 %v3972
      %v4082 = vpop.f32.mrb[0].mxu0
      %v4083 = vadd.f32 0.0, %v4082
      %v4084 = vpop.f32.mrb[0].mxu0
      %4085 = vmatprep.mubr.f32.mxu0 0.0
      %4086 = vmatmul.mubr.f32.gmra.mrb[0].mxu0 %v3975
      %v4087 = vpop.f32.mrb[0].mxu0
      %v4088 = vadd.f32 0.0, %v4087
      %v4089 = vpop.f32.mrb[0].mxu0
      %4090 = vmatprep.mubr.f32.mxu0 0.0
      %4091 = vmatmul.mubr.f32.gmra.mrb[0].mxu0 %v3978
      %v4092 = vpop.f32.mrb[0].mxu0
      %v4093 = vadd.f32 0.0, %v4092
      %v4094 = vpop.f32.mrb[0].mxu0
      %4095 = vmatprep.mubr.f32.mxu0 0.0
      %4096 = vmatmul.mubr.f32.gmra.mrb[0].mxu0 %v3981
      %v4097 = vpop.f32.mrb[0].mxu0
      %v4098 = vadd.f32 0.0, %v4097
      %v4099 = vpop.f32.mrb[0].mxu0
      %4100 = vmatprep.mubr.f32.mxu0 0.0
      %4101 = vmatmul.mubr.f32.gmra.mrb[0].mxu0 %v3984
      %v4102 = vpop.f32.mrb[0].mxu0
      %v4103 = vadd.f32 0.0, %v4102
      %v4104 = vpop.f32.mrb[0].mxu0
      %4105 = vmatprep.mubr.f32.mxu0 0.0
      %4106 = vmatmul.mubr.f32.gmra.mrb[0].mxu0 %v3987
      %v4107 = vpop.f32.mrb[0].mxu0
      %v4108 = vadd.f32 0.0, %v4107
      %v4109 = vpop.f32.mrb[0].mxu0
      %4110 = vmatprep.mubr.f32.mxu0 0.0
      %4111 = vmatmul.mubr.f32.gmra.mrb[0].mxu0 %v3990
      %v4112 = vpop.f32.mrb[0].mxu0
      %v4113 = vadd.f32 0.0, %v4112
      %v4114 = vpop.f32.mrb[0].mxu0
      %4115 = vmatprep.mubr.f32.mxu0 0.0
      %4116 = vmatmul.mubr.f32.gmra.mrb[0].mxu0 %v3993
      %v4117 = vpop.f32.mrb[0].mxu0
      %v4118 = vadd.f32 0.0, %v4117
      %v4119 = vpop.f32.mrb[0].mxu0
      %4120 = vmatprep.mubr.f32.mxu0 0.0
      %4121 = vmatmul.mubr.f32.gmra.mrb[0].mxu0 %v3996
      %v4122 = vpop.f32.mrb[0].mxu0
      %v4123 = vadd.f32 0.0, %v4122
      %v4124 = vpop.f32.mrb[0].mxu0
      %4125 = vmatprep.mubr.f32.mxu0 0.0
      %4126 = vmatmul.mubr.f32.gmra.mrb[0].mxu0 %v3999
      %v4127 = vpop.f32.mrb[0].mxu0
      %v4128 = vadd.f32 0.0, %v4127
      %v4129 = vpop.f32.mrb[0].mxu0
      %4130 = vdwg.mxu0
      %v4131 = vadd.f32 %v3933, %v4068
      %v4132 = vadd.f32 %v3934, %v4073
      %v4133 = vadd.f32 %v3935, %v4078
      %v4134 = vadd.f32 %v3936, %v4083
      %v4135 = vadd.f32 %v3937, %v4088
      %v4136 = vadd.f32 %v3938, %v4093
      %v4137 = vadd.f32 %v3939, %v4098
      %v4138 = vadd.f32 %v3940, %v4103
      %v4139 = vadd.f32 %v3941, %v4108
      %v4140 = vadd.f32 %v3942, %v4113
      %v4141 = vadd.f32 %v3943, %v4118
      %v4142 = vadd.f32 %v3944, %v4123
      %v4143 = vadd.f32 %v3945, %v4128
      %v4144 = vld [vmem:[%s9] sm:$0x1]
      %v4146 = vlaneseq
      %v4147 = vshrl.u32 %v4146, 7
      %v4148 = vsub.s32 0, %v4147
      %v4149 = vrot.slane %v4144, %v4148
      %v4151 = vadd.f32 %v4131, %v4149
      %v4152 = vadd.f32 %v4132, %v4149
      %v4153 = vadd.f32 %v4133, %v4149
      %v4154 = vadd.f32 %v4134, %v4149
      %v4155 = vadd.f32 %v4135, %v4149
      %v4156 = vadd.f32 %v4136, %v4149
      %v4157 = vadd.f32 %v4137, %v4149
      %v4158 = vadd.f32 %v4138, %v4149
      %v4159 = vadd.f32 %v4139, %v4149
      %v4160 = vadd.f32 %v4140, %v4149
      %v4161 = vadd.f32 %v4141, %v4149
      %v4162 = vadd.f32 %v4142, %v4149
      %v4163 = vadd.f32 %v4143, %v4149
      %v4164 = vadd.f32 %v365, %v4151
      %v4165 = vadd.f32 %v366, %v4152
      %v4166 = vadd.f32 %v367, %v4153
      %v4167 = vadd.f32 %v368, %v4154
      %v4168 = vadd.f32 %v369, %v4155
      %v4169 = vadd.f32 %v370, %v4156
      %v4170 = vadd.f32 %v371, %v4157
      %v4171 = vadd.f32 %v372, %v4158
      %v4172 = vadd.f32 %v373, %v4159
      %v4173 = vadd.f32 %v374, %v4160
      %v4174 = vadd.f32 %v375, %v4161
      %v4175 = vadd.f32 %v376, %v4162
      %v4176 = vadd.f32 %v377, %v4163
      %4177 = vst.msk [vmem:[%s359] sm:$0xff] %vm360, %v4164
      %4178 = vst.msk [vmem:[%s359 + $0x8] sm:$0xff] %vm360, %v4165
      %4179 = vst.msk [vmem:[%s359 + $0x10] sm:$0xff] %vm360, %v4166
      %4180 = vst.msk [vmem:[%s359 + $0x18] sm:$0xff] %vm360, %v4167
      %4181 = vst.msk [vmem:[%s359 + $0x20] sm:$0xff] %vm360, %v4168
      %4182 = vst.msk [vmem:[%s359 + $0x28] sm:$0xff] %vm360, %v4169
      %4183 = vst.msk [vmem:[%s359 + $0x30] sm:$0xff] %vm360, %v4170
      %4184 = vst.msk [vmem:[%s359 + $0x38] sm:$0xff] %vm360, %v4171
      %4185 = vst.msk [vmem:[%s359 + $0x40] sm:$0xff] %vm360, %v4172
      %4186 = vst.msk [vmem:[%s359 + $0x48] sm:$0xff] %vm360, %v4173
      %4187 = vst.msk [vmem:[%s359 + $0x50] sm:$0xff] %vm360, %v4174
      %4188 = vst.msk [vmem:[%s359 + $0x58] sm:$0xff] %vm360, %v4175
      %4189 = vst.msk [vmem:[%s359 + $0x60] sm:$0xff] %vm360, %v4176
      %p4190 = scmp.lt.s32.totalorder %s21, 1
      %s4191 = scalar_select %p4190, %s21, 1
      %s4192 = smul.addr %s4191, 13
      %s4193 = smul.addr %s4192, 8
      %s4194 = scalar_lea.vmem %s10, %s4193
      // Predicated region
      $region61: #{tpu_custom_call.1} parent=59 // pred_check
        %p4195 = pneg %p254
      $region62: #{tpu_custom_call.1} parent=59 // pred_check_branch
        %4197 = sbr.rel (%p4195) target = $region64
      $region63: #{tpu_custom_call.1} parent=59 // pred_region
        _
      $region64: #{tpu_custom_call.1} parent=59 // pred_fallthru
        _
    $region60: #{tpu_custom_call.1} parent=5 // pred_fallthru
      _
    %p4198 = scmp.le.s32.totalorder 2, %s16
    // Predicated region
    $region65: #{tpu_custom_call.1} parent=5 // pred_check
      %p4199 = pneg %p4198
    $region66: #{tpu_custom_call.1} parent=5 // pred_check_branch
      %4201 = sbr.rel (%p4199) target = $region68
    $region67: #{tpu_custom_call.1} parent=5 // pred_region
      %s4202 = ssub.s32 %s16, 2
      // Predicated region
      $region69: #{tpu_custom_call.1} parent=67 // pred_check
        %p4203 = pneg %p260
      $region70: #{tpu_custom_call.1} parent=67 // pred_check_branch
        %4205 = sbr.rel (%p4203) target = $region72
      $region71: #{tpu_custom_call.1} parent=67 // pred_region
        %p4206 = scmp.lt.s32.totalorder %s22, 1
        %s4207 = scalar_select %p4206, %s22, 1
        %s4208 = smul.addr %s4207, 13
        %s4209 = smul.addr %s4208, 8
        %s4210 = scalar_lea.vmem %s10, %s4209
      $region72: #{tpu_custom_call.1} parent=67 // pred_fallthru
        _
    $region68: #{tpu_custom_call.1} parent=5 // pred_fallthru
      _
  $region6: #{tpu_custom_call.1} parent=0 // loop_footer
    %s20 = sadd.s32 1, %s16
  $region7: #{tpu_custom_call.1} parent=0 // loop_footer_branch
    %15 = sbr.rel target = $region3
  $region8: #{tpu_custom_call.1} parent=0 // loop_exit
    _

</llo_original>
